<compile_context>
chip_gen: v5e
topology: v5e:2x2
jax: 0.10.0
libtpu: 0.0.40
codegen_flags: <defaults>
</compile_context>

<pallas_src>
import jax
import jax.numpy as jnp
from jax.experimental import pallas as pl
from jax.experimental.pallas import tpu as pltpu

EPS = 1e-5
_SMEM = pl.BlockSpec(memory_space=pltpu.MemorySpace.SMEM)   # PReLU alpha scalar


def _pick_tile(n, target):
    """Largest tile <= target that divides n and keeps 8-sublane alignment."""
    if n <= target:
        return n
    for t in range(target, 7, -1):
        if n % t == 0 and t % 8 == 0:
            return t
    return n


def _bn_affine(s1, s2, count, gamma, beta):
    """Fold batch-norm (biased batch stats) into per-channel scale/shift."""
    mu = s1 / count
    var = jnp.maximum(s2 / count - mu * mu, 0.0)   # clamp: f32 cancellation can go < 0
    scale = gamma * jax.lax.rsqrt(var + EPS)
    return scale, beta - mu * scale


# ---------------- K1: conv1 (1x1x1) matmul + BN1 partial stats ----------------------
def _conv1_kernel(x_ref, w_ref, y_ref, s1_ref, s2_ref):
    y = jnp.dot(x_ref[...].astype(jnp.bfloat16), w_ref[...],
                preferred_element_type=jnp.float32)
    y_ref[...] = y.astype(y_ref.dtype)
    s1_ref[...] = jnp.sum(y, axis=0, keepdims=True)
    s2_ref[...] = jnp.sum(y * y, axis=0, keepdims=True)


def conv1x1_stats(x2d, w_bf16, tm):
    m, cin = x2d.shape
    cout = w_bf16.shape[1]
    nt = m // tm
    y, s1, s2 = pl.pallas_call(
        _conv1_kernel,
        grid=(nt,),
        in_specs=[pl.BlockSpec((tm, cin), lambda i: (i, 0)),
                  pl.BlockSpec((cin, cout), lambda i: (0, 0))],
        out_specs=[pl.BlockSpec((tm, cout), lambda i: (i, 0)),
                   pl.BlockSpec((None, 1, cout), lambda i: (i, 0, 0)),
                   pl.BlockSpec((None, 1, cout), lambda i: (i, 0, 0))],
        out_shape=[jax.ShapeDtypeStruct((m, cout), jnp.bfloat16),
                   jax.ShapeDtypeStruct((nt, 1, cout), jnp.float32),
                   jax.ShapeDtypeStruct((nt, 1, cout), jnp.float32)],
        compiler_params=pltpu.CompilerParams(dimension_semantics=("parallel",)),
    )(x2d, w_bf16)
    return y, s1.sum(axis=(0, 1)), s2.sum(axis=(0, 1))


# ---------------- K1b: BN apply + PReLU, lane-dense elementwise ---------------------
def _bn_prelu_kernel(y_ref, sc_ref, sh_ref, a_ref, o_ref):
    a = a_ref[0, 0]
    hv = y_ref[...].astype(jnp.float32) * sc_ref[...] + sh_ref[...]
    o_ref[...] = jnp.where(hv >= 0, hv, a * hv).astype(o_ref.dtype)


def bn_prelu_lanedense(y_dense, scale128, shift128, alpha, out_dtype, tr):
    r = y_dense.shape[0]
    nt = r // tr
    return pl.pallas_call(
        _bn_prelu_kernel,
        grid=(nt,),
        in_specs=[pl.BlockSpec((tr, 128), lambda i: (i, 0)),
                  pl.BlockSpec((1, 128), lambda i: (0, 0)),
                  pl.BlockSpec((1, 128), lambda i: (0, 0)),
                  _SMEM],
        out_specs=pl.BlockSpec((tr, 128), lambda i: (i, 0)),
        out_shape=jax.ShapeDtypeStruct((r, 128), out_dtype),
        compiler_params=pltpu.CompilerParams(dimension_semantics=("parallel",)),
    )(y_dense, scale128, shift128, alpha)


# ------- K2: grouped dilated 3x3x3 conv (K=9*planes matmul per depth tap) + BN2 stats
def _conv2_kernel(xs_ref, w_ref, y_ref, s1_ref, s2_ref, acc_ref):
    kd = pl.program_id(2)

    @pl.when(kd == 0)
    def _():
        acc_ref[...] = jnp.zeros_like(acc_ref)

    acc_ref[...] += jnp.dot(xs_ref[...], w_ref[...],
                            preferred_element_type=jnp.float32)

    @pl.when(kd == pl.num_programs(2) - 1)
    def _():
        acc = acc_ref[...]
        y_ref[...] = acc.astype(y_ref.dtype)
        s1_ref[...] = jnp.sum(acc, axis=0, keepdims=True)
        s2_ref[...] = jnp.sum(acc * acc, axis=0, keepdims=True)


def grouped_dilated_conv2(xs, w_kd, planes):
    # xs: (N, D+4, H*W, 9*planes) bf16 ; w_kd: (3, 9*planes, planes) bf16
    n, dp4, hw, k9c = xs.shape
    d_out = dp4 - 4
    y, s1, s2 = pl.pallas_call(
        _conv2_kernel,
        grid=(n, d_out, 3),
        in_specs=[pl.BlockSpec((None, None, hw, k9c),
                               lambda b, d, kd: (b, d + 2 * kd, 0, 0)),
                  pl.BlockSpec((None, k9c, planes), lambda b, d, kd: (kd, 0, 0))],
        out_specs=[pl.BlockSpec((None, None, hw, planes),
                                lambda b, d, kd: (b, d, 0, 0)),
                   pl.BlockSpec((None, None, 1, planes),
                                lambda b, d, kd: (b, d, 0, 0)),
                   pl.BlockSpec((None, None, 1, planes),
                                lambda b, d, kd: (b, d, 0, 0))],
        out_shape=[jax.ShapeDtypeStruct((n, d_out, hw, planes), jnp.bfloat16),
                   jax.ShapeDtypeStruct((n, d_out, 1, planes), jnp.float32),
                   jax.ShapeDtypeStruct((n, d_out, 1, planes), jnp.float32)],
        scratch_shapes=[pltpu.VMEM((hw, planes), jnp.float32)],
        compiler_params=pltpu.CompilerParams(
            dimension_semantics=("parallel", "parallel", "arbitrary")),
    )(xs, w_kd)
    return y, s1.sum(axis=(0, 1, 2)), s2.sum(axis=(0, 1, 2))


# ---------- K3: BN2 apply + PReLU + conv3 (1x1x1) + BN3/SE partial sums -------------
def _bn_act_conv3_kernel(y2_ref, sc_ref, sh_ref, w_ref, a_ref,
                         h3_ref, s1_ref, s2_ref):
    a = a_ref[0, 0]
    hv = y2_ref[...].astype(jnp.float32) * sc_ref[...] + sh_ref[...]
    hv = jnp.where(hv >= 0, hv, a * hv)
    h3 = jnp.dot(hv.astype(jnp.bfloat16), w_ref[...],
                 preferred_element_type=jnp.float32)
    h3_ref[...] = h3
    s1_ref[...] = jnp.sum(h3, axis=0, keepdims=True)
    s2_ref[...] = jnp.sum(h3 * h3, axis=0, keepdims=True)


def bn_prelu_conv3(y2, scale, shift, w_bf16, alpha, ts):
    n, s, c = y2.shape
    cout = w_bf16.shape[1]
    nst = s // ts
    h3, s1, s2 = pl.pallas_call(
        _bn_act_conv3_kernel,
        grid=(n, nst),
        in_specs=[pl.BlockSpec((None, ts, c), lambda b, i: (b, i, 0)),
                  pl.BlockSpec((1, c), lambda b, i: (0, 0)),
                  pl.BlockSpec((1, c), lambda b, i: (0, 0)),
                  pl.BlockSpec((c, cout), lambda b, i: (0, 0)),
                  _SMEM],
        out_specs=[pl.BlockSpec((None, ts, cout), lambda b, i: (b, i, 0)),
                   pl.BlockSpec((None, None, 1, cout), lambda b, i: (b, i, 0, 0)),
                   pl.BlockSpec((None, None, 1, cout), lambda b, i: (b, i, 0, 0))],
        out_shape=[jax.ShapeDtypeStruct((n, s, cout), jnp.float32),
                   jax.ShapeDtypeStruct((n, nst, 1, cout), jnp.float32),
                   jax.ShapeDtypeStruct((n, nst, 1, cout), jnp.float32)],
        compiler_params=pltpu.CompilerParams(
            dimension_semantics=("parallel", "parallel")),
    )(y2, scale, shift, w_bf16, alpha)
    return h3, s1, s2


# ------ K4: BN3 apply + SE gate + residual add + final PReLU (lane-dense) -----------
def _se_res_prelu_kernel(h3_ref, x_ref, sc_ref, sh_ref, pb_ref,
                         w1_ref, b1_ref, w2_ref, b2_ref, a_ref, o_ref):
    a = a_ref[0, 0]
    # SE excitation for this sample (tiny FCs; recomputed per tile, stays on-chip).
    t = jnp.dot(pb_ref[...], w1_ref[...], preferred_element_type=jnp.float32)
    t = jnp.maximum(t + b1_ref[...], 0.0)
    g = jnp.dot(t, w2_ref[...], preferred_element_type=jnp.float32) + b2_ref[...]
    g = jax.nn.sigmoid(g)                                   # (1, Cout)
    rep = sc_ref.shape[-1] // g.shape[-1]
    g = jnp.concatenate([g] * rep, axis=-1)                 # lane-dense (1, 128) gate
    y = (h3_ref[...] * sc_ref[...] + sh_ref[...]) * g + x_ref[...]
    o_ref[...] = jnp.where(y >= 0, y, a * y)


def se_residual_prelu(h3d, xd, sc128, sh128, pooled_bn,
                      wfc1, bfc1, wfc2, bfc2, alpha, tr):
    n, r, _ = h3d.shape
    cout, hid = wfc1.shape
    nt = r // tr
    return pl.pallas_call(
        _se_res_prelu_kernel,
        grid=(n, nt),
        in_specs=[pl.BlockSpec((None, tr, 128), lambda b, i: (b, i, 0)),
                  pl.BlockSpec((None, tr, 128), lambda b, i: (b, i, 0)),
                  pl.BlockSpec((1, 128), lambda b, i: (0, 0)),
                  pl.BlockSpec((1, 128), lambda b, i: (0, 0)),
                  pl.BlockSpec((None, 1, cout), lambda b, i: (b, 0, 0)),
                  pl.BlockSpec((cout, hid), lambda b, i: (0, 0)),
                  pl.BlockSpec((1, hid), lambda b, i: (0, 0)),
                  pl.BlockSpec((hid, cout), lambda b, i: (0, 0)),
                  pl.BlockSpec((1, cout), lambda b, i: (0, 0)),
                  _SMEM],
        out_specs=pl.BlockSpec((None, tr, 128), lambda b, i: (b, i, 0)),
        out_shape=jax.ShapeDtypeStruct((n, r, 128), jnp.float32),
        compiler_params=pltpu.CompilerParams(
            dimension_semantics=("parallel", "parallel")),
    )(h3d, xd, sc128, sh128, pooled_bn, wfc1, bfc1, wfc2, bfc2, alpha)


# ----------------------------------- forward ----------------------------------------
def senet_dilated_bottleneck(x, p):
    """x: (N, C_in, D, H, W) float32 (PyTorch NCDHW convention)."""
    n, cin, d, h, w = x.shape
    planes = p["w1"].shape[1]
    cout = p["w3"].shape[1]
    s = d * h * w
    m = n * s
    assert cin == cout, "downsample=None requires inplanes == planes * expansion"
    assert 128 % planes == 0 and 128 % cout == 0
    assert (m * planes) % 128 == 0 and (s * cout) % 128 == 0

    xc = jnp.transpose(x, (0, 2, 3, 4, 1)).astype(jnp.float32)   # NDHWC
    x2d = xc.reshape(m, cin)
    alpha = p["alpha"]

    # Weights folded to matmul layout + bf16 once (MXU-friendly).
    w1 = p["w1"].astype(jnp.bfloat16)                                   # (Cin, planes)
    w2_kd = p["w2_taps"].reshape(3, 9 * planes, planes).astype(jnp.bfloat16)
    w3 = p["w3"].astype(jnp.bfloat16)                                   # (planes, Cout)

    # ---- conv1 (1x1x1) + BN1 batch stats (one-pass sum/sumsq) ------------------
    y1, s1, q1 = conv1x1_stats(x2d, w1, _pick_tile(m, 512))
    sc1, sh1 = _bn_affine(s1, q1, m, p["g1"], p["b1"])

    # ---- BN1 apply + PReLU, lane-dense (channels folded into the 128-lane axis) -
    rep1 = 128 // planes
    r1 = m * planes // 128
    h1 = bn_prelu_lanedense(
        y1.reshape(r1, 128),
        jnp.tile(sc1, rep1).reshape(1, 128), jnp.tile(sh1, rep1).reshape(1, 128),
        alpha, jnp.bfloat16, _pick_tile(r1, 64))
    h1 = h1.reshape(n, d, h, w, planes)

    # ---- conv2: grouped dilated 3x3x3 conv -------------------------------------
    # The 9 spatial taps are concatenated on channels in the wrapper (bf16); the 3
    # dilated depth taps are handled by the kernel grid via overlapping depth
    # blocks, so only a 9x (not 27x f32) tap tensor ever hits HBM.
    # TODO(synk): gather the 9 spatial taps in-kernel too (halo DMA from a padded
    # VMEM slab) to avoid materializing even the 9x tensor.
    # Note: the block-diagonal grouped weights keep 75% zero MACs on purpose — at
    # planes=16 / cardinality=4 the per-group matmuls would be only 4 wide, which
    # feeds the MXU worse than one dense K=144 contraction.
    hp = jnp.pad(h1, ((0, 0), (2, 2), (2, 2), (2, 2), (0, 0)))
    taps = [hp[:, :, 2 * kh:2 * kh + h, 2 * kw:2 * kw + w, :]
            for kh in range(3) for kw in range(3)]
    xs = jnp.concatenate(taps, axis=-1).reshape(n, d + 4, h * w, 9 * planes)
    y2, s2, q2 = grouped_dilated_conv2(xs, w2_kd, planes)
    sc2, sh2 = _bn_affine(s2, q2, m, p["g2"], p["b2"])

    # ---- BN2 apply + PReLU fused with conv3 (1x1x1) + BN3/SE partial sums -------
    y2 = y2.reshape(n, s, planes)
    h3, p1, q3 = bn_prelu_conv3(y2, sc2.reshape(1, planes), sh2.reshape(1, planes),
                                w3, alpha, _pick_tile(s, 256))
    sc3, sh3 = _bn_affine(p1.sum(axis=(0, 1, 2)), q3.sum(axis=(0, 1, 2)),
                          m, p["g3"], p["b3"])
    pooled = p1.sum(axis=(1, 2)) / s                      # (N, Cout) GAP of conv3 out
    pooled_bn = pooled * sc3[None, :] + sh3[None, :]      # GAP of bn3 out (BN is affine)

    # ---- BN3 apply + SE gate + residual add + final PReLU (lane-dense) ----------
    rep3 = 128 // cout
    r4 = s * cout // 128
    out = se_residual_prelu(
        h3.reshape(n, r4, 128), xc.reshape(n, r4, 128),
        jnp.tile(sc3, rep3).reshape(1, 128), jnp.tile(sh3, rep3).reshape(1, 128),
        pooled_bn.reshape(n, 1, cout),
        p["wfc1"], p["bfc1"].reshape(1, -1), p["wfc2"], p["bfc2"].reshape(1, -1),
        alpha, _pick_tile(r4, 64))
    out = out.reshape(n, d, h, w, cout)
    return jnp.transpose(out, (0, 4, 1, 2, 3))            # back to NCDHW


# ------------------------------------ parameters ------------------------------------
def init_params(key, inplanes, planes, cardinality):
    expansion = 2
    cout = planes * expansion
    cpg = planes // cardinality
    hidden = cout // 16
    assert hidden >= 1 and planes % cardinality == 0 and inplanes == cout

    ks = jax.random.split(key, 13)
    w1_t = 0.1 * jax.random.normal(ks[0], (planes, inplanes), jnp.float32)       # (O, I)
    w2_t = 0.1 * jax.random.normal(ks[1], (planes, cpg, 3, 3, 3), jnp.float32)   # (O, I/G, k,k,k)
    w3_t = 0.1 * jax.random.normal(ks[2], (cout, planes), jnp.float32)
    g1 = 1.0 + 0.1 * jax.random.normal(ks[3], (planes,), jnp.float32)
    b1 = 0.1 * jax.random.normal(ks[4], (planes,), jnp.float32)
    g2 = 1.0 + 0.1 * jax.random.normal(ks[5], (planes,), jnp.float32)
    b2 = 0.1 * jax.random.normal(ks[6], (planes,), jnp.float32)
    g3 = 1.0 + 0.1 * jax.random.normal(ks[7], (cout,), jnp.float32)
    b3 = 0.1 * jax.random.normal(ks[8], (cout,), jnp.float32)
    wfc1_t = 0.2 * jax.random.normal(ks[9], (hidden, cout), jnp.float32)          # Linear (out,in)
    bfc1 = 0.1 * jax.random.normal(ks[10], (hidden,), jnp.float32)
    wfc2_t = 0.2 * jax.random.normal(ks[11], (cout, hidden), jnp.float32)
    bfc2 = 0.1 * jax.random.normal(ks[12], (cout,), jnp.float32)
    alpha = jnp.full((1, 1), 0.25, jnp.float32)    # nn.PReLU() default (single shared alpha)

    # Block-diagonal per-tap weight matrices encoding groups=cardinality.
    # Tap order is (kd, kh, kw) flattened kd-major, matching the wrapper's tap gather.
    w2_taps = jnp.zeros((27, planes, planes), jnp.float32)
    for g in range(cardinality):
        blk = w2_t[g * cpg:(g + 1) * cpg]                                # (cpg_out, cpg_in, 3,3,3)
        blk = jnp.transpose(blk, (2, 3, 4, 1, 0)).reshape(27, cpg, cpg)  # [tap, in, out]
        w2_taps = w2_taps.at[:, g * cpg:(g + 1) * cpg, g * cpg:(g + 1) * cpg].set(blk)

    return {
        "w1": w1_t.T, "g1": g1, "b1": b1,
        "w2_torch": w2_t, "w2_taps": w2_taps, "g2": g2, "b2": b2,
        "w3": w3_t.T, "g3": g3, "b3": b3,
        "wfc1": wfc1_t.T, "bfc1": bfc1, "wfc2": wfc2_t.T, "bfc2": bfc2,
        "alpha": alpha,
    }


# ------------------------------- pure-JAX f32 reference ------------------------------
def reference_forward(x, p, cardinality):
    xc = jnp.transpose(x, (0, 2, 3, 4, 1)).astype(jnp.float32)
    a = p["alpha"][0, 0]

    def bn(y, g, b):
        mu = jnp.mean(y, axis=(0, 1, 2, 3), keepdims=True)
        var = jnp.mean(jnp.square(y - mu), axis=(0, 1, 2, 3), keepdims=True)
        return (y - mu) * jax.lax.rsqrt(var + EPS) * g + b

    prelu = lambda y: jnp.where(y >= 0, y, a * y)

    h = jnp.einsum("ndhwc,co->ndhwo", xc, p["w1"])
    h = prelu(bn(h, p["g1"], p["b1"]))
    rhs = jnp.transpose(p["w2_torch"], (2, 3, 4, 1, 0))   # DHWIO
    h = jax.lax.conv_general_dilated(
        h, rhs, window_strides=(1, 1, 1), padding=((2, 2), (2, 2), (2, 2)),
        rhs_dilation=(2, 2, 2),
        dimension_numbers=("NDHWC", "DHWIO", "NDHWC"),
        feature_group_count=cardinality)
    h = prelu(bn(h, p["g2"], p["b2"]))
    h = jnp.einsum("ndhwc,co->ndhwo", h, p["w3"])
    h = bn(h, p["g3"], p["b3"])
    pooled = jnp.mean(h, axis=(1, 2, 3))
    se = jax.nn.sigmoid(
        jnp.maximum(pooled @ p["wfc1"] + p["bfc1"], 0.0) @ p["wfc2"] + p["bfc2"])
    h = h * se[:, None, None, None, :] + xc
    h = prelu(h)
    return jnp.transpose(h, (0, 4, 1, 2, 3))


if __name__ == "__main__":
    N, D, H, W = 2, 8, 8, 8
    planes, cardinality = 16, 4
    inplanes = planes * 2          # expansion=2; downsample=None requires this match
    key = jax.random.PRNGKey(0)
    kx, kp = jax.random.split(key)
    x = jax.random.normal(kx, (N, inplanes, D, H, W), dtype=jnp.float32)
    params = init_params(kp, inplanes, planes, cardinality)

    fwd = jax.jit(senet_dilated_bottleneck)
    out = jax.block_until_ready(fwd(x, params))
    assert out.shape == (N, planes * 2, D, H, W), out.shape

    ref = jax.block_until_ready(reference_forward(x, params, cardinality))
    err = float(jnp.max(jnp.abs(out - ref)))
    # Kernels use bf16 MXU operands / bf16 intermediates vs a pure-f32 XLA reference;
    # BN stats, rsqrt, sigmoid and PReLU stay in f32, so a loose absolute bound suffices
    # (gross indexing errors would be O(1)).
    assert err < 1e-1, f"mismatch vs reference, max abs err = {err}"
    print("KERNEL_OK")
</pallas_src>

<mosaic_0001>
module attributes {stable_mosaic.version = 11 : i64} {
  func.func @_conv1_kernel(%arg0: i32, %arg1: memref<512x32xf32, #tpu.memory_space<vmem>>, %arg2: memref<32x16xbf16, #tpu.memory_space<vmem>>, %arg3: memref<512x16xbf16, #tpu.memory_space<vmem>>, %arg4: memref<1x1x16xf32, #tpu.memory_space<vmem>>, %arg5: memref<1x1x16xf32, #tpu.memory_space<vmem>>) attributes {dimension_semantics = [#tpu.dimension_semantics<parallel>], iteration_bounds = array<i64: 2>, scalar_prefetch = 0 : i64, scratch_operands = 0 : i64, tpu.core_type = #tpu.core_type<tc>, window_params = [{transform_indices = @transform_0, window_bounds = array<i64: 512, 32>}, {pipeline_mode = #tpu.pipeline_mode<synchronous>, transform_indices = @transform_1, window_bounds = array<i64: 32, 16>}, {transform_indices = @transform_2, window_bounds = array<i64: 512, 16>}, {transform_indices = @transform_3, window_bounds = array<i64: 1, 1, 16>}, {transform_indices = @transform_4, window_bounds = array<i64: 1, 1, 16>}]} {
    %c0 = arith.constant 0 : index
    %c0_0 = arith.constant 0 : index
    %0 = vector.load %arg1[%c0, %c0_0] : memref<512x32xf32, #tpu.memory_space<vmem>>, vector<512x32xf32>
    %1 = arith.truncf %0 : vector<512x32xf32> to vector<512x32xbf16>
    %c0_1 = arith.constant 0 : index
    %c0_2 = arith.constant 0 : index
    %2 = vector.load %arg2[%c0_1, %c0_2] : memref<32x16xbf16, #tpu.memory_space<vmem>>, vector<32x16xbf16>
    %cst = arith.constant dense<0.000000e+00> : vector<512x16xf32>
    %3 = tpu.matmul %1, %2, %cst {dimension_numbers = #tpu.dot_dimension_numbers<[1], [0], [0], [1], [0, 0, 1, 1], [], []>} : vector<512x32xbf16>, vector<32x16xbf16>, vector<512x16xf32> -> vector<512x16xf32>
    %4 = arith.truncf %3 : vector<512x16xf32> to vector<512x16xbf16>
    %c0_3 = arith.constant 0 : index
    %c0_4 = arith.constant 0 : index
    %5 = vector.load %arg3[%c0_3, %c0_4] : memref<512x16xbf16, #tpu.memory_space<vmem>>, vector<512x16xbf16>
    tpu.vector_store %arg3[%c0_3, %c0_4], %4 {strides = array<i32>} : memref<512x16xbf16, #tpu.memory_space<vmem>>, vector<512x16xbf16>,
    %cst_5 = arith.constant dense<0.000000e+00> : vector<16xf32>
    %6 = vector.multi_reduction <add>, %3, %cst_5 [0] : vector<512x16xf32> to vector<16xf32>
    %7 = vector.shape_cast %6 : vector<16xf32> to vector<1x16xf32>
    %c0_6 = arith.constant 0 : index
    %c0_7 = arith.constant 0 : index
    %c0_8 = arith.constant 0 : index
    %8 = vector.load %arg4[%c0_6, %c0_7, %c0_8] : memref<1x1x16xf32, #tpu.memory_space<vmem>>, vector<1x1x16xf32>
    %9 = vector.shape_cast %8 : vector<1x1x16xf32> to vector<1x16xf32>
    %10 = vector.shape_cast %7 : vector<1x16xf32> to vector<1x1x16xf32>
    tpu.vector_store %arg4[%c0_6, %c0_7, %c0_8], %10 {strides = array<i32>} : memref<1x1x16xf32, #tpu.memory_space<vmem>>, vector<1x1x16xf32>,
    %11 = arith.mulf %3, %3 : vector<512x16xf32>
    %cst_9 = arith.constant dense<0.000000e+00> : vector<16xf32>
    %12 = vector.multi_reduction <add>, %11, %cst_9 [0] : vector<512x16xf32> to vector<16xf32>
    %13 = vector.shape_cast %12 : vector<16xf32> to vector<1x16xf32>
    %c0_10 = arith.constant 0 : index
    %c0_11 = arith.constant 0 : index
    %c0_12 = arith.constant 0 : index
    %14 = vector.load %arg5[%c0_10, %c0_11, %c0_12] : memref<1x1x16xf32, #tpu.memory_space<vmem>>, vector<1x1x16xf32>
    %15 = vector.shape_cast %14 : vector<1x1x16xf32> to vector<1x16xf32>
    %16 = vector.shape_cast %13 : vector<1x16xf32> to vector<1x1x16xf32>
    tpu.vector_store %arg5[%c0_10, %c0_11, %c0_12], %16 {strides = array<i32>} : memref<1x1x16xf32, #tpu.memory_space<vmem>>, vector<1x1x16xf32>,
    return
  }
  func.func @transform_0(%arg0: i32) -> (i32, i32) {
    %c0_i32 = arith.constant 0 : i32
    %c0_i32_0 = arith.constant 0 : i32
    return %arg0, %c0_i32 : i32, i32
  }
  func.func @transform_1(%arg0: i32) -> (i32, i32) {
    %c0_i32 = arith.constant 0 : i32
    %c0_i32_0 = arith.constant 0 : i32
    %c0_i32_1 = arith.constant 0 : i32
    return %c0_i32, %c0_i32_0 : i32, i32
  }
  func.func @transform_2(%arg0: i32) -> (i32, i32) {
    %c0_i32 = arith.constant 0 : i32
    %c0_i32_0 = arith.constant 0 : i32
    return %arg0, %c0_i32 : i32, i32
  }
  func.func @transform_3(%arg0: i32) -> (i32, i32, i32) {
    %c0_i32 = arith.constant 0 : i32
    %c0_i32_0 = arith.constant 0 : i32
    %c0_i32_1 = arith.constant 0 : i32
    return %arg0, %c0_i32, %c0_i32_0 : i32, i32, i32
  }
  func.func @transform_4(%arg0: i32) -> (i32, i32, i32) {
    %c0_i32 = arith.constant 0 : i32
    %c0_i32_0 = arith.constant 0 : i32
    %c0_i32_1 = arith.constant 0 : i32
    return %arg0, %c0_i32, %c0_i32_0 : i32, i32, i32
  }
}

module attributes {stable_mosaic.version = 11 : i64} {
  func.func @_bn_prelu_kernel(%arg0: i32, %arg1: memref<64x128xbf16, #tpu.memory_space<vmem>>, %arg2: memref<1x128xf32, #tpu.memory_space<vmem>>, %arg3: memref<1x128xf32, #tpu.memory_space<vmem>>, %arg4: memref<1x1xf32, #tpu.memory_space<smem>>, %arg5: memref<64x128xbf16, #tpu.memory_space<vmem>>) attributes {dimension_semantics = [#tpu.dimension_semantics<parallel>], iteration_bounds = array<i64: 2>, scalar_prefetch = 0 : i64, scratch_operands = 0 : i64, tpu.core_type = #tpu.core_type<tc>, window_params = [{transform_indices = @transform_0, window_bounds = array<i64: 64, 128>}, {pipeline_mode = #tpu.pipeline_mode<synchronous>, transform_indices = @transform_1, window_bounds = array<i64: 1, 128>}, {pipeline_mode = #tpu.pipeline_mode<synchronous>, transform_indices = @transform_2, window_bounds = array<i64: 1, 128>}, {transform_indices = @transform_3, window_bounds = array<i64: 1, 1>}, {transform_indices = @transform_4, window_bounds = array<i64: 64, 128>}]} {
    %c0 = arith.constant 0 : index
    %c0_0 = arith.constant 0 : index
    %0 = memref.load %arg4[%c0, %c0_0] : memref<1x1xf32, #tpu.memory_space<smem>>
    %c0_1 = arith.constant 0 : index
    %c0_2 = arith.constant 0 : index
    %1 = vector.load %arg1[%c0_1, %c0_2] : memref<64x128xbf16, #tpu.memory_space<vmem>>, vector<64x128xbf16>
    %2 = arith.extf %1 : vector<64x128xbf16> to vector<64x128xf32>
    %c0_3 = arith.constant 0 : index
    %c0_4 = arith.constant 0 : index
    %3 = vector.load %arg2[%c0_3, %c0_4] : memref<1x128xf32, #tpu.memory_space<vmem>>, vector<1x128xf32>
    %4 = vector.broadcast %3 : vector<1x128xf32> to vector<64x128xf32>
    %5 = arith.mulf %2, %4 : vector<64x128xf32>
    %c0_5 = arith.constant 0 : index
    %c0_6 = arith.constant 0 : index
    %6 = vector.load %arg3[%c0_5, %c0_6] : memref<1x128xf32, #tpu.memory_space<vmem>>, vector<1x128xf32>
    %7 = vector.broadcast %6 : vector<1x128xf32> to vector<64x128xf32>
    %8 = arith.addf %5, %7 : vector<64x128xf32>
    %cst = arith.constant 0.000000e+00 : f32
    %9 = vector.broadcast %cst : f32 to vector<64x128xf32>
    %10 = arith.cmpf oge, %8, %9 : vector<64x128xf32>
    %11 = vector.broadcast %0 : f32 to vector<64x128xf32>
    %12 = arith.mulf %11, %8 : vector<64x128xf32>
    %13 = arith.select %10, %8, %12 : vector<64x128xi1>, vector<64x128xf32>
    %14 = arith.truncf %13 : vector<64x128xf32> to vector<64x128xbf16>
    %c0_7 = arith.constant 0 : index
    %c0_8 = arith.constant 0 : index
    %15 = vector.load %arg5[%c0_7, %c0_8] : memref<64x128xbf16, #tpu.memory_space<vmem>>, vector<64x128xbf16>
    tpu.vector_store %arg5[%c0_7, %c0_8], %14 {strides = array<i32>} : memref<64x128xbf16, #tpu.memory_space<vmem>>, vector<64x128xbf16>,
    return
  }
  func.func @transform_0(%arg0: i32) -> (i32, i32) {
    %c0_i32 = arith.constant 0 : i32
    %c0_i32_0 = arith.constant 0 : i32
    return %arg0, %c0_i32 : i32, i32
  }
  func.func @transform_1(%arg0: i32) -> (i32, i32) {
    %c0_i32 = arith.constant 0 : i32
    %c0_i32_0 = arith.constant 0 : i32
    %c0_i32_1 = arith.constant 0 : i32
    return %c0_i32, %c0_i32_0 : i32, i32
  }
  func.func @transform_2(%arg0: i32) -> (i32, i32) {
    %c0_i32 = arith.constant 0 : i32
    %c0_i32_0 = arith.constant 0 : i32
    %c0_i32_1 = arith.constant 0 : i32
    return %c0_i32, %c0_i32_0 : i32, i32
  }
  func.func @transform_3(%arg0: i32) -> (i32, i32) {
    %c0_i32 = arith.constant 0 : i32
    %c0_i32_0 = arith.constant 0 : i32
    %c0_i32_1 = arith.constant 0 : i32
    return %c0_i32, %c0_i32_0 : i32, i32
  }
  func.func @transform_4(%arg0: i32) -> (i32, i32) {
    %c0_i32 = arith.constant 0 : i32
    %c0_i32_0 = arith.constant 0 : i32
    return %arg0, %c0_i32 : i32, i32
  }
}

module attributes {stable_mosaic.version = 11 : i64} {
  func.func @_conv2_kernel(%arg0: i32, %arg1: i32, %arg2: i32, %arg3: memref<1x1x64x144xbf16, #tpu.memory_space<vmem>>, %arg4: memref<1x144x16xbf16, #tpu.memory_space<vmem>>, %arg5: memref<1x1x64x16xbf16, #tpu.memory_space<vmem>>, %arg6: memref<1x1x1x16xf32, #tpu.memory_space<vmem>>, %arg7: memref<1x1x1x16xf32, #tpu.memory_space<vmem>>, %arg8: memref<64x16xf32, #tpu.memory_space<vmem>>) attributes {dimension_semantics = [#tpu.dimension_semantics<parallel>, #tpu.dimension_semantics<parallel>, #tpu.dimension_semantics<arbitrary>], iteration_bounds = array<i64: 2, 8, 3>, scalar_prefetch = 0 : i64, scratch_operands = 1 : i64, tpu.core_type = #tpu.core_type<tc>, window_params = [{transform_indices = @transform_0, window_bounds = array<i64: 1, 1, 64, 144>}, {transform_indices = @transform_1, window_bounds = array<i64: 1, 144, 16>}, {transform_indices = @transform_2, window_bounds = array<i64: 1, 1, 64, 16>}, {transform_indices = @transform_3, window_bounds = array<i64: 1, 1, 1, 16>}, {transform_indices = @transform_4, window_bounds = array<i64: 1, 1, 1, 16>}]} {
    %c0_i32 = arith.constant 0 : i32
    %0 = arith.cmpi eq, %arg2, %c0_i32 : i32
    %1 = arith.extui %0 : i1 to i32
    %c0_i32_0 = arith.constant 0 : i32
    %2 = arith.cmpi ne, %1, %c0_i32_0 : i32
    scf.if %2 {
      %cst_12 = arith.constant 0.000000e+00 : f32
      %14 = vector.broadcast %cst_12 : f32 to vector<64x16xf32>
      %c0_13 = arith.constant 0 : index
      %c0_14 = arith.constant 0 : index
      %15 = vector.load %arg8[%c0_13, %c0_14] : memref<64x16xf32, #tpu.memory_space<vmem>>, vector<64x16xf32>
      tpu.vector_store %arg8[%c0_13, %c0_14], %14 {strides = array<i32>} : memref<64x16xf32, #tpu.memory_space<vmem>>, vector<64x16xf32>,
    } else {
    }
    %c0 = arith.constant 0 : index
    %c0_1 = arith.constant 0 : index
    %3 = vector.load %arg8[%c0, %c0_1] : memref<64x16xf32, #tpu.memory_space<vmem>>, vector<64x16xf32>
    %c0_2 = arith.constant 0 : index
    %c0_3 = arith.constant 0 : index
    %c0_4 = arith.constant 0 : index
    %c0_5 = arith.constant 0 : index
    %4 = vector.load %arg3[%c0_2, %c0_3, %c0_4, %c0_5] : memref<1x1x64x144xbf16, #tpu.memory_space<vmem>>, vector<1x1x64x144xbf16>
    %5 = vector.shape_cast %4 : vector<1x1x64x144xbf16> to vector<64x144xbf16>
    %c0_6 = arith.constant 0 : index
    %c0_7 = arith.constant 0 : index
    %c0_8 = arith.constant 0 : index
    %6 = vector.load %arg4[%c0_6, %c0_7, %c0_8] : memref<1x144x16xbf16, #tpu.memory_space<vmem>>, vector<1x144x16xbf16>
    %7 = vector.shape_cast %6 : vector<1x144x16xbf16> to vector<144x16xbf16>
    %cst = arith.constant dense<0.000000e+00> : vector<64x16xf32>
    %8 = tpu.matmul %5, %7, %cst {dimension_numbers = #tpu.dot_dimension_numbers<[1], [0], [0], [1], [0, 0, 1, 1], [], []>} : vector<64x144xbf16>, vector<144x16xbf16>, vector<64x16xf32> -> vector<64x16xf32>
    %9 = arith.addf %3, %8 : vector<64x16xf32>
    %c0_9 = arith.constant 0 : index
    %c0_10 = arith.constant 0 : index
    %10 = vector.load %arg8[%c0_9, %c0_10] : memref<64x16xf32, #tpu.memory_space<vmem>>, vector<64x16xf32>
    tpu.vector_store %arg8[%c0_9, %c0_10], %9 {strides = array<i32>} : memref<64x16xf32, #tpu.memory_space<vmem>>, vector<64x16xf32>,
    %c2_i32 = arith.constant 2 : i32
    %11 = arith.cmpi eq, %arg2, %c2_i32 : i32
    %12 = arith.extui %11 : i1 to i32
    %c0_i32_11 = arith.constant 0 : i32
    %13 = arith.cmpi ne, %12, %c0_i32_11 : i32
    scf.if %13 {
      %c0_12 = arith.constant 0 : index
      %c0_13 = arith.constant 0 : index
      %14 = vector.load %arg8[%c0_12, %c0_13] : memref<64x16xf32, #tpu.memory_space<vmem>>, vector<64x16xf32>
      %15 = arith.truncf %14 : vector<64x16xf32> to vector<64x16xbf16>
      %c0_14 = arith.constant 0 : index
      %c0_15 = arith.constant 0 : index
      %c0_16 = arith.constant 0 : index
      %c0_17 = arith.constant 0 : index
      %16 = vector.load %arg5[%c0_14, %c0_15, %c0_16, %c0_17] : memref<1x1x64x16xbf16, #tpu.memory_space<vmem>>, vector<1x1x64x16xbf16>
      %17 = vector.shape_cast %16 : vector<1x1x64x16xbf16> to vector<64x16xbf16>
      %18 = vector.shape_cast %15 : vector<64x16xbf16> to vector<1x1x64x16xbf16>
      tpu.vector_store %arg5[%c0_14, %c0_15, %c0_16, %c0_17], %18 {strides = array<i32>} : memref<1x1x64x16xbf16, #tpu.memory_space<vmem>>, vector<1x1x64x16xbf16>,
      %cst_18 = arith.constant dense<0.000000e+00> : vector<16xf32>
      %19 = vector.multi_reduction <add>, %14, %cst_18 [0] : vector<64x16xf32> to vector<16xf32>
      %20 = vector.shape_cast %19 : vector<16xf32> to vector<1x16xf32>
      %c0_19 = arith.constant 0 : index
      %c0_20 = arith.constant 0 : index
      %c0_21 = arith.constant 0 : index
      %c0_22 = arith.constant 0 : index
      %21 = vector.load %arg6[%c0_19, %c0_20, %c0_21, %c0_22] : memref<1x1x1x16xf32, #tpu.memory_space<vmem>>, vector<1x1x1x16xf32>
      %22 = vector.shape_cast %21 : vector<1x1x1x16xf32> to vector<1x16xf32>
      %23 = vector.shape_cast %20 : vector<1x16xf32> to vector<1x1x1x16xf32>
      tpu.vector_store %arg6[%c0_19, %c0_20, %c0_21, %c0_22], %23 {strides = array<i32>} : memref<1x1x1x16xf32, #tpu.memory_space<vmem>>, vector<1x1x1x16xf32>,
      %24 = arith.mulf %14, %14 : vector<64x16xf32>
      %cst_23 = arith.constant dense<0.000000e+00> : vector<16xf32>
      %25 = vector.multi_reduction <add>, %24, %cst_23 [0] : vector<64x16xf32> to vector<16xf32>
      %26 = vector.shape_cast %25 : vector<16xf32> to vector<1x16xf32>
      %c0_24 = arith.constant 0 : index
      %c0_25 = arith.constant 0 : index
      %c0_26 = arith.constant 0 : index
      %c0_27 = arith.constant 0 : index
      %27 = vector.load %arg7[%c0_24, %c0_25, %c0_26, %c0_27] : memref<1x1x1x16xf32, #tpu.memory_space<vmem>>, vector<1x1x1x16xf32>
      %28 = vector.shape_cast %27 : vector<1x1x1x16xf32> to vector<1x16xf32>
      %29 = vector.shape_cast %26 : vector<1x16xf32> to vector<1x1x1x16xf32>
      tpu.vector_store %arg7[%c0_24, %c0_25, %c0_26, %c0_27], %29 {strides = array<i32>} : memref<1x1x1x16xf32, #tpu.memory_space<vmem>>, vector<1x1x1x16xf32>,
    } else {
    }
    return
  }
  func.func @transform_0(%arg0: i32, %arg1: i32, %arg2: i32) -> (i32, i32, i32, i32) {
    %c2_i32 = arith.constant 2 : i32
    %0 = arith.muli %c2_i32, %arg2 : i32
    %1 = arith.addi %arg1, %0 : i32
    %c0_i32 = arith.constant 0 : i32
    %c0_i32_0 = arith.constant 0 : i32
    %c0_i32_1 = arith.constant 0 : i32
    return %arg0, %1, %c0_i32, %c0_i32_0 : i32, i32, i32, i32
  }
  func.func @transform_1(%arg0: i32, %arg1: i32, %arg2: i32) -> (i32, i32, i32) {
    %c0_i32 = arith.constant 0 : i32
    %c0_i32_0 = arith.constant 0 : i32
    %c0_i32_1 = arith.constant 0 : i32
    return %arg2, %c0_i32, %c0_i32_0 : i32, i32, i32
  }
  func.func @transform_2(%arg0: i32, %arg1: i32, %arg2: i32) -> (i32, i32, i32, i32) {
    %c0_i32 = arith.constant 0 : i32
    %c0_i32_0 = arith.constant 0 : i32
    %c0_i32_1 = arith.constant 0 : i32
    return %arg0, %arg1, %c0_i32, %c0_i32_0 : i32, i32, i32, i32
  }
  func.func @transform_3(%arg0: i32, %arg1: i32, %arg2: i32) -> (i32, i32, i32, i32) {
    %c0_i32 = arith.constant 0 : i32
    %c0_i32_0 = arith.constant 0 : i32
    %c0_i32_1 = arith.constant 0 : i32
    return %arg0, %arg1, %c0_i32, %c0_i32_0 : i32, i32, i32, i32
  }
  func.func @transform_4(%arg0: i32, %arg1: i32, %arg2: i32) -> (i32, i32, i32, i32) {
    %c0_i32 = arith.constant 0 : i32
    %c0_i32_0 = arith.constant 0 : i32
    %c0_i32_1 = arith.constant 0 : i32
    return %arg0, %arg1, %c0_i32, %c0_i32_0 : i32, i32, i32, i32
  }
}

module attributes {stable_mosaic.version = 11 : i64} {
  func.func @_bn_act_conv3_kernel(%arg0: i32, %arg1: i32, %arg2: memref<1x256x16xbf16, #tpu.memory_space<vmem>>, %arg3: memref<1x16xf32, #tpu.memory_space<vmem>>, %arg4: memref<1x16xf32, #tpu.memory_space<vmem>>, %arg5: memref<16x32xbf16, #tpu.memory_space<vmem>>, %arg6: memref<1x1xf32, #tpu.memory_space<smem>>, %arg7: memref<1x256x32xf32, #tpu.memory_space<vmem>>, %arg8: memref<1x1x1x32xf32, #tpu.memory_space<vmem>>, %arg9: memref<1x1x1x32xf32, #tpu.memory_space<vmem>>) attributes {dimension_semantics = [#tpu.dimension_semantics<parallel>, #tpu.dimension_semantics<parallel>], iteration_bounds = array<i64: 2, 2>, scalar_prefetch = 0 : i64, scratch_operands = 0 : i64, tpu.core_type = #tpu.core_type<tc>, window_params = [{transform_indices = @transform_0, window_bounds = array<i64: 1, 256, 16>}, {pipeline_mode = #tpu.pipeline_mode<synchronous>, transform_indices = @transform_1, window_bounds = array<i64: 1, 16>}, {pipeline_mode = #tpu.pipeline_mode<synchronous>, transform_indices = @transform_2, window_bounds = array<i64: 1, 16>}, {pipeline_mode = #tpu.pipeline_mode<synchronous>, transform_indices = @transform_3, window_bounds = array<i64: 16, 32>}, {transform_indices = @transform_4, window_bounds = array<i64: 1, 1>}, {transform_indices = @transform_5, window_bounds = array<i64: 1, 256, 32>}, {transform_indices = @transform_6, window_bounds = array<i64: 1, 1, 1, 32>}, {transform_indices = @transform_7, window_bounds = array<i64: 1, 1, 1, 32>}]} {
    %c0 = arith.constant 0 : index
    %c0_0 = arith.constant 0 : index
    %0 = memref.load %arg6[%c0, %c0_0] : memref<1x1xf32, #tpu.memory_space<smem>>
    %c0_1 = arith.constant 0 : index
    %c0_2 = arith.constant 0 : index
    %c0_3 = arith.constant 0 : index
    %1 = vector.load %arg2[%c0_1, %c0_2, %c0_3] : memref<1x256x16xbf16, #tpu.memory_space<vmem>>, vector<1x256x16xbf16>
    %2 = vector.shape_cast %1 : vector<1x256x16xbf16> to vector<256x16xbf16>
    %3 = arith.extf %2 : vector<256x16xbf16> to vector<256x16xf32>
    %c0_4 = arith.constant 0 : index
    %c0_5 = arith.constant 0 : index
    %4 = vector.load %arg3[%c0_4, %c0_5] : memref<1x16xf32, #tpu.memory_space<vmem>>, vector<1x16xf32>
    %5 = vector.broadcast %4 : vector<1x16xf32> to vector<256x16xf32>
    %6 = arith.mulf %3, %5 : vector<256x16xf32>
    %c0_6 = arith.constant 0 : index
    %c0_7 = arith.constant 0 : index
    %7 = vector.load %arg4[%c0_6, %c0_7] : memref<1x16xf32, #tpu.memory_space<vmem>>, vector<1x16xf32>
    %8 = vector.broadcast %7 : vector<1x16xf32> to vector<256x16xf32>
    %9 = arith.addf %6, %8 : vector<256x16xf32>
    %cst = arith.constant 0.000000e+00 : f32
    %10 = vector.broadcast %cst : f32 to vector<256x16xf32>
    %11 = arith.cmpf oge, %9, %10 : vector<256x16xf32>
    %12 = vector.broadcast %0 : f32 to vector<256x16xf32>
    %13 = arith.mulf %12, %9 : vector<256x16xf32>
    %14 = arith.select %11, %9, %13 : vector<256x16xi1>, vector<256x16xf32>
    %15 = arith.truncf %14 : vector<256x16xf32> to vector<256x16xbf16>
    %c0_8 = arith.constant 0 : index
    %c0_9 = arith.constant 0 : index
    %16 = vector.load %arg5[%c0_8, %c0_9] : memref<16x32xbf16, #tpu.memory_space<vmem>>, vector<16x32xbf16>
    %cst_10 = arith.constant dense<0.000000e+00> : vector<256x32xf32>
    %17 = tpu.matmul %15, %16, %cst_10 {dimension_numbers = #tpu.dot_dimension_numbers<[1], [0], [0], [1], [0, 0, 1, 1], [], []>} : vector<256x16xbf16>, vector<16x32xbf16>, vector<256x32xf32> -> vector<256x32xf32>
    %c0_11 = arith.constant 0 : index
    %c0_12 = arith.constant 0 : index
    %c0_13 = arith.constant 0 : index
    %18 = vector.load %arg7[%c0_11, %c0_12, %c0_13] : memref<1x256x32xf32, #tpu.memory_space<vmem>>, vector<1x256x32xf32>
    %19 = vector.shape_cast %18 : vector<1x256x32xf32> to vector<256x32xf32>
    %20 = vector.shape_cast %17 : vector<256x32xf32> to vector<1x256x32xf32>
    tpu.vector_store %arg7[%c0_11, %c0_12, %c0_13], %20 {strides = array<i32>} : memref<1x256x32xf32, #tpu.memory_space<vmem>>, vector<1x256x32xf32>,
    %cst_14 = arith.constant dense<0.000000e+00> : vector<32xf32>
    %21 = vector.multi_reduction <add>, %17, %cst_14 [0] : vector<256x32xf32> to vector<32xf32>
    %22 = vector.shape_cast %21 : vector<32xf32> to vector<1x32xf32>
    %c0_15 = arith.constant 0 : index
    %c0_16 = arith.constant 0 : index
    %c0_17 = arith.constant 0 : index
    %c0_18 = arith.constant 0 : index
    %23 = vector.load %arg8[%c0_15, %c0_16, %c0_17, %c0_18] : memref<1x1x1x32xf32, #tpu.memory_space<vmem>>, vector<1x1x1x32xf32>
    %24 = vector.shape_cast %23 : vector<1x1x1x32xf32> to vector<1x32xf32>
    %25 = vector.shape_cast %22 : vector<1x32xf32> to vector<1x1x1x32xf32>
    tpu.vector_store %arg8[%c0_15, %c0_16, %c0_17, %c0_18], %25 {strides = array<i32>} : memref<1x1x1x32xf32, #tpu.memory_space<vmem>>, vector<1x1x1x32xf32>,
    %26 = arith.mulf %17, %17 : vector<256x32xf32>
    %cst_19 = arith.constant dense<0.000000e+00> : vector<32xf32>
    %27 = vector.multi_reduction <add>, %26, %cst_19 [0] : vector<256x32xf32> to vector<32xf32>
    %28 = vector.shape_cast %27 : vector<32xf32> to vector<1x32xf32>
    %c0_20 = arith.constant 0 : index
    %c0_21 = arith.constant 0 : index
    %c0_22 = arith.constant 0 : index
    %c0_23 = arith.constant 0 : index
    %29 = vector.load %arg9[%c0_20, %c0_21, %c0_22, %c0_23] : memref<1x1x1x32xf32, #tpu.memory_space<vmem>>, vector<1x1x1x32xf32>
    %30 = vector.shape_cast %29 : vector<1x1x1x32xf32> to vector<1x32xf32>
    %31 = vector.shape_cast %28 : vector<1x32xf32> to vector<1x1x1x32xf32>
    tpu.vector_store %arg9[%c0_20, %c0_21, %c0_22, %c0_23], %31 {strides = array<i32>} : memref<1x1x1x32xf32, #tpu.memory_space<vmem>>, vector<1x1x1x32xf32>,
    return
  }
  func.func @transform_0(%arg0: i32, %arg1: i32) -> (i32, i32, i32) {
    %c0_i32 = arith.constant 0 : i32
    %c0_i32_0 = arith.constant 0 : i32
    return %arg0, %arg1, %c0_i32 : i32, i32, i32
  }
  func.func @transform_1(%arg0: i32, %arg1: i32) -> (i32, i32) {
    %c0_i32 = arith.constant 0 : i32
    %c0_i32_0 = arith.constant 0 : i32
    %c0_i32_1 = arith.constant 0 : i32
    return %c0_i32, %c0_i32_0 : i32, i32
  }
  func.func @transform_2(%arg0: i32, %arg1: i32) -> (i32, i32) {
    %c0_i32 = arith.constant 0 : i32
    %c0_i32_0 = arith.constant 0 : i32
    %c0_i32_1 = arith.constant 0 : i32
    return %c0_i32, %c0_i32_0 : i32, i32
  }
  func.func @transform_3(%arg0: i32, %arg1: i32) -> (i32, i32) {
    %c0_i32 = arith.constant 0 : i32
    %c0_i32_0 = arith.constant 0 : i32
    %c0_i32_1 = arith.constant 0 : i32
    return %c0_i32, %c0_i32_0 : i32, i32
  }
  func.func @transform_4(%arg0: i32, %arg1: i32) -> (i32, i32) {
    %c0_i32 = arith.constant 0 : i32
    %c0_i32_0 = arith.constant 0 : i32
    %c0_i32_1 = arith.constant 0 : i32
    return %c0_i32, %c0_i32_0 : i32, i32
  }
  func.func @transform_5(%arg0: i32, %arg1: i32) -> (i32, i32, i32) {
    %c0_i32 = arith.constant 0 : i32
    %c0_i32_0 = arith.constant 0 : i32
    return %arg0, %arg1, %c0_i32 : i32, i32, i32
  }
  func.func @transform_6(%arg0: i32, %arg1: i32) -> (i32, i32, i32, i32) {
    %c0_i32 = arith.constant 0 : i32
    %c0_i32_0 = arith.constant 0 : i32
    %c0_i32_1 = arith.constant 0 : i32
    return %arg0, %arg1, %c0_i32, %c0_i32_0 : i32, i32, i32, i32
  }
  func.func @transform_7(%arg0: i32, %arg1: i32) -> (i32, i32, i32, i32) {
    %c0_i32 = arith.constant 0 : i32
    %c0_i32_0 = arith.constant 0 : i32
    %c0_i32_1 = arith.constant 0 : i32
    return %arg0, %arg1, %c0_i32, %c0_i32_0 : i32, i32, i32, i32
  }
}

module attributes {stable_mosaic.version = 11 : i64} {
  func.func @_se_res_prelu_kernel(%arg0: i32, %arg1: i32, %arg2: memref<1x64x128xf32, #tpu.memory_space<vmem>>, %arg3: memref<1x64x128xf32, #tpu.memory_space<vmem>>, %arg4: memref<1x128xf32, #tpu.memory_space<vmem>>, %arg5: memref<1x128xf32, #tpu.memory_space<vmem>>, %arg6: memref<1x1x32xf32, #tpu.memory_space<vmem>>, %arg7: memref<32x2xf32, #tpu.memory_space<vmem>>, %arg8: memref<1x2xf32, #tpu.memory_space<vmem>>, %arg9: memref<2x32xf32, #tpu.memory_space<vmem>>, %arg10: memref<1x32xf32, #tpu.memory_space<vmem>>, %arg11: memref<1x1xf32, #tpu.memory_space<smem>>, %arg12: memref<1x64x128xf32, #tpu.memory_space<vmem>>) attributes {dimension_semantics = [#tpu.dimension_semantics<parallel>, #tpu.dimension_semantics<parallel>], iteration_bounds = array<i64: 2, 2>, scalar_prefetch = 0 : i64, scratch_operands = 0 : i64, tpu.core_type = #tpu.core_type<tc>, window_params = [{transform_indices = @transform_0, window_bounds = array<i64: 1, 64, 128>}, {transform_indices = @transform_1, window_bounds = array<i64: 1, 64, 128>}, {pipeline_mode = #tpu.pipeline_mode<synchronous>, transform_indices = @transform_2, window_bounds = array<i64: 1, 128>}, {pipeline_mode = #tpu.pipeline_mode<synchronous>, transform_indices = @transform_3, window_bounds = array<i64: 1, 128>}, {transform_indices = @transform_4, window_bounds = array<i64: 1, 1, 32>}, {pipeline_mode = #tpu.pipeline_mode<synchronous>, transform_indices = @transform_5, window_bounds = array<i64: 32, 2>}, {pipeline_mode = #tpu.pipeline_mode<synchronous>, transform_indices = @transform_6, window_bounds = array<i64: 1, 2>}, {pipeline_mode = #tpu.pipeline_mode<synchronous>, transform_indices = @transform_7, window_bounds = array<i64: 2, 32>}, {pipeline_mode = #tpu.pipeline_mode<synchronous>, transform_indices = @transform_8, window_bounds = array<i64: 1, 32>}, {transform_indices = @transform_9, window_bounds = array<i64: 1, 1>}, {transform_indices = @transform_10, window_bounds = array<i64: 1, 64, 128>}]} {
    %c0 = arith.constant 0 : index
    %c0_0 = arith.constant 0 : index
    %0 = memref.load %arg11[%c0, %c0_0] : memref<1x1xf32, #tpu.memory_space<smem>>
    %c0_1 = arith.constant 0 : index
    %c0_2 = arith.constant 0 : index
    %c0_3 = arith.constant 0 : index
    %1 = vector.load %arg6[%c0_1, %c0_2, %c0_3] : memref<1x1x32xf32, #tpu.memory_space<vmem>>, vector<1x1x32xf32>
    %2 = vector.shape_cast %1 : vector<1x1x32xf32> to vector<1x32xf32>
    %c0_4 = arith.constant 0 : index
    %c0_5 = arith.constant 0 : index
    %3 = vector.load %arg7[%c0_4, %c0_5] : memref<32x2xf32, #tpu.memory_space<vmem>>, vector<32x2xf32>
    %cst = arith.constant dense<0.000000e+00> : vector<1x2xf32>
    %4 = tpu.matmul %2, %3, %cst {dimension_numbers = #tpu.dot_dimension_numbers<[1], [0], [0], [1], [0, 0, 1, 1], [], []>} : vector<1x32xf32>, vector<32x2xf32>, vector<1x2xf32> -> vector<1x2xf32>
    %c0_6 = arith.constant 0 : index
    %c0_7 = arith.constant 0 : index
    %5 = vector.load %arg8[%c0_6, %c0_7] : memref<1x2xf32, #tpu.memory_space<vmem>>, vector<1x2xf32>
    %6 = arith.addf %4, %5 : vector<1x2xf32>
    %cst_8 = arith.constant 0.000000e+00 : f32
    %7 = vector.broadcast %cst_8 : f32 to vector<1x2xf32>
    %8 = arith.maximumf %6, %7 : vector<1x2xf32>
    %c0_9 = arith.constant 0 : index
    %c0_10 = arith.constant 0 : index
    %9 = vector.load %arg9[%c0_9, %c0_10] : memref<2x32xf32, #tpu.memory_space<vmem>>, vector<2x32xf32>
    %cst_11 = arith.constant dense<0.000000e+00> : vector<1x32xf32>
    %10 = tpu.matmul %8, %9, %cst_11 {dimension_numbers = #tpu.dot_dimension_numbers<[1], [0], [0], [1], [0, 0, 1, 1], [], []>} : vector<1x2xf32>, vector<2x32xf32>, vector<1x32xf32> -> vector<1x32xf32>
    %c0_12 = arith.constant 0 : index
    %c0_13 = arith.constant 0 : index
    %11 = vector.load %arg10[%c0_12, %c0_13] : memref<1x32xf32, #tpu.memory_space<vmem>>, vector<1x32xf32>
    %12 = arith.addf %10, %11 : vector<1x32xf32>
    %13 = arith.negf %12 : vector<1x32xf32>
    %14 = math.exp %13 : vector<1x32xf32>
    %cst_14 = arith.constant 1.000000e+00 : f32
    %15 = vector.broadcast %cst_14 : f32 to vector<1x32xf32>
    %16 = arith.addf %15, %14 : vector<1x32xf32>
    %17 = arith.divf %15, %16 : vector<1x32xf32>
    %18 = tpu.concatenate %17, %17, %17, %17 in 1 : vector<1x32xf32>, vector<1x32xf32>, vector<1x32xf32>, vector<1x32xf32> -> vector<1x128xf32>
    %c0_15 = arith.constant 0 : index
    %c0_16 = arith.constant 0 : index
    %c0_17 = arith.constant 0 : index
    %19 = vector.load %arg2[%c0_15, %c0_16, %c0_17] : memref<1x64x128xf32, #tpu.memory_space<vmem>>, vector<1x64x128xf32>
    %20 = vector.shape_cast %19 : vector<1x64x128xf32> to vector<64x128xf32>
    %c0_18 = arith.constant 0 : index
    %c0_19 = arith.constant 0 : index
    %21 = vector.load %arg4[%c0_18, %c0_19] : memref<1x128xf32, #tpu.memory_space<vmem>>, vector<1x128xf32>
    %22 = vector.broadcast %21 : vector<1x128xf32> to vector<64x128xf32>
    %23 = arith.mulf %20, %22 : vector<64x128xf32>
    %c0_20 = arith.constant 0 : index
    %c0_21 = arith.constant 0 : index
    %24 = vector.load %arg5[%c0_20, %c0_21] : memref<1x128xf32, #tpu.memory_space<vmem>>, vector<1x128xf32>
    %25 = vector.broadcast %24 : vector<1x128xf32> to vector<64x128xf32>
    %26 = arith.addf %23, %25 : vector<64x128xf32>
    %27 = vector.broadcast %18 : vector<1x128xf32> to vector<64x128xf32>
    %28 = arith.mulf %26, %27 : vector<64x128xf32>
    %c0_22 = arith.constant 0 : index
    %c0_23 = arith.constant 0 : index
    %c0_24 = arith.constant 0 : index
    %29 = vector.load %arg3[%c0_22, %c0_23, %c0_24] : memref<1x64x128xf32, #tpu.memory_space<vmem>>, vector<1x64x128xf32>
    %30 = vector.shape_cast %29 : vector<1x64x128xf32> to vector<64x128xf32>
    %31 = arith.addf %28, %30 : vector<64x128xf32>
    %cst_25 = arith.constant 0.000000e+00 : f32
    %32 = vector.broadcast %cst_25 : f32 to vector<64x128xf32>
    %33 = arith.cmpf oge, %31, %32 : vector<64x128xf32>
    %34 = vector.broadcast %0 : f32 to vector<64x128xf32>
    %35 = arith.mulf %34, %31 : vector<64x128xf32>
    %36 = arith.select %33, %31, %35 : vector<64x128xi1>, vector<64x128xf32>
    %c0_26 = arith.constant 0 : index
    %c0_27 = arith.constant 0 : index
    %c0_28 = arith.constant 0 : index
    %37 = vector.load %arg12[%c0_26, %c0_27, %c0_28] : memref<1x64x128xf32, #tpu.memory_space<vmem>>, vector<1x64x128xf32>
    %38 = vector.shape_cast %37 : vector<1x64x128xf32> to vector<64x128xf32>
    %39 = vector.shape_cast %36 : vector<64x128xf32> to vector<1x64x128xf32>
    tpu.vector_store %arg12[%c0_26, %c0_27, %c0_28], %39 {strides = array<i32>} : memref<1x64x128xf32, #tpu.memory_space<vmem>>, vector<1x64x128xf32>,
    return
  }
  func.func @transform_0(%arg0: i32, %arg1: i32) -> (i32, i32, i32) {
    %c0_i32 = arith.constant 0 : i32
    %c0_i32_0 = arith.constant 0 : i32
    return %arg0, %arg1, %c0_i32 : i32, i32, i32
  }
  func.func @transform_1(%arg0: i32, %arg1: i32) -> (i32, i32, i32) {
    %c0_i32 = arith.constant 0 : i32
    %c0_i32_0 = arith.constant 0 : i32
    return %arg0, %arg1, %c0_i32 : i32, i32, i32
  }
  func.func @transform_2(%arg0: i32, %arg1: i32) -> (i32, i32) {
    %c0_i32 = arith.constant 0 : i32
    %c0_i32_0 = arith.constant 0 : i32
    %c0_i32_1 = arith.constant 0 : i32
    return %c0_i32, %c0_i32_0 : i32, i32
  }
  func.func @transform_3(%arg0: i32, %arg1: i32) -> (i32, i32) {
    %c0_i32 = arith.constant 0 : i32
    %c0_i32_0 = arith.constant 0 : i32
    %c0_i32_1 = arith.constant 0 : i32
    return %c0_i32, %c0_i32_0 : i32, i32
  }
  func.func @transform_4(%arg0: i32, %arg1: i32) -> (i32, i32, i32) {
    %c0_i32 = arith.constant 0 : i32
    %c0_i32_0 = arith.constant 0 : i32
    %c0_i32_1 = arith.constant 0 : i32
    return %arg0, %c0_i32, %c0_i32_0 : i32, i32, i32
  }
  func.func @transform_5(%arg0: i32, %arg1: i32) -> (i32, i32) {
    %c0_i32 = arith.constant 0 : i32
    %c0_i32_0 = arith.constant 0 : i32
    %c0_i32_1 = arith.constant 0 : i32
    return %c0_i32, %c0_i32_0 : i32, i32
  }
  func.func @transform_6(%arg0: i32, %arg1: i32) -> (i32, i32) {
    %c0_i32 = arith.constant 0 : i32
    %c0_i32_0 = arith.constant 0 : i32
    %c0_i32_1 = arith.constant 0 : i32
    return %c0_i32, %c0_i32_0 : i32, i32
  }
  func.func @transform_7(%arg0: i32, %arg1: i32) -> (i32, i32) {
    %c0_i32 = arith.constant 0 : i32
    %c0_i32_0 = arith.constant 0 : i32
    %c0_i32_1 = arith.constant 0 : i32
    return %c0_i32, %c0_i32_0 : i32, i32
  }
  func.func @transform_8(%arg0: i32, %arg1: i32) -> (i32, i32) {
    %c0_i32 = arith.constant 0 : i32
    %c0_i32_0 = arith.constant 0 : i32
    %c0_i32_1 = arith.constant 0 : i32
    return %c0_i32, %c0_i32_0 : i32, i32
  }
  func.func @transform_9(%arg0: i32, %arg1: i32) -> (i32, i32) {
    %c0_i32 = arith.constant 0 : i32
    %c0_i32_0 = arith.constant 0 : i32
    %c0_i32_1 = arith.constant 0 : i32
    return %c0_i32, %c0_i32_0 : i32, i32
  }
  func.func @transform_10(%arg0: i32, %arg1: i32) -> (i32, i32, i32) {
    %c0_i32 = arith.constant 0 : i32
    %c0_i32_0 = arith.constant 0 : i32
    return %arg0, %arg1, %c0_i32 : i32, i32, i32
  }
}

</mosaic_0001>

<llo_original>
// kernel: tile.23
$region0: #{tile.23}
  #allocation0 [shape = 's32[1]{0}', space=sflag, size = 0x4, scoped, tag = 'scoped memory for tile.23']
  %s0 = inlined_call_operand.vmem [shape: f32[16], index: 0, kind: input, shape index: {}]
  %s1 = inlined_call_operand.vmem [shape: f32[8,16], index: 1, kind: output, shape index: {}]
  // Predicated region
  $region2: #{tile.23} parent=0 // pred_check
    _
  $region3: #{tile.23} parent=0 // pred_check_branch
    %3 = sbr.rel (0) target = $region5
  $region4: #{tile.23} parent=0 // pred_region
    _
  $region5: #{tile.23} parent=0 // pred_fallthru
    _
  %v4 = vld [vmem:[%s0] ss:$0 sm:$0xff]
  %5 = vst [vmem:[%s1] sm:$0xff] %v4

// kernel: tile.24
$region0: #{tile.24}
  %s0 = inlined_call_operand.vmem [shape: f32[8,16], index: 0, kind: input, shape index: {}]
  %s1 = inlined_call_operand.vmem [shape: f32[1,128], index: 1, kind: output, shape index: {}]
  $region1: #{tile.24} parent=0
    #allocation0 [shape = 'u8[4096]{0}', space=vmem, size = 0x1000, scoped, tag = 'scoped mem for output reshape']
    %v2 = vld [vmem:[%s0] sm:$0x1]
    %vm3 = vcmask 130048
    %4 = vst.msk [vmem:[#allocation0] sm:$0x1] %vm3, %v2
    %s5 = scalar_lea.vmem %s0, 7
    %v6 = vld [vmem:[%s5] sm:$0x1]
    %7 = vrot.lane.b32.xlu0 %v6, 112
    %v8 = vpop.permute.xlu0 %7
    %vm9 = vcmask 1048448
    %10 = vst.msk [vmem:[#allocation0] sm:$0x1] %vm9, %v8
    %s11 = scalar_lea.vmem %s0, 6
    %v12 = vld [vmem:[%s11] sm:$0x1]
    %13 = vrot.lane.b32.xlu0 %v12, 96
    %v14 = vpop.permute.xlu0 %13
    %vm15 = vcmask 917248
    %16 = vst.msk [vmem:[#allocation0] sm:$0x1] %vm15, %v14
    %s17 = scalar_lea.vmem %s0, 5
    %v18 = vld [vmem:[%s17] sm:$0x1]
    %19 = vrot.lane.b32.xlu0 %v18, 80
    %v20 = vpop.permute.xlu0 %19
    %vm21 = vcmask 786048
    %22 = vst.msk [vmem:[#allocation0] sm:$0x1] %vm21, %v20
    %s23 = scalar_lea.vmem %s0, 4
    %v24 = vld [vmem:[%s23] sm:$0x1]
    %25 = vrot.lane.b32.xlu0 %v24, 64
    %v26 = vpop.permute.xlu0 %25
    %vm27 = vcmask 654848
    %28 = vst.msk [vmem:[#allocation0] sm:$0x1] %vm27, %v26
    %s29 = scalar_lea.vmem %s0, 3
    %v30 = vld [vmem:[%s29] sm:$0x1]
    %31 = vrot.lane.b32.xlu0 %v30, 48
    %v32 = vpop.permute.xlu0 %31
    %vm33 = vcmask 523648
    %34 = vst.msk [vmem:[#allocation0] sm:$0x1] %vm33, %v32
    %s35 = scalar_lea.vmem %s0, 2
    %v36 = vld [vmem:[%s35] sm:$0x1]
    %37 = vrot.lane.b32.xlu0 %v36, 32
    %v38 = vpop.permute.xlu0 %37
    %vm39 = vcmask 392448
    %40 = vst.msk [vmem:[#allocation0] sm:$0x1] %vm39, %v38
    %s41 = scalar_lea.vmem %s0, 1
    %v42 = vld [vmem:[%s41] sm:$0x1]
    %43 = vrot.lane.b32.xlu0 %v42, 16
    %v44 = vpop.permute.xlu0 %43
    %vm45 = vcmask 261248
    %46 = vst.msk [vmem:[#allocation0] sm:$0x1] %vm45, %v44
    %s48 = ssub.s32 2, 1
    %v49 = vld [vmem:[#allocation0] sm:%s48]
    %s51 = ssub.s32 2, 1
    %52 = vst [vmem:[%s1] sm:%s51] %v49

// kernel: senet_dilated_bottleneck.6
$region0: #{senet_dilated_bottleneck.6}
  #allocation0 [shape = 'u32[]', space=smem, size = 0x4, offset = 0x4, fixed_abs, tag = 'smem constant byte address 0x4 - core index']
  #allocation1 [shape = 'u32[72,128]{1,0:T(1,128)}', space=vmem, size = 0x9000, scoped, tag = 'internal scratch']
  #allocation2 [shape = 'f32[1,1]{1,0:T(1,128)S(6)}', space=smem, size = 0x200, scoped, tag = 'scoped memory for senet_dilated_bottleneck.6']
  %s0 = inlined_call_operand.vmem [shape: bf16[128,128], index: 0, kind: input, shape index: {}]
  %s1 = inlined_call_operand.vmem [shape: f32[1,128], index: 1, kind: input, shape index: {}]
  %s2 = inlined_call_operand.vmem [shape: f32[1,128], index: 2, kind: input, shape index: {}]
  %s3 = inlined_call_operand.<no memory space> [shape: f32[1,1], index: 3, kind: input, shape index: {}]
  %s4 = inlined_call_operand.vmem [shape: bf16[128,128], index: 4, kind: output, shape index: {}]
  %s5 = sld [smem:[#allocation0]]
  $region49: #{senet_dilated_bottleneck.6} parent=0
    _
  %s7 = ssub.s32 1, %s5
  %s8 = scalar_select 0, %s7, %s5
  %9 = sst [smem:[#allocation2]] %s3
  loop: start=0, step=1, limit=4
  $region2: #{senet_dilated_bottleneck.6} parent=0 // loop_pre_header
    _
  $region3: #{senet_dilated_bottleneck.6} parent=0 // loop_header
    %s11 = sphi 0, %s15
    %p12 = scmp.ge.s32.totalorder %s11, 4
    %s21 = sphi 0, %s23
    %s24 = sphi 0, %s21
    %s25 = sphi 0, %s24
    %s41 = sphi 0, %s25
    %s45 = sphi 0, %s45
    %s47 = sphi 0, %s45
    %s48 = sphi 0, %s47
    %s62 = sphi 0, %s48
    %s66 = sphi 0, %s66
    %s68 = sphi 0, %s66
    %s69 = sphi 0, %s68
    %s83 = sphi 0, %s69
    %s87 = sphi 0, %s87
    %s89 = sphi 0, %s87
    %s90 = sphi 0, %s89
    %s104 = sphi 0, %s90
    %s110 = sphi 0, %s112
    %s113 = sphi 0, %s110
    %s114 = sphi 0, %s113
    %s130 = sphi 0, %s114
  $region4: #{senet_dilated_bottleneck.6} parent=0 // loop_header_branch
    %14 = sbr.rel (%p12) target = $region8
  $region5: #{senet_dilated_bottleneck.6} parent=0 // loop_body
    %s16 = ssub.s32 %s11, 1
    %s17 = ssub.s32 %s11, 2
    %s18 = sadd.s32 %s11, 1
    %s19 = ssub.s32 %s11, %s18
    %p20 = scmp.eq.s32.totalorder %s19, 0
    %s22 = sadd.s32 %s21, 1
    %s23 = scalar_select %p20, %s21, %s22
    %p26 = pneg %p20
    %p27 = scmp.eq.s32.totalorder %s11, 1
    %p28 = por %p26, %p27
    %p29 = scmp.ne.s32.totalorder %s21, %s24
    %p30 = scmp.eq.s32.totalorder %s11, 0
    %p31 = por %p29, %p30
    %p32 = scmp.ne.s32.totalorder %s21, %s24
    %p33 = scmp.eq.s32.totalorder %s16, 1
    %p34 = por %p32, %p33
    %p35 = scmp.ne.s32.totalorder %s24, %s25
    %p36 = scmp.eq.s32.totalorder %s16, 0
    %p37 = por %p35, %p36
    %p38 = scmp.ne.s32.totalorder %s24, %s25
    %p39 = scmp.eq.s32.totalorder %s17, 1
    %p40 = por %p38, %p39
    %p42 = scmp.ne.s32.totalorder %s25, %s41
    %p43 = scmp.eq.s32.totalorder %s17, 0
    %p44 = por %p42, %p43
    %s46 = sadd.s32 %s45, 1
    %p49 = scmp.eq.s32.totalorder %s11, 1
    %p50 = scmp.ne.s32.totalorder %s45, %s47
    %p51 = scmp.eq.s32.totalorder %s11, 0
    %p52 = por %p50, %p51
    %p53 = scmp.ne.s32.totalorder %s45, %s47
    %p54 = scmp.eq.s32.totalorder %s16, 1
    %p55 = por %p53, %p54
    %p56 = scmp.ne.s32.totalorder %s47, %s48
    %p57 = scmp.eq.s32.totalorder %s16, 0
    %p58 = por %p56, %p57
    %p59 = scmp.ne.s32.totalorder %s47, %s48
    %p60 = scmp.eq.s32.totalorder %s17, 1
    %p61 = por %p59, %p60
    %p63 = scmp.ne.s32.totalorder %s48, %s62
    %p64 = scmp.eq.s32.totalorder %s17, 0
    %p65 = por %p63, %p64
    %s67 = sadd.s32 %s66, 1
    %p70 = scmp.eq.s32.totalorder %s11, 1
    %p71 = scmp.ne.s32.totalorder %s66, %s68
    %p72 = scmp.eq.s32.totalorder %s11, 0
    %p73 = por %p71, %p72
    %p74 = scmp.ne.s32.totalorder %s66, %s68
    %p75 = scmp.eq.s32.totalorder %s16, 1
    %p76 = por %p74, %p75
    %p77 = scmp.ne.s32.totalorder %s68, %s69
    %p78 = scmp.eq.s32.totalorder %s16, 0
    %p79 = por %p77, %p78
    %p80 = scmp.ne.s32.totalorder %s68, %s69
    %p81 = scmp.eq.s32.totalorder %s17, 1
    %p82 = por %p80, %p81
    %p84 = scmp.ne.s32.totalorder %s69, %s83
    %p85 = scmp.eq.s32.totalorder %s17, 0
    %p86 = por %p84, %p85
    %s88 = sadd.s32 %s87, 1
    %p91 = scmp.eq.s32.totalorder %s11, 1
    %p92 = scmp.ne.s32.totalorder %s87, %s89
    %p93 = scmp.eq.s32.totalorder %s11, 0
    %p94 = por %p92, %p93
    %p95 = scmp.ne.s32.totalorder %s87, %s89
    %p96 = scmp.eq.s32.totalorder %s16, 1
    %p97 = por %p95, %p96
    %p98 = scmp.ne.s32.totalorder %s89, %s90
    %p99 = scmp.eq.s32.totalorder %s16, 0
    %p100 = por %p98, %p99
    %p101 = scmp.ne.s32.totalorder %s89, %s90
    %p102 = scmp.eq.s32.totalorder %s17, 1
    %p103 = por %p101, %p102
    %p105 = scmp.ne.s32.totalorder %s90, %s104
    %p106 = scmp.eq.s32.totalorder %s17, 0
    %p107 = por %p105, %p106
    %s108 = ssub.s32 %s11, %s18
    %p109 = scmp.eq.s32.totalorder %s108, 0
    %s111 = sadd.s32 %s110, 1
    %s112 = scalar_select %p109, %s110, %s111
    %p115 = pneg %p109
    %p116 = scmp.eq.s32.totalorder %s11, 1
    %p117 = por %p115, %p116
    %p118 = scmp.ne.s32.totalorder %s110, %s113
    %p119 = scmp.eq.s32.totalorder %s11, 0
    %p120 = por %p118, %p119
    %p121 = scmp.ne.s32.totalorder %s110, %s113
    %p122 = scmp.eq.s32.totalorder %s16, 1
    %p123 = por %p121, %p122
    %p124 = scmp.ne.s32.totalorder %s113, %s114
    %p125 = scmp.eq.s32.totalorder %s16, 0
    %p126 = por %p124, %p125
    %p127 = scmp.ne.s32.totalorder %s113, %s114
    %p128 = scmp.eq.s32.totalorder %s17, 1
    %p129 = por %p127, %p128
    %p131 = scmp.ne.s32.totalorder %s114, %s130
    %p132 = scmp.eq.s32.totalorder %s17, 0
    %p133 = por %p131, %p132
    %p134 = scmp.le.s32.totalorder 1, %s11
    %p135 = scmp.lt.s32.totalorder %s11, 3
    %p136 = pnand %p134, %p135
    %p137 = pneg %p136
    // Predicated region
    $region9: #{senet_dilated_bottleneck.6} parent=5 // pred_check
      _
    $region10: #{senet_dilated_bottleneck.6} parent=5 // pred_check_branch
      %139 = sbr.rel (%p136) target = $region12
    $region11: #{senet_dilated_bottleneck.6} parent=5 // pred_region
      %s140 = ssub.s32 %s11, 1
      // Predicated region
      $region13: #{senet_dilated_bottleneck.6} parent=11 // pred_check
        %p141 = pneg %p58
      $region14: #{senet_dilated_bottleneck.6} parent=11 // pred_check_branch
        %143 = sbr.rel (%p141) target = $region16
      $region15: #{senet_dilated_bottleneck.6} parent=11 // pred_region
        _
      $region16: #{senet_dilated_bottleneck.6} parent=11 // pred_fallthru
        _
      // Predicated region
      $region17: #{senet_dilated_bottleneck.6} parent=11 // pred_check
        %p144 = pneg %p79
      $region18: #{senet_dilated_bottleneck.6} parent=11 // pred_check_branch
        %146 = sbr.rel (%p144) target = $region20
      $region19: #{senet_dilated_bottleneck.6} parent=11 // pred_region
        _
      $region20: #{senet_dilated_bottleneck.6} parent=11 // pred_fallthru
        _
      // Predicated region
      $region21: #{senet_dilated_bottleneck.6} parent=11 // pred_check
        %p147 = pneg %p100
      $region22: #{senet_dilated_bottleneck.6} parent=11 // pred_check_branch
        %149 = sbr.rel (%p147) target = $region24
      $region23: #{senet_dilated_bottleneck.6} parent=11 // pred_region
        _
      $region24: #{senet_dilated_bottleneck.6} parent=11 // pred_fallthru
        _
    $region12: #{senet_dilated_bottleneck.6} parent=5 // pred_fallthru
      _
    %p150 = scmp.lt.s32.totalorder %s11, 2
    // Predicated region
    $region25: #{senet_dilated_bottleneck.6} parent=5 // pred_check
      %p151 = pneg %p150
    $region26: #{senet_dilated_bottleneck.6} parent=5 // pred_check_branch
      %153 = sbr.rel (%p151) target = $region28
    $region27: #{senet_dilated_bottleneck.6} parent=5 // pred_region
      // Predicated region
      $region29: #{senet_dilated_bottleneck.6} parent=27 // pred_check
        %p154 = pneg %p31
      $region30: #{senet_dilated_bottleneck.6} parent=27 // pred_check_branch
        %156 = sbr.rel (%p154) target = $region32
      $region31: #{senet_dilated_bottleneck.6} parent=27 // pred_region
        %s157 = smul.u32 8, %s11
        %p158 = scmp.lt.s32.totalorder %s157, 15
        %s159 = scalar_select %p158, %s157, 15
        %s160 = smul.addr %s159, 4
        %s161 = scalar_lea.vmem %s0, %s160
        %s162 = smul.u32 8, %s11
      $region32: #{senet_dilated_bottleneck.6} parent=27 // pred_fallthru
        _
    $region28: #{senet_dilated_bottleneck.6} parent=5 // pred_fallthru
      _
    %p163 = scmp.le.s32.totalorder 1, %s11
    %p164 = scmp.lt.s32.totalorder %s11, 3
    %p165 = pnand %p163, %p164
    %p166 = pneg %p165
    // Predicated region
    $region33: #{senet_dilated_bottleneck.6} parent=5 // pred_check
      _
    $region34: #{senet_dilated_bottleneck.6} parent=5 // pred_check_branch
      %168 = sbr.rel (%p165) target = $region36
    $region35: #{senet_dilated_bottleneck.6} parent=5 // pred_region
      %s169 = ssub.s32 %s11, 1
      %s170 = smul.u32 8, %s16
      %p171 = scmp.lt.s32.totalorder %s170, 15
      %s172 = scalar_select %p171, %s170, 15
      %s173 = smul.addr %s172, 4
      %s174 = scalar_lea.vmem %s0, %s173
      %p175 = pneg %p37
      %p176 = pneg %p34
      %p177 = pneg %p58
      %p178 = pneg %p55
      %p179 = pneg %p79
      %p180 = pneg %p76
      %p181 = pneg %p100
      %p182 = pneg %p97
      %p183 = pneg %p126
      %p184 = pneg %p123
      %s185 = smul.u32 8, %s16
      %p186 = scmp.lt.s32.totalorder %s185, 15
      %s187 = scalar_select %p186, %s185, 15
      %s188 = smul.addr %s187, 4
      %s189 = scalar_lea.vmem %s4, %s188
      %s190 = smul.u32 8, %s16
      %p191 = scmp.lt.s32.totalorder %s190, 15
      %s192 = scalar_select %p191, %s190, 15
      %s193 = smul.addr %s192, 4
      %s194 = scalar_lea.vmem %s0, %s193
      %s195 = smul.u32 8, %s16
      %s196 = smul.u32 8, %s16
      %p197 = scmp.lt.s32.totalorder %s196, 15
      %s198 = scalar_select %p197, %s196, 15
      %s199 = smul.addr %s198, 4
      %s200 = scalar_lea.vmem %s4, %s199
      %s201 = smul.u32 8, %s16
      %s202 = sld [smem:[#allocation2]]
      %v203 = vld [vmem:[%s194] sm:$0xf]
      %v204 = vld [vmem:[%s194 + $0x4] sm:$0xf]
      %v205 = vld [vmem:[%s194 + $0x8] sm:$0xf]
      %v206 = vld [vmem:[%s194 + $0xc] sm:$0xf]
      %v207 = vld [vmem:[%s194 + $0x10] sm:$0xf]
      %v208 = vld [vmem:[%s194 + $0x14] sm:$0xf]
      %v209 = vld [vmem:[%s194 + $0x18] sm:$0xf]
      %v210 = vld [vmem:[%s194 + $0x1c] sm:$0xf]
      %v211 = vunpack.c.l.bf16 %v203
      %v212 = vunpack.c.l.bf16 %v204
      %v213 = vunpack.c.l.bf16 %v205
      %v214 = vunpack.c.l.bf16 %v206
      %v215 = vunpack.c.l.bf16 %v207
      %v216 = vunpack.c.l.bf16 %v208
      %v217 = vunpack.c.l.bf16 %v209
      %v218 = vunpack.c.l.bf16 %v210
      %v219 = vld [vmem:[%s1] sm:$0x1]
      %v221 = vperm.slane %v219, 0
      %v223 = vmul.f32 %v211, %v221
      %v224 = vmul.f32 %v212, %v221
      %v225 = vmul.f32 %v213, %v221
      %v226 = vmul.f32 %v214, %v221
      %v227 = vmul.f32 %v215, %v221
      %v228 = vmul.f32 %v216, %v221
      %v229 = vmul.f32 %v217, %v221
      %v230 = vmul.f32 %v218, %v221
      %v231 = vld [vmem:[%s2] sm:$0x1]
      %v233 = vperm.slane %v231, 0
      %v235 = vadd.f32 %v223, %v233
      %v236 = vadd.f32 %v224, %v233
      %v237 = vadd.f32 %v225, %v233
      %v238 = vadd.f32 %v226, %v233
      %v239 = vadd.f32 %v227, %v233
      %v240 = vadd.f32 %v228, %v233
      %v241 = vadd.f32 %v229, %v233
      %v242 = vadd.f32 %v230, %v233
      %vm243 = vcmp.ge.f32.partialorder %v235, 0.0
      %vm244 = vcmp.ge.f32.partialorder %v236, 0.0
      %vm245 = vcmp.ge.f32.partialorder %v237, 0.0
      %vm246 = vcmp.ge.f32.partialorder %v238, 0.0
      %vm247 = vcmp.ge.f32.partialorder %v239, 0.0
      %vm248 = vcmp.ge.f32.partialorder %v240, 0.0
      %vm249 = vcmp.ge.f32.partialorder %v241, 0.0
      %vm250 = vcmp.ge.f32.partialorder %v242, 0.0
      %v251 = vstv %s202
      %v252 = vmul.f32 %v251, %v235
      %v253 = vmul.f32 %v251, %v236
      %v254 = vmul.f32 %v251, %v237
      %v255 = vmul.f32 %v251, %v238
      %v256 = vmul.f32 %v251, %v239
      %v257 = vmul.f32 %v251, %v240
      %v258 = vmul.f32 %v251, %v241
      %v259 = vmul.f32 %v251, %v242
      %v260 = vsel %vm243, %v235, %v252
      %v261 = vsel %vm244, %v236, %v253
      %v262 = vsel %vm245, %v237, %v254
      %v263 = vsel %vm246, %v238, %v255
      %v264 = vsel %vm247, %v239, %v256
      %v265 = vsel %vm248, %v240, %v257
      %v266 = vsel %vm249, %v241, %v258
      %v267 = vsel %vm250, %v242, %v259
      %v268 = vpack.c.bf16 %v260, %v260
      %v269 = vpack.c.bf16 %v261, %v261
      %v270 = vpack.c.bf16 %v262, %v262
      %v271 = vpack.c.bf16 %v263, %v263
      %v272 = vpack.c.bf16 %v264, %v264
      %v273 = vpack.c.bf16 %v265, %v265
      %v274 = vpack.c.bf16 %v266, %v266
      %v275 = vpack.c.bf16 %v267, %v267
      %276 = vst [vmem:[%s200] sm:$0xf] %v268
      %277 = vst [vmem:[%s200 + $0x4] sm:$0xf] %v269
      %278 = vst [vmem:[%s200 + $0x8] sm:$0xf] %v270
      %279 = vst [vmem:[%s200 + $0xc] sm:$0xf] %v271
      %280 = vst [vmem:[%s200 + $0x10] sm:$0xf] %v272
      %281 = vst [vmem:[%s200 + $0x14] sm:$0xf] %v273
      %282 = vst [vmem:[%s200 + $0x18] sm:$0xf] %v274
      %283 = vst [vmem:[%s200 + $0x1c] sm:$0xf] %v275
      %s284 = smul.u32 8, %s16
      %p285 = scmp.lt.s32.totalorder %s284, 15
      %s286 = scalar_select %p285, %s284, 15
      %s287 = smul.addr %s286, 4
      %s288 = scalar_lea.vmem %s4, %s287
      // Predicated region
      $region37: #{senet_dilated_bottleneck.6} parent=35 // pred_check
        %p289 = pneg %p123
      $region38: #{senet_dilated_bottleneck.6} parent=35 // pred_check_branch
        %291 = sbr.rel (%p289) target = $region40
      $region39: #{senet_dilated_bottleneck.6} parent=35 // pred_region
        %s292 = smul.u32 8, %s16
      $region40: #{senet_dilated_bottleneck.6} parent=35 // pred_fallthru
        _
    $region36: #{senet_dilated_bottleneck.6} parent=5 // pred_fallthru
      _
    %p293 = scmp.le.s32.totalorder 2, %s11
    // Predicated region
    $region41: #{senet_dilated_bottleneck.6} parent=5 // pred_check
      %p294 = pneg %p293
    $region42: #{senet_dilated_bottleneck.6} parent=5 // pred_check_branch
      %296 = sbr.rel (%p294) target = $region44
    $region43: #{senet_dilated_bottleneck.6} parent=5 // pred_region
      %s297 = ssub.s32 %s11, 2
      // Predicated region
      $region45: #{senet_dilated_bottleneck.6} parent=43 // pred_check
        %p298 = pneg %p129
      $region46: #{senet_dilated_bottleneck.6} parent=43 // pred_check_branch
        %300 = sbr.rel (%p298) target = $region48
      $region47: #{senet_dilated_bottleneck.6} parent=43 // pred_region
        %s301 = smul.u32 8, %s17
        %p302 = scmp.lt.s32.totalorder %s301, 15
        %s303 = scalar_select %p302, %s301, 15
        %s304 = smul.addr %s303, 4
        %s305 = scalar_lea.vmem %s4, %s304
      $region48: #{senet_dilated_bottleneck.6} parent=43 // pred_fallthru
        _
    $region44: #{senet_dilated_bottleneck.6} parent=5 // pred_fallthru
      _
  $region6: #{senet_dilated_bottleneck.6} parent=0 // loop_footer
    %s15 = sadd.s32 1, %s11
  $region7: #{senet_dilated_bottleneck.6} parent=0 // loop_footer_branch
    %10 = sbr.rel target = $region3
  $region8: #{senet_dilated_bottleneck.6} parent=0 // loop_exit
    _

// kernel: senet_dilated_bottleneck.5
$region0: #{senet_dilated_bottleneck.5}
  #allocation0 [shape = 'u32[]', space=smem, size = 0x4, offset = 0x4, fixed_abs, tag = 'smem constant byte address 0x4 - core index']
  #allocation1 [shape = 'u32[72,128]{1,0:T(1,128)}', space=vmem, size = 0x9000, scoped, tag = 'internal scratch']
  %s0 = inlined_call_operand.hbm [shape: f32[1024,32], index: 0, kind: input, shape index: {}]
  %s1 = inlined_call_operand.vmem [shape: bf16[32,16], index: 1, kind: input, shape index: {}]
  %s2 = inlined_call_operand.vmem [shape: bf16[1024,16], index: 2, kind: output, shape index: {0}]
  %s3 = inlined_call_operand.vmem [shape: f32[2,1,16], index: 3, kind: output, shape index: {1}]
  %s4 = inlined_call_operand.vmem [shape: f32[2,1,16], index: 4, kind: output, shape index: {2}]
  %5 = xla_tuple %s2, %s3, %s4
  %s6 = sld [smem:[#allocation0]]
  $region61: #{senet_dilated_bottleneck.5} parent=0
    _
  %s8 = ssub.s32 1, %s6
  %s9 = scalar_select 0, %s8, %s6
  $region1: #{senet_dilated_bottleneck.5} parent=0
    #allocation2 [shape = 'u8[524288]{0}', space=vmem, size = 0x80000, scoped, tag = 'input window, operand 0']
    #allocation3 [shape = 's32[2]{0}', space=sflag, size = 0x8, scoped, tag = 'scoped memory for senet_dilated_bottleneck.5']
    %10 = vsyncpa [#allocation3], 0
    %s11 = scalar_lea.sflag [#allocation3], 1
    %12 = vsyncpa %s11, 0
    loop: start=0, step=1, limit=4
    $region2: #{senet_dilated_bottleneck.5} parent=1 // loop_pre_header
      _
    $region3: #{senet_dilated_bottleneck.5} parent=1 // loop_header
      %s14 = sphi 0, %s18
      %p15 = scmp.ge.s32.totalorder %s14, 4
      %s24 = sphi 0, %s26
      %s27 = sphi 0, %s24
      %s28 = sphi 0, %s27
      %s44 = sphi 0, %s28
      %s48 = sphi 0, %s48
      %s50 = sphi 0, %s48
      %s51 = sphi 0, %s50
      %s65 = sphi 0, %s51
      %s71 = sphi 0, %s73
      %s74 = sphi 0, %s71
      %s75 = sphi 0, %s74
      %s91 = sphi 0, %s75
      %s97 = sphi 0, %s99
      %s100 = sphi 0, %s97
      %s101 = sphi 0, %s100
      %s117 = sphi 0, %s101
      %s123 = sphi 0, %s125
      %s126 = sphi 0, %s123
      %s127 = sphi 0, %s126
      %s143 = sphi 0, %s127
    $region4: #{senet_dilated_bottleneck.5} parent=1 // loop_header_branch
      %17 = sbr.rel (%p15) target = $region8
    $region5: #{senet_dilated_bottleneck.5} parent=1 // loop_body
      %s19 = ssub.s32 %s14, 1
      %s20 = ssub.s32 %s14, 2
      %s21 = sadd.s32 %s14, 1
      %s22 = ssub.s32 %s14, %s21
      %p23 = scmp.eq.s32.totalorder %s22, 0
      %s25 = sadd.s32 %s24, 1
      %s26 = scalar_select %p23, %s24, %s25
      %p29 = pneg %p23
      %p30 = scmp.eq.s32.totalorder %s14, 1
      %p31 = por %p29, %p30
      %p32 = scmp.ne.s32.totalorder %s24, %s27
      %p33 = scmp.eq.s32.totalorder %s14, 0
      %p34 = por %p32, %p33
      %p35 = scmp.ne.s32.totalorder %s24, %s27
      %p36 = scmp.eq.s32.totalorder %s19, 1
      %p37 = por %p35, %p36
      %p38 = scmp.ne.s32.totalorder %s27, %s28
      %p39 = scmp.eq.s32.totalorder %s19, 0
      %p40 = por %p38, %p39
      %p41 = scmp.ne.s32.totalorder %s27, %s28
      %p42 = scmp.eq.s32.totalorder %s20, 1
      %p43 = por %p41, %p42
      %p45 = scmp.ne.s32.totalorder %s28, %s44
      %p46 = scmp.eq.s32.totalorder %s20, 0
      %p47 = por %p45, %p46
      %s49 = sadd.s32 %s48, 1
      %p52 = scmp.eq.s32.totalorder %s14, 1
      %p53 = scmp.ne.s32.totalorder %s48, %s50
      %p54 = scmp.eq.s32.totalorder %s14, 0
      %p55 = por %p53, %p54
      %p56 = scmp.ne.s32.totalorder %s48, %s50
      %p57 = scmp.eq.s32.totalorder %s19, 1
      %p58 = por %p56, %p57
      %p59 = scmp.ne.s32.totalorder %s50, %s51
      %p60 = scmp.eq.s32.totalorder %s19, 0
      %p61 = por %p59, %p60
      %p62 = scmp.ne.s32.totalorder %s50, %s51
      %p63 = scmp.eq.s32.totalorder %s20, 1
      %p64 = por %p62, %p63
      %p66 = scmp.ne.s32.totalorder %s51, %s65
      %p67 = scmp.eq.s32.totalorder %s20, 0
      %p68 = por %p66, %p67
      %s69 = ssub.s32 %s14, %s21
      %p70 = scmp.eq.s32.totalorder %s69, 0
      %s72 = sadd.s32 %s71, 1
      %s73 = scalar_select %p70, %s71, %s72
      %p76 = pneg %p70
      %p77 = scmp.eq.s32.totalorder %s14, 1
      %p78 = por %p76, %p77
      %p79 = scmp.ne.s32.totalorder %s71, %s74
      %p80 = scmp.eq.s32.totalorder %s14, 0
      %p81 = por %p79, %p80
      %p82 = scmp.ne.s32.totalorder %s71, %s74
      %p83 = scmp.eq.s32.totalorder %s19, 1
      %p84 = por %p82, %p83
      %p85 = scmp.ne.s32.totalorder %s74, %s75
      %p86 = scmp.eq.s32.totalorder %s19, 0
      %p87 = por %p85, %p86
      %p88 = scmp.ne.s32.totalorder %s74, %s75
      %p89 = scmp.eq.s32.totalorder %s20, 1
      %p90 = por %p88, %p89
      %p92 = scmp.ne.s32.totalorder %s75, %s91
      %p93 = scmp.eq.s32.totalorder %s20, 0
      %p94 = por %p92, %p93
      %s95 = ssub.s32 %s14, %s21
      %p96 = scmp.eq.s32.totalorder %s95, 0
      %s98 = sadd.s32 %s97, 1
      %s99 = scalar_select %p96, %s97, %s98
      %p102 = pneg %p96
      %p103 = scmp.eq.s32.totalorder %s14, 1
      %p104 = por %p102, %p103
      %p105 = scmp.ne.s32.totalorder %s97, %s100
      %p106 = scmp.eq.s32.totalorder %s14, 0
      %p107 = por %p105, %p106
      %p108 = scmp.ne.s32.totalorder %s97, %s100
      %p109 = scmp.eq.s32.totalorder %s19, 1
      %p110 = por %p108, %p109
      %p111 = scmp.ne.s32.totalorder %s100, %s101
      %p112 = scmp.eq.s32.totalorder %s19, 0
      %p113 = por %p111, %p112
      %p114 = scmp.ne.s32.totalorder %s100, %s101
      %p115 = scmp.eq.s32.totalorder %s20, 1
      %p116 = por %p114, %p115
      %p118 = scmp.ne.s32.totalorder %s101, %s117
      %p119 = scmp.eq.s32.totalorder %s20, 0
      %p120 = por %p118, %p119
      %s121 = ssub.s32 %s14, %s21
      %p122 = scmp.eq.s32.totalorder %s121, 0
      %s124 = sadd.s32 %s123, 1
      %s125 = scalar_select %p122, %s123, %s124
      %p128 = pneg %p122
      %p129 = scmp.eq.s32.totalorder %s14, 1
      %p130 = por %p128, %p129
      %p131 = scmp.ne.s32.totalorder %s123, %s126
      %p132 = scmp.eq.s32.totalorder %s14, 0
      %p133 = por %p131, %p132
      %p134 = scmp.ne.s32.totalorder %s123, %s126
      %p135 = scmp.eq.s32.totalorder %s19, 1
      %p136 = por %p134, %p135
      %p137 = scmp.ne.s32.totalorder %s126, %s127
      %p138 = scmp.eq.s32.totalorder %s19, 0
      %p139 = por %p137, %p138
      %p140 = scmp.ne.s32.totalorder %s126, %s127
      %p141 = scmp.eq.s32.totalorder %s20, 1
      %p142 = por %p140, %p141
      %p144 = scmp.ne.s32.totalorder %s127, %s143
      %p145 = scmp.eq.s32.totalorder %s20, 0
      %p146 = por %p144, %p145
      %p147 = scmp.le.s32.totalorder 1, %s14
      %p148 = scmp.lt.s32.totalorder %s14, 3
      %p149 = pnand %p147, %p148
      %p150 = pneg %p149
      // Predicated region
      $region9: #{senet_dilated_bottleneck.5} parent=5 // pred_check
        _
      $region10: #{senet_dilated_bottleneck.5} parent=5 // pred_check_branch
        %152 = sbr.rel (%p149) target = $region12
      $region11: #{senet_dilated_bottleneck.5} parent=5 // pred_region
        %s153 = ssub.s32 %s14, 1
        // Predicated region
        $region13: #{senet_dilated_bottleneck.5} parent=11 // pred_check
          %p154 = pneg %p61
        $region14: #{senet_dilated_bottleneck.5} parent=11 // pred_check_branch
          %156 = sbr.rel (%p154) target = $region16
        $region15: #{senet_dilated_bottleneck.5} parent=11 // pred_region
          _
        $region16: #{senet_dilated_bottleneck.5} parent=11 // pred_fallthru
          _
      $region12: #{senet_dilated_bottleneck.5} parent=5 // pred_fallthru
        _
      %p157 = scmp.lt.s32.totalorder %s14, 2
      // Predicated region
      $region17: #{senet_dilated_bottleneck.5} parent=5 // pred_check
        %p158 = pneg %p157
      $region18: #{senet_dilated_bottleneck.5} parent=5 // pred_check_branch
        %160 = sbr.rel (%p158) target = $region20
      $region19: #{senet_dilated_bottleneck.5} parent=5 // pred_region
        // Predicated region
        $region21: #{senet_dilated_bottleneck.5} parent=19 // pred_check
          %p161 = pneg %p34
        $region22: #{senet_dilated_bottleneck.5} parent=19 // pred_check_branch
          %163 = sbr.rel (%p161) target = $region24
        $region23: #{senet_dilated_bottleneck.5} parent=19 // pred_region
          %s164 = sand.u32 %s24, 1
          %s165 = scalar_lea.sflag [#allocation3], %s164
          %s166 = sand.u32 %s24, 1
          %s167 = smul.addr %s166, 512
          %s168 = scalar_lea.vmem [#allocation2], %s167
          %s169 = smul.u32 64, %s14
          %171 = vsyncadd %s165, 0
          %s172 = smul.addr %s169, 8
          %s173 = scalar_lea.hbm %s0, %s172
          %s174 = sshll.u32 %s173, 4
          %s175 = int_to_ptr.hbm [resolvable:$true] %s174
          %s176 = sshll.u32 %s168, 4
          %s177 = int_to_ptr.vmem [resolvable:$true] %s176
          %182 = dma.hbm_to_vmem [thread:$0]  %s175, 8192, %s177, %s165, 128, 128, 8
        $region24: #{senet_dilated_bottleneck.5} parent=19 // pred_fallthru
          _
      $region20: #{senet_dilated_bottleneck.5} parent=5 // pred_fallthru
        _
      %p183 = scmp.le.s32.totalorder 1, %s14
      %p184 = scmp.lt.s32.totalorder %s14, 3
      %p185 = pnand %p183, %p184
      %p186 = pneg %p185
      // Predicated region
      $region25: #{senet_dilated_bottleneck.5} parent=5 // pred_check
        _
      $region26: #{senet_dilated_bottleneck.5} parent=5 // pred_check_branch
        %188 = sbr.rel (%p185) target = $region28
      $region27: #{senet_dilated_bottleneck.5} parent=5 // pred_region
        %s189 = ssub.s32 %s14, 1
        %s190 = sand.u32 %s27, 1
        %s191 = scalar_lea.sflag [#allocation3], %s190
        %s192 = sand.u32 %s27, 1
        %s193 = smul.addr %s192, 512
        %s194 = scalar_lea.vmem [#allocation2], %s193
        // Predicated region
        $region29: #{senet_dilated_bottleneck.5} parent=27 // pred_check
          %p195 = pneg %p40
        $region30: #{senet_dilated_bottleneck.5} parent=27 // pred_check_branch
          %197 = sbr.rel (%p195) target = $region32
        $region31: #{senet_dilated_bottleneck.5} parent=27 // pred_region
          %199 = dma.done %s191, 8192
        $region32: #{senet_dilated_bottleneck.5} parent=27 // pred_fallthru
          _
        %s200 = sand.u32 %s27, 1
        %s201 = scalar_lea.sflag [#allocation3], %s200
        %s202 = sand.u32 %s27, 1
        %s203 = smul.addr %s202, 512
        %s204 = scalar_lea.vmem [#allocation2], %s203
        %p205 = pneg %p40
        %p206 = pneg %p37
        %p207 = pneg %p61
        %p208 = pneg %p58
        %p209 = pneg %p87
        %p210 = pneg %p84
        %s211 = smul.u32 64, %s19
        %p212 = scmp.lt.s32.totalorder %s211, 127
        %s213 = scalar_select %p212, %s211, 127
        %s214 = smul.addr %s213, 4
        %s215 = scalar_lea.vmem %s2, %s214
        %p216 = pneg %p113
        %p217 = pneg %p110
        %p218 = scmp.lt.s32.totalorder %s19, 1
        %s219 = scalar_select %p218, %s19, 1
        %s220 = scalar_lea.vmem %s3, %s219
        %p221 = pneg %p139
        %p222 = pneg %p136
        %p223 = scmp.lt.s32.totalorder %s19, 1
        %s224 = scalar_select %p223, %s19, 1
        %s225 = scalar_lea.vmem %s4, %s224
        %s226 = smul.u32 64, %s19
        %s227 = smul.u32 64, %s19
        %p228 = scmp.lt.s32.totalorder %s227, 127
        %s229 = scalar_select %p228, %s227, 127
        %s230 = smul.addr %s229, 4
        %s231 = scalar_lea.vmem %s2, %s230
        %s232 = smul.u32 64, %s19
        %p233 = scmp.lt.s32.totalorder %s19, 1
        %s234 = scalar_select %p233, %s19, 1
        %s235 = scalar_lea.vmem %s3, %s234
        %p236 = scmp.lt.s32.totalorder %s19, 1
        %s237 = scalar_select %p236, %s19, 1
        %s238 = scalar_lea.vmem %s4, %s237
        %v240 = vld [vmem:[%s194] sm:$0xff]
        %v241 = vld [vmem:[%s194 + $0x8] sm:$0xff]
        %v242 = vld [vmem:[%s194 + $0x10] sm:$0xff]
        %v243 = vld [vmem:[%s194 + $0x18] sm:$0xff]
        %v244 = vld [vmem:[%s194 + $0x20] sm:$0xff]
        %v245 = vld [vmem:[%s194 + $0x28] sm:$0xff]
        %v246 = vld [vmem:[%s194 + $0x30] sm:$0xff]
        %v247 = vld [vmem:[%s194 + $0x38] sm:$0xff]
        %v248 = vld [vmem:[%s194 + $0x40] sm:$0xff]
        %v249 = vld [vmem:[%s194 + $0x48] sm:$0xff]
        %v250 = vld [vmem:[%s194 + $0x50] sm:$0xff]
        %v251 = vld [vmem:[%s194 + $0x58] sm:$0xff]
        %v252 = vld [vmem:[%s194 + $0x60] sm:$0xff]
        %v253 = vld [vmem:[%s194 + $0x68] sm:$0xff]
        %v254 = vld [vmem:[%s194 + $0x70] sm:$0xff]
        %v255 = vld [vmem:[%s194 + $0x78] sm:$0xff]
        %v256 = vld [vmem:[%s194 + $0x80] sm:$0xff]
        %v257 = vld [vmem:[%s194 + $0x88] sm:$0xff]
        %v258 = vld [vmem:[%s194 + $0x90] sm:$0xff]
        %v259 = vld [vmem:[%s194 + $0x98] sm:$0xff]
        %v260 = vld [vmem:[%s194 + $0xa0] sm:$0xff]
        %v261 = vld [vmem:[%s194 + $0xa8] sm:$0xff]
        %v262 = vld [vmem:[%s194 + $0xb0] sm:$0xff]
        %v263 = vld [vmem:[%s194 + $0xb8] sm:$0xff]
        %v264 = vld [vmem:[%s194 + $0xc0] sm:$0xff]
        %v265 = vld [vmem:[%s194 + $0xc8] sm:$0xff]
        %v266 = vld [vmem:[%s194 + $0xd0] sm:$0xff]
        %v267 = vld [vmem:[%s194 + $0xd8] sm:$0xff]
        %v268 = vld [vmem:[%s194 + $0xe0] sm:$0xff]
        %v269 = vld [vmem:[%s194 + $0xe8] sm:$0xff]
        %v270 = vld [vmem:[%s194 + $0xf0] sm:$0xff]
        %v271 = vld [vmem:[%s194 + $0xf8] sm:$0xff]
        %v272 = vld [vmem:[%s194 + $0x100] sm:$0xff]
        %v273 = vld [vmem:[%s194 + $0x108] sm:$0xff]
        %v274 = vld [vmem:[%s194 + $0x110] sm:$0xff]
        %v275 = vld [vmem:[%s194 + $0x118] sm:$0xff]
        %v276 = vld [vmem:[%s194 + $0x120] sm:$0xff]
        %v277 = vld [vmem:[%s194 + $0x128] sm:$0xff]
        %v278 = vld [vmem:[%s194 + $0x130] sm:$0xff]
        %v279 = vld [vmem:[%s194 + $0x138] sm:$0xff]
        %v280 = vld [vmem:[%s194 + $0x140] sm:$0xff]
        %v281 = vld [vmem:[%s194 + $0x148] sm:$0xff]
        %v282 = vld [vmem:[%s194 + $0x150] sm:$0xff]
        %v283 = vld [vmem:[%s194 + $0x158] sm:$0xff]
        %v284 = vld [vmem:[%s194 + $0x160] sm:$0xff]
        %v285 = vld [vmem:[%s194 + $0x168] sm:$0xff]
        %v286 = vld [vmem:[%s194 + $0x170] sm:$0xff]
        %v287 = vld [vmem:[%s194 + $0x178] sm:$0xff]
        %v288 = vld [vmem:[%s194 + $0x180] sm:$0xff]
        %v289 = vld [vmem:[%s194 + $0x188] sm:$0xff]
        %v290 = vld [vmem:[%s194 + $0x190] sm:$0xff]
        %v291 = vld [vmem:[%s194 + $0x198] sm:$0xff]
        %v292 = vld [vmem:[%s194 + $0x1a0] sm:$0xff]
        %v293 = vld [vmem:[%s194 + $0x1a8] sm:$0xff]
        %v294 = vld [vmem:[%s194 + $0x1b0] sm:$0xff]
        %v295 = vld [vmem:[%s194 + $0x1b8] sm:$0xff]
        %v296 = vld [vmem:[%s194 + $0x1c0] sm:$0xff]
        %v297 = vld [vmem:[%s194 + $0x1c8] sm:$0xff]
        %v298 = vld [vmem:[%s194 + $0x1d0] sm:$0xff]
        %v299 = vld [vmem:[%s194 + $0x1d8] sm:$0xff]
        %v300 = vld [vmem:[%s194 + $0x1e0] sm:$0xff]
        %v301 = vld [vmem:[%s194 + $0x1e8] sm:$0xff]
        %v302 = vld [vmem:[%s194 + $0x1f0] sm:$0xff]
        %v303 = vld [vmem:[%s194 + $0x1f8] sm:$0xff]
        %v304 = vpack.c.bf16 %v241, %v240
        %v305 = vpack.c.bf16 %v243, %v242
        %v306 = vpack.c.bf16 %v245, %v244
        %v307 = vpack.c.bf16 %v247, %v246
        %v308 = vpack.c.bf16 %v249, %v248
        %v309 = vpack.c.bf16 %v251, %v250
        %v310 = vpack.c.bf16 %v253, %v252
        %v311 = vpack.c.bf16 %v255, %v254
        %v312 = vpack.c.bf16 %v257, %v256
        %v313 = vpack.c.bf16 %v259, %v258
        %v314 = vpack.c.bf16 %v261, %v260
        %v315 = vpack.c.bf16 %v263, %v262
        %v316 = vpack.c.bf16 %v265, %v264
        %v317 = vpack.c.bf16 %v267, %v266
        %v318 = vpack.c.bf16 %v269, %v268
        %v319 = vpack.c.bf16 %v271, %v270
        %v320 = vpack.c.bf16 %v273, %v272
        %v321 = vpack.c.bf16 %v275, %v274
        %v322 = vpack.c.bf16 %v277, %v276
        %v323 = vpack.c.bf16 %v279, %v278
        %v324 = vpack.c.bf16 %v281, %v280
        %v325 = vpack.c.bf16 %v283, %v282
        %v326 = vpack.c.bf16 %v285, %v284
        %v327 = vpack.c.bf16 %v287, %v286
        %v328 = vpack.c.bf16 %v289, %v288
        %v329 = vpack.c.bf16 %v291, %v290
        %v330 = vpack.c.bf16 %v293, %v292
        %v331 = vpack.c.bf16 %v295, %v294
        %v332 = vpack.c.bf16 %v297, %v296
        %v333 = vpack.c.bf16 %v299, %v298
        %v334 = vpack.c.bf16 %v301, %v300
        %v335 = vpack.c.bf16 %v303, %v302
        %v336 = vld [vmem:[%s1] sm:$0xf]
        %v337 = vld [vmem:[%s1 + $0x4] sm:$0xf]
        %v338 = vld [vmem:[%s1 + $0x8] sm:$0xf]
        %v339 = vld [vmem:[%s1 + $0xc] sm:$0xf]
        %v344 = vunpack.c.l.b16 %v336
        %v345 = vunpack.c.l.b16 %v337
        %v346 = vunpack.c.l.b16 %v338
        %v347 = vunpack.c.l.b16 %v339
        %v348 = vpack.c.b16 %v345, %v344
        %v349 = vpack.c.b16 %v347, %v346
        %vm352 = vcmask 261120
        %v354 = vsel %vm352, %v304, 0
        %v357 = vsel %vm352, %v305, 0
        %v360 = vsel %vm352, %v306, 0
        %v363 = vsel %vm352, %v307, 0
        %v366 = vsel %vm352, %v308, 0
        %v369 = vsel %vm352, %v309, 0
        %v372 = vsel %vm352, %v310, 0
        %v375 = vsel %vm352, %v311, 0
        %v378 = vsel %vm352, %v312, 0
        %v381 = vsel %vm352, %v313, 0
        %v384 = vsel %vm352, %v314, 0
        %v387 = vsel %vm352, %v315, 0
        %v390 = vsel %vm352, %v316, 0
        %v393 = vsel %vm352, %v317, 0
        %v396 = vsel %vm352, %v318, 0
        %v399 = vsel %vm352, %v319, 0
        %v402 = vsel %vm352, %v320, 0
        %v405 = vsel %vm352, %v321, 0
        %v408 = vsel %vm352, %v322, 0
        %v411 = vsel %vm352, %v323, 0
        %v414 = vsel %vm352, %v324, 0
        %v417 = vsel %vm352, %v325, 0
        %v420 = vsel %vm352, %v326, 0
        %v423 = vsel %vm352, %v327, 0
        %v426 = vsel %vm352, %v328, 0
        %v429 = vsel %vm352, %v329, 0
        %v432 = vsel %vm352, %v330, 0
        %v435 = vsel %vm352, %v331, 0
        %v438 = vsel %vm352, %v332, 0
        %v441 = vsel %vm352, %v333, 0
        %v444 = vsel %vm352, %v334, 0
        %v447 = vsel %vm352, %v335, 0
        %449 = vmatpush.bf16.msra.mxu0 0
        %450 = vmatpush.bf16.msra.mxu0 0
        %451 = vmatpush.bf16.msra.mxu0 0
        %452 = vmatpush.bf16.msra.mxu0 0
        %453 = vmatpush.bf16.msra.mxu0 0
        %454 = vmatpush.bf16.msra.mxu0 0
        %455 = vmatpush.bf16.msra.mxu0 %v349
        %456 = vmatpush.bf16.msra.mxu0 %v348
        %457 = vmatmul.bf16.gmra.mxu0 %v354
        %v458 = vpop.f32.mrf.mxu0
        %v459 = vadd.f32 0.0, %v458
        %v460 = vpop.f32.mrf.mxu0
        %v461 = vadd.f32 0.0, %v460
        %462 = vmatmul.bf16.gmra.mxu0 %v357
        %v463 = vpop.f32.mrf.mxu0
        %v464 = vadd.f32 0.0, %v463
        %v465 = vpop.f32.mrf.mxu0
        %v466 = vadd.f32 0.0, %v465
        %467 = vmatmul.bf16.gmra.mxu0 %v360
        %v468 = vpop.f32.mrf.mxu0
        %v469 = vadd.f32 0.0, %v468
        %v470 = vpop.f32.mrf.mxu0
        %v471 = vadd.f32 0.0, %v470
        %472 = vmatmul.bf16.gmra.mxu0 %v363
        %v473 = vpop.f32.mrf.mxu0
        %v474 = vadd.f32 0.0, %v473
        %v475 = vpop.f32.mrf.mxu0
        %v476 = vadd.f32 0.0, %v475
        %477 = vmatmul.bf16.gmra.mxu0 %v366
        %v478 = vpop.f32.mrf.mxu0
        %v479 = vadd.f32 0.0, %v478
        %v480 = vpop.f32.mrf.mxu0
        %v481 = vadd.f32 0.0, %v480
        %482 = vmatmul.bf16.gmra.mxu0 %v369
        %v483 = vpop.f32.mrf.mxu0
        %v484 = vadd.f32 0.0, %v483
        %v485 = vpop.f32.mrf.mxu0
        %v486 = vadd.f32 0.0, %v485
        %487 = vmatmul.bf16.gmra.mxu0 %v372
        %v488 = vpop.f32.mrf.mxu0
        %v489 = vadd.f32 0.0, %v488
        %v490 = vpop.f32.mrf.mxu0
        %v491 = vadd.f32 0.0, %v490
        %492 = vmatmul.bf16.gmra.mxu0 %v375
        %v493 = vpop.f32.mrf.mxu0
        %v494 = vadd.f32 0.0, %v493
        %v495 = vpop.f32.mrf.mxu0
        %v496 = vadd.f32 0.0, %v495
        %497 = vmatmul.bf16.gmra.mxu0 %v378
        %v498 = vpop.f32.mrf.mxu0
        %v499 = vadd.f32 0.0, %v498
        %v500 = vpop.f32.mrf.mxu0
        %v501 = vadd.f32 0.0, %v500
        %502 = vmatmul.bf16.gmra.mxu0 %v381
        %v503 = vpop.f32.mrf.mxu0
        %v504 = vadd.f32 0.0, %v503
        %v505 = vpop.f32.mrf.mxu0
        %v506 = vadd.f32 0.0, %v505
        %507 = vmatmul.bf16.gmra.mxu0 %v384
        %v508 = vpop.f32.mrf.mxu0
        %v509 = vadd.f32 0.0, %v508
        %v510 = vpop.f32.mrf.mxu0
        %v511 = vadd.f32 0.0, %v510
        %512 = vmatmul.bf16.gmra.mxu0 %v387
        %v513 = vpop.f32.mrf.mxu0
        %v514 = vadd.f32 0.0, %v513
        %v515 = vpop.f32.mrf.mxu0
        %v516 = vadd.f32 0.0, %v515
        %517 = vmatmul.bf16.gmra.mxu0 %v390
        %v518 = vpop.f32.mrf.mxu0
        %v519 = vadd.f32 0.0, %v518
        %v520 = vpop.f32.mrf.mxu0
        %v521 = vadd.f32 0.0, %v520
        %522 = vmatmul.bf16.gmra.mxu0 %v393
        %v523 = vpop.f32.mrf.mxu0
        %v524 = vadd.f32 0.0, %v523
        %v525 = vpop.f32.mrf.mxu0
        %v526 = vadd.f32 0.0, %v525
        %527 = vmatmul.bf16.gmra.mxu0 %v396
        %v528 = vpop.f32.mrf.mxu0
        %v529 = vadd.f32 0.0, %v528
        %v530 = vpop.f32.mrf.mxu0
        %v531 = vadd.f32 0.0, %v530
        %532 = vmatmul.bf16.gmra.mxu0 %v399
        %v533 = vpop.f32.mrf.mxu0
        %v534 = vadd.f32 0.0, %v533
        %v535 = vpop.f32.mrf.mxu0
        %v536 = vadd.f32 0.0, %v535
        %537 = vmatmul.bf16.gmra.mxu0 %v402
        %v538 = vpop.f32.mrf.mxu0
        %v539 = vadd.f32 0.0, %v538
        %v540 = vpop.f32.mrf.mxu0
        %v541 = vadd.f32 0.0, %v540
        %542 = vmatmul.bf16.gmra.mxu0 %v405
        %v543 = vpop.f32.mrf.mxu0
        %v544 = vadd.f32 0.0, %v543
        %v545 = vpop.f32.mrf.mxu0
        %v546 = vadd.f32 0.0, %v545
        %547 = vmatmul.bf16.gmra.mxu0 %v408
        %v548 = vpop.f32.mrf.mxu0
        %v549 = vadd.f32 0.0, %v548
        %v550 = vpop.f32.mrf.mxu0
        %v551 = vadd.f32 0.0, %v550
        %552 = vmatmul.bf16.gmra.mxu0 %v411
        %v553 = vpop.f32.mrf.mxu0
        %v554 = vadd.f32 0.0, %v553
        %v555 = vpop.f32.mrf.mxu0
        %v556 = vadd.f32 0.0, %v555
        %557 = vmatmul.bf16.gmra.mxu0 %v414
        %v558 = vpop.f32.mrf.mxu0
        %v559 = vadd.f32 0.0, %v558
        %v560 = vpop.f32.mrf.mxu0
        %v561 = vadd.f32 0.0, %v560
        %562 = vmatmul.bf16.gmra.mxu0 %v417
        %v563 = vpop.f32.mrf.mxu0
        %v564 = vadd.f32 0.0, %v563
        %v565 = vpop.f32.mrf.mxu0
        %v566 = vadd.f32 0.0, %v565
        %567 = vmatmul.bf16.gmra.mxu0 %v420
        %v568 = vpop.f32.mrf.mxu0
        %v569 = vadd.f32 0.0, %v568
        %v570 = vpop.f32.mrf.mxu0
        %v571 = vadd.f32 0.0, %v570
        %572 = vmatmul.bf16.gmra.mxu0 %v423
        %v573 = vpop.f32.mrf.mxu0
        %v574 = vadd.f32 0.0, %v573
        %v575 = vpop.f32.mrf.mxu0
        %v576 = vadd.f32 0.0, %v575
        %577 = vmatmul.bf16.gmra.mxu0 %v426
        %v578 = vpop.f32.mrf.mxu0
        %v579 = vadd.f32 0.0, %v578
        %v580 = vpop.f32.mrf.mxu0
        %v581 = vadd.f32 0.0, %v580
        %582 = vmatmul.bf16.gmra.mxu0 %v429
        %v583 = vpop.f32.mrf.mxu0
        %v584 = vadd.f32 0.0, %v583
        %v585 = vpop.f32.mrf.mxu0
        %v586 = vadd.f32 0.0, %v585
        %587 = vmatmul.bf16.gmra.mxu0 %v432
        %v588 = vpop.f32.mrf.mxu0
        %v589 = vadd.f32 0.0, %v588
        %v590 = vpop.f32.mrf.mxu0
        %v591 = vadd.f32 0.0, %v590
        %592 = vmatmul.bf16.gmra.mxu0 %v435
        %v593 = vpop.f32.mrf.mxu0
        %v594 = vadd.f32 0.0, %v593
        %v595 = vpop.f32.mrf.mxu0
        %v596 = vadd.f32 0.0, %v595
        %597 = vmatmul.bf16.gmra.mxu0 %v438
        %v598 = vpop.f32.mrf.mxu0
        %v599 = vadd.f32 0.0, %v598
        %v600 = vpop.f32.mrf.mxu0
        %v601 = vadd.f32 0.0, %v600
        %602 = vmatmul.bf16.gmra.mxu0 %v441
        %v603 = vpop.f32.mrf.mxu0
        %v604 = vadd.f32 0.0, %v603
        %v605 = vpop.f32.mrf.mxu0
        %v606 = vadd.f32 0.0, %v605
        %607 = vmatmul.bf16.gmra.mxu0 %v444
        %v608 = vpop.f32.mrf.mxu0
        %v609 = vadd.f32 0.0, %v608
        %v610 = vpop.f32.mrf.mxu0
        %v611 = vadd.f32 0.0, %v610
        %612 = vmatmul.bf16.gmra.mxu0 %v447
        %v613 = vpop.f32.mrf.mxu0
        %v614 = vadd.f32 0.0, %v613
        %v615 = vpop.f32.mrf.mxu0
        %v616 = vadd.f32 0.0, %v615
        %617 = vdwg.mxu0
        %v618 = vpack.c.bf16 %v459, %v459
        %v619 = vpack.c.bf16 %v461, %v461
        %v620 = vpack.c.bf16 %v464, %v464
        %v621 = vpack.c.bf16 %v466, %v466
        %v622 = vpack.c.bf16 %v469, %v469
        %v623 = vpack.c.bf16 %v471, %v471
        %v624 = vpack.c.bf16 %v474, %v474
        %v625 = vpack.c.bf16 %v476, %v476
        %v626 = vpack.c.bf16 %v479, %v479
        %v627 = vpack.c.bf16 %v481, %v481
        %v628 = vpack.c.bf16 %v484, %v484
        %v629 = vpack.c.bf16 %v486, %v486
        %v630 = vpack.c.bf16 %v489, %v489
        %v631 = vpack.c.bf16 %v491, %v491
        %v632 = vpack.c.bf16 %v494, %v494
        %v633 = vpack.c.bf16 %v496, %v496
        %v634 = vpack.c.bf16 %v499, %v499
        %v635 = vpack.c.bf16 %v501, %v501
        %v636 = vpack.c.bf16 %v504, %v504
        %v637 = vpack.c.bf16 %v506, %v506
        %v638 = vpack.c.bf16 %v509, %v509
        %v639 = vpack.c.bf16 %v511, %v511
        %v640 = vpack.c.bf16 %v514, %v514
        %v641 = vpack.c.bf16 %v516, %v516
        %v642 = vpack.c.bf16 %v519, %v519
        %v643 = vpack.c.bf16 %v521, %v521
        %v644 = vpack.c.bf16 %v524, %v524
        %v645 = vpack.c.bf16 %v526, %v526
        %v646 = vpack.c.bf16 %v529, %v529
        %v647 = vpack.c.bf16 %v531, %v531
        %v648 = vpack.c.bf16 %v534, %v534
        %v649 = vpack.c.bf16 %v536, %v536
        %v650 = vpack.c.bf16 %v539, %v539
        %v651 = vpack.c.bf16 %v541, %v541
        %v652 = vpack.c.bf16 %v544, %v544
        %v653 = vpack.c.bf16 %v546, %v546
        %v654 = vpack.c.bf16 %v549, %v549
        %v655 = vpack.c.bf16 %v551, %v551
        %v656 = vpack.c.bf16 %v554, %v554
        %v657 = vpack.c.bf16 %v556, %v556
        %v658 = vpack.c.bf16 %v559, %v559
        %v659 = vpack.c.bf16 %v561, %v561
        %v660 = vpack.c.bf16 %v564, %v564
        %v661 = vpack.c.bf16 %v566, %v566
        %v662 = vpack.c.bf16 %v569, %v569
        %v663 = vpack.c.bf16 %v571, %v571
        %v664 = vpack.c.bf16 %v574, %v574
        %v665 = vpack.c.bf16 %v576, %v576
        %v666 = vpack.c.bf16 %v579, %v579
        %v667 = vpack.c.bf16 %v581, %v581
        %v668 = vpack.c.bf16 %v584, %v584
        %v669 = vpack.c.bf16 %v586, %v586
        %v670 = vpack.c.bf16 %v589, %v589
        %v671 = vpack.c.bf16 %v591, %v591
        %v672 = vpack.c.bf16 %v594, %v594
        %v673 = vpack.c.bf16 %v596, %v596
        %v674 = vpack.c.bf16 %v599, %v599
        %v675 = vpack.c.bf16 %v601, %v601
        %v676 = vpack.c.bf16 %v604, %v604
        %v677 = vpack.c.bf16 %v606, %v606
        %v678 = vpack.c.bf16 %v609, %v609
        %v679 = vpack.c.bf16 %v611, %v611
        %v680 = vpack.c.bf16 %v614, %v614
        %v681 = vpack.c.bf16 %v616, %v616
        %vm682 = vcmask 125952
        %683 = vst.msk [vmem:[%s231] sm:$0xf] %vm682, %v618
        %684 = vst.msk [vmem:[%s231 + $0x4] sm:$0xf] %vm682, %v619
        %685 = vst.msk [vmem:[%s231 + $0x8] sm:$0xf] %vm682, %v620
        %686 = vst.msk [vmem:[%s231 + $0xc] sm:$0xf] %vm682, %v621
        %687 = vst.msk [vmem:[%s231 + $0x10] sm:$0xf] %vm682, %v622
        %688 = vst.msk [vmem:[%s231 + $0x14] sm:$0xf] %vm682, %v623
        %689 = vst.msk [vmem:[%s231 + $0x18] sm:$0xf] %vm682, %v624
        %690 = vst.msk [vmem:[%s231 + $0x1c] sm:$0xf] %vm682, %v625
        %691 = vst.msk [vmem:[%s231 + $0x20] sm:$0xf] %vm682, %v626
        %692 = vst.msk [vmem:[%s231 + $0x24] sm:$0xf] %vm682, %v627
        %693 = vst.msk [vmem:[%s231 + $0x28] sm:$0xf] %vm682, %v628
        %694 = vst.msk [vmem:[%s231 + $0x2c] sm:$0xf] %vm682, %v629
        %695 = vst.msk [vmem:[%s231 + $0x30] sm:$0xf] %vm682, %v630
        %696 = vst.msk [vmem:[%s231 + $0x34] sm:$0xf] %vm682, %v631
        %697 = vst.msk [vmem:[%s231 + $0x38] sm:$0xf] %vm682, %v632
        %698 = vst.msk [vmem:[%s231 + $0x3c] sm:$0xf] %vm682, %v633
        %699 = vst.msk [vmem:[%s231 + $0x40] sm:$0xf] %vm682, %v634
        %700 = vst.msk [vmem:[%s231 + $0x44] sm:$0xf] %vm682, %v635
        %701 = vst.msk [vmem:[%s231 + $0x48] sm:$0xf] %vm682, %v636
        %702 = vst.msk [vmem:[%s231 + $0x4c] sm:$0xf] %vm682, %v637
        %703 = vst.msk [vmem:[%s231 + $0x50] sm:$0xf] %vm682, %v638
        %704 = vst.msk [vmem:[%s231 + $0x54] sm:$0xf] %vm682, %v639
        %705 = vst.msk [vmem:[%s231 + $0x58] sm:$0xf] %vm682, %v640
        %706 = vst.msk [vmem:[%s231 + $0x5c] sm:$0xf] %vm682, %v641
        %707 = vst.msk [vmem:[%s231 + $0x60] sm:$0xf] %vm682, %v642
        %708 = vst.msk [vmem:[%s231 + $0x64] sm:$0xf] %vm682, %v643
        %709 = vst.msk [vmem:[%s231 + $0x68] sm:$0xf] %vm682, %v644
        %710 = vst.msk [vmem:[%s231 + $0x6c] sm:$0xf] %vm682, %v645
        %711 = vst.msk [vmem:[%s231 + $0x70] sm:$0xf] %vm682, %v646
        %712 = vst.msk [vmem:[%s231 + $0x74] sm:$0xf] %vm682, %v647
        %713 = vst.msk [vmem:[%s231 + $0x78] sm:$0xf] %vm682, %v648
        %714 = vst.msk [vmem:[%s231 + $0x7c] sm:$0xf] %vm682, %v649
        %715 = vst.msk [vmem:[%s231 + $0x80] sm:$0xf] %vm682, %v650
        %716 = vst.msk [vmem:[%s231 + $0x84] sm:$0xf] %vm682, %v651
        %717 = vst.msk [vmem:[%s231 + $0x88] sm:$0xf] %vm682, %v652
        %718 = vst.msk [vmem:[%s231 + $0x8c] sm:$0xf] %vm682, %v653
        %719 = vst.msk [vmem:[%s231 + $0x90] sm:$0xf] %vm682, %v654
        %720 = vst.msk [vmem:[%s231 + $0x94] sm:$0xf] %vm682, %v655
        %721 = vst.msk [vmem:[%s231 + $0x98] sm:$0xf] %vm682, %v656
        %722 = vst.msk [vmem:[%s231 + $0x9c] sm:$0xf] %vm682, %v657
        %723 = vst.msk [vmem:[%s231 + $0xa0] sm:$0xf] %vm682, %v658
        %724 = vst.msk [vmem:[%s231 + $0xa4] sm:$0xf] %vm682, %v659
        %725 = vst.msk [vmem:[%s231 + $0xa8] sm:$0xf] %vm682, %v660
        %726 = vst.msk [vmem:[%s231 + $0xac] sm:$0xf] %vm682, %v661
        %727 = vst.msk [vmem:[%s231 + $0xb0] sm:$0xf] %vm682, %v662
        %728 = vst.msk [vmem:[%s231 + $0xb4] sm:$0xf] %vm682, %v663
        %729 = vst.msk [vmem:[%s231 + $0xb8] sm:$0xf] %vm682, %v664
        %730 = vst.msk [vmem:[%s231 + $0xbc] sm:$0xf] %vm682, %v665
        %731 = vst.msk [vmem:[%s231 + $0xc0] sm:$0xf] %vm682, %v666
        %732 = vst.msk [vmem:[%s231 + $0xc4] sm:$0xf] %vm682, %v667
        %733 = vst.msk [vmem:[%s231 + $0xc8] sm:$0xf] %vm682, %v668
        %734 = vst.msk [vmem:[%s231 + $0xcc] sm:$0xf] %vm682, %v669
        %735 = vst.msk [vmem:[%s231 + $0xd0] sm:$0xf] %vm682, %v670
        %736 = vst.msk [vmem:[%s231 + $0xd4] sm:$0xf] %vm682, %v671
        %737 = vst.msk [vmem:[%s231 + $0xd8] sm:$0xf] %vm682, %v672
        %738 = vst.msk [vmem:[%s231 + $0xdc] sm:$0xf] %vm682, %v673
        %739 = vst.msk [vmem:[%s231 + $0xe0] sm:$0xf] %vm682, %v674
        %740 = vst.msk [vmem:[%s231 + $0xe4] sm:$0xf] %vm682, %v675
        %741 = vst.msk [vmem:[%s231 + $0xe8] sm:$0xf] %vm682, %v676
        %742 = vst.msk [vmem:[%s231 + $0xec] sm:$0xf] %vm682, %v677
        %743 = vst.msk [vmem:[%s231 + $0xf0] sm:$0xf] %vm682, %v678
        %744 = vst.msk [vmem:[%s231 + $0xf4] sm:$0xf] %vm682, %v679
        %745 = vst.msk [vmem:[%s231 + $0xf8] sm:$0xf] %vm682, %v680
        %746 = vst.msk [vmem:[%s231 + $0xfc] sm:$0xf] %vm682, %v681
        %vm747 = vcmask 130048
        %v748 = vsel %vm747, %v459, 0.0
        %v749 = vsel %vm747, %v461, 0.0
        %v750 = vadd.f32 %v748, %v749
        %v751 = vsel %vm747, %v464, 0.0
        %v752 = vadd.f32 %v750, %v751
        %v753 = vsel %vm747, %v466, 0.0
        %v754 = vadd.f32 %v752, %v753
        %v755 = vsel %vm747, %v469, 0.0
        %v756 = vadd.f32 %v754, %v755
        %v757 = vsel %vm747, %v471, 0.0
        %v758 = vadd.f32 %v756, %v757
        %v759 = vsel %vm747, %v474, 0.0
        %v760 = vadd.f32 %v758, %v759
        %v761 = vsel %vm747, %v476, 0.0
        %v762 = vadd.f32 %v760, %v761
        %v763 = vsel %vm747, %v479, 0.0
        %v764 = vadd.f32 %v762, %v763
        %v765 = vsel %vm747, %v481, 0.0
        %v766 = vadd.f32 %v764, %v765
        %v767 = vsel %vm747, %v484, 0.0
        %v768 = vadd.f32 %v766, %v767
        %v769 = vsel %vm747, %v486, 0.0
        %v770 = vadd.f32 %v768, %v769
        %v771 = vsel %vm747, %v489, 0.0
        %v772 = vadd.f32 %v770, %v771
        %v773 = vsel %vm747, %v491, 0.0
        %v774 = vadd.f32 %v772, %v773
        %v775 = vsel %vm747, %v494, 0.0
        %v776 = vadd.f32 %v774, %v775
        %v777 = vsel %vm747, %v496, 0.0
        %v778 = vadd.f32 %v776, %v777
        %v779 = vsel %vm747, %v499, 0.0
        %v780 = vadd.f32 %v778, %v779
        %v781 = vsel %vm747, %v501, 0.0
        %v782 = vadd.f32 %v780, %v781
        %v783 = vsel %vm747, %v504, 0.0
        %v784 = vadd.f32 %v782, %v783
        %v785 = vsel %vm747, %v506, 0.0
        %v786 = vadd.f32 %v784, %v785
        %v787 = vsel %vm747, %v509, 0.0
        %v788 = vadd.f32 %v786, %v787
        %v789 = vsel %vm747, %v511, 0.0
        %v790 = vadd.f32 %v788, %v789
        %v791 = vsel %vm747, %v514, 0.0
        %v792 = vadd.f32 %v790, %v791
        %v793 = vsel %vm747, %v516, 0.0
        %v794 = vadd.f32 %v792, %v793
        %v795 = vsel %vm747, %v519, 0.0
        %v796 = vadd.f32 %v794, %v795
        %v797 = vsel %vm747, %v521, 0.0
        %v798 = vadd.f32 %v796, %v797
        %v799 = vsel %vm747, %v524, 0.0
        %v800 = vadd.f32 %v798, %v799
        %v801 = vsel %vm747, %v526, 0.0
        %v802 = vadd.f32 %v800, %v801
        %v803 = vsel %vm747, %v529, 0.0
        %v804 = vadd.f32 %v802, %v803
        %v805 = vsel %vm747, %v531, 0.0
        %v806 = vadd.f32 %v804, %v805
        %v807 = vsel %vm747, %v534, 0.0
        %v808 = vadd.f32 %v806, %v807
        %v809 = vsel %vm747, %v536, 0.0
        %v810 = vadd.f32 %v808, %v809
        %v811 = vsel %vm747, %v539, 0.0
        %v812 = vadd.f32 %v810, %v811
        %v813 = vsel %vm747, %v541, 0.0
        %v814 = vadd.f32 %v812, %v813
        %v815 = vsel %vm747, %v544, 0.0
        %v816 = vadd.f32 %v814, %v815
        %v817 = vsel %vm747, %v546, 0.0
        %v818 = vadd.f32 %v816, %v817
        %v819 = vsel %vm747, %v549, 0.0
        %v820 = vadd.f32 %v818, %v819
        %v821 = vsel %vm747, %v551, 0.0
        %v822 = vadd.f32 %v820, %v821
        %v823 = vsel %vm747, %v554, 0.0
        %v824 = vadd.f32 %v822, %v823
        %v825 = vsel %vm747, %v556, 0.0
        %v826 = vadd.f32 %v824, %v825
        %v827 = vsel %vm747, %v559, 0.0
        %v828 = vadd.f32 %v826, %v827
        %v829 = vsel %vm747, %v561, 0.0
        %v830 = vadd.f32 %v828, %v829
        %v831 = vsel %vm747, %v564, 0.0
        %v832 = vadd.f32 %v830, %v831
        %v833 = vsel %vm747, %v566, 0.0
        %v834 = vadd.f32 %v832, %v833
        %v835 = vsel %vm747, %v569, 0.0
        %v836 = vadd.f32 %v834, %v835
        %v837 = vsel %vm747, %v571, 0.0
        %v838 = vadd.f32 %v836, %v837
        %v839 = vsel %vm747, %v574, 0.0
        %v840 = vadd.f32 %v838, %v839
        %v841 = vsel %vm747, %v576, 0.0
        %v842 = vadd.f32 %v840, %v841
        %v843 = vsel %vm747, %v579, 0.0
        %v844 = vadd.f32 %v842, %v843
        %v845 = vsel %vm747, %v581, 0.0
        %v846 = vadd.f32 %v844, %v845
        %v847 = vsel %vm747, %v584, 0.0
        %v848 = vadd.f32 %v846, %v847
        %v849 = vsel %vm747, %v586, 0.0
        %v850 = vadd.f32 %v848, %v849
        %v851 = vsel %vm747, %v589, 0.0
        %v852 = vadd.f32 %v850, %v851
        %v853 = vsel %vm747, %v591, 0.0
        %v854 = vadd.f32 %v852, %v853
        %v855 = vsel %vm747, %v594, 0.0
        %v856 = vadd.f32 %v854, %v855
        %v857 = vsel %vm747, %v596, 0.0
        %v858 = vadd.f32 %v856, %v857
        %v859 = vsel %vm747, %v599, 0.0
        %v860 = vadd.f32 %v858, %v859
        %v861 = vsel %vm747, %v601, 0.0
        %v862 = vadd.f32 %v860, %v861
        %v863 = vsel %vm747, %v604, 0.0
        %v864 = vadd.f32 %v862, %v863
        %v865 = vsel %vm747, %v606, 0.0
        %v866 = vadd.f32 %v864, %v865
        %v867 = vsel %vm747, %v609, 0.0
        %v868 = vadd.f32 %v866, %v867
        %v869 = vsel %vm747, %v611, 0.0
        %v870 = vadd.f32 %v868, %v869
        %v871 = vsel %vm747, %v614, 0.0
        %v872 = vadd.f32 %v870, %v871
        %v873 = vsel %vm747, %v616, 0.0
        %v874 = vadd.f32 %v872, %v873
        %v875 = vrot.slane %v874, 4
        %v876 = vadd.f32 %v874, %v875
        %v877 = vrot.slane %v876, 2
        %v878 = vadd.f32 %v876, %v877
        %v879 = vrot.slane %v878, 1
        %v880 = vadd.f32 %v878, %v879
        %vm881 = vcmask 122880
        %882 = vst.msk [vmem:[%s235] sm:$0x1] %vm881, %v880
        %v883 = vmul.f32 %v459, %v459
        %v884 = vmul.f32 %v461, %v461
        %v885 = vmul.f32 %v464, %v464
        %v886 = vmul.f32 %v466, %v466
        %v887 = vmul.f32 %v469, %v469
        %v888 = vmul.f32 %v471, %v471
        %v889 = vmul.f32 %v474, %v474
        %v890 = vmul.f32 %v476, %v476
        %v891 = vmul.f32 %v479, %v479
        %v892 = vmul.f32 %v481, %v481
        %v893 = vmul.f32 %v484, %v484
        %v894 = vmul.f32 %v486, %v486
        %v895 = vmul.f32 %v489, %v489
        %v896 = vmul.f32 %v491, %v491
        %v897 = vmul.f32 %v494, %v494
        %v898 = vmul.f32 %v496, %v496
        %v899 = vmul.f32 %v499, %v499
        %v900 = vmul.f32 %v501, %v501
        %v901 = vmul.f32 %v504, %v504
        %v902 = vmul.f32 %v506, %v506
        %v903 = vmul.f32 %v509, %v509
        %v904 = vmul.f32 %v511, %v511
        %v905 = vmul.f32 %v514, %v514
        %v906 = vmul.f32 %v516, %v516
        %v907 = vmul.f32 %v519, %v519
        %v908 = vmul.f32 %v521, %v521
        %v909 = vmul.f32 %v524, %v524
        %v910 = vmul.f32 %v526, %v526
        %v911 = vmul.f32 %v529, %v529
        %v912 = vmul.f32 %v531, %v531
        %v913 = vmul.f32 %v534, %v534
        %v914 = vmul.f32 %v536, %v536
        %v915 = vmul.f32 %v539, %v539
        %v916 = vmul.f32 %v541, %v541
        %v917 = vmul.f32 %v544, %v544
        %v918 = vmul.f32 %v546, %v546
        %v919 = vmul.f32 %v549, %v549
        %v920 = vmul.f32 %v551, %v551
        %v921 = vmul.f32 %v554, %v554
        %v922 = vmul.f32 %v556, %v556
        %v923 = vmul.f32 %v559, %v559
        %v924 = vmul.f32 %v561, %v561
        %v925 = vmul.f32 %v564, %v564
        %v926 = vmul.f32 %v566, %v566
        %v927 = vmul.f32 %v569, %v569
        %v928 = vmul.f32 %v571, %v571
        %v929 = vmul.f32 %v574, %v574
        %v930 = vmul.f32 %v576, %v576
        %v931 = vmul.f32 %v579, %v579
        %v932 = vmul.f32 %v581, %v581
        %v933 = vmul.f32 %v584, %v584
        %v934 = vmul.f32 %v586, %v586
        %v935 = vmul.f32 %v589, %v589
        %v936 = vmul.f32 %v591, %v591
        %v937 = vmul.f32 %v594, %v594
        %v938 = vmul.f32 %v596, %v596
        %v939 = vmul.f32 %v599, %v599
        %v940 = vmul.f32 %v601, %v601
        %v941 = vmul.f32 %v604, %v604
        %v942 = vmul.f32 %v606, %v606
        %v943 = vmul.f32 %v609, %v609
        %v944 = vmul.f32 %v611, %v611
        %v945 = vmul.f32 %v614, %v614
        %v946 = vmul.f32 %v616, %v616
        %v947 = vsel %vm747, %v883, 0.0
        %v948 = vsel %vm747, %v884, 0.0
        %v949 = vadd.f32 %v947, %v948
        %v950 = vsel %vm747, %v885, 0.0
        %v951 = vadd.f32 %v949, %v950
        %v952 = vsel %vm747, %v886, 0.0
        %v953 = vadd.f32 %v951, %v952
        %v954 = vsel %vm747, %v887, 0.0
        %v955 = vadd.f32 %v953, %v954
        %v956 = vsel %vm747, %v888, 0.0
        %v957 = vadd.f32 %v955, %v956
        %v958 = vsel %vm747, %v889, 0.0
        %v959 = vadd.f32 %v957, %v958
        %v960 = vsel %vm747, %v890, 0.0
        %v961 = vadd.f32 %v959, %v960
        %v962 = vsel %vm747, %v891, 0.0
        %v963 = vadd.f32 %v961, %v962
        %v964 = vsel %vm747, %v892, 0.0
        %v965 = vadd.f32 %v963, %v964
        %v966 = vsel %vm747, %v893, 0.0
        %v967 = vadd.f32 %v965, %v966
        %v968 = vsel %vm747, %v894, 0.0
        %v969 = vadd.f32 %v967, %v968
        %v970 = vsel %vm747, %v895, 0.0
        %v971 = vadd.f32 %v969, %v970
        %v972 = vsel %vm747, %v896, 0.0
        %v973 = vadd.f32 %v971, %v972
        %v974 = vsel %vm747, %v897, 0.0
        %v975 = vadd.f32 %v973, %v974
        %v976 = vsel %vm747, %v898, 0.0
        %v977 = vadd.f32 %v975, %v976
        %v978 = vsel %vm747, %v899, 0.0
        %v979 = vadd.f32 %v977, %v978
        %v980 = vsel %vm747, %v900, 0.0
        %v981 = vadd.f32 %v979, %v980
        %v982 = vsel %vm747, %v901, 0.0
        %v983 = vadd.f32 %v981, %v982
        %v984 = vsel %vm747, %v902, 0.0
        %v985 = vadd.f32 %v983, %v984
        %v986 = vsel %vm747, %v903, 0.0
        %v987 = vadd.f32 %v985, %v986
        %v988 = vsel %vm747, %v904, 0.0
        %v989 = vadd.f32 %v987, %v988
        %v990 = vsel %vm747, %v905, 0.0
        %v991 = vadd.f32 %v989, %v990
        %v992 = vsel %vm747, %v906, 0.0
        %v993 = vadd.f32 %v991, %v992
        %v994 = vsel %vm747, %v907, 0.0
        %v995 = vadd.f32 %v993, %v994
        %v996 = vsel %vm747, %v908, 0.0
        %v997 = vadd.f32 %v995, %v996
        %v998 = vsel %vm747, %v909, 0.0
        %v999 = vadd.f32 %v997, %v998
        %v1000 = vsel %vm747, %v910, 0.0
        %v1001 = vadd.f32 %v999, %v1000
        %v1002 = vsel %vm747, %v911, 0.0
        %v1003 = vadd.f32 %v1001, %v1002
        %v1004 = vsel %vm747, %v912, 0.0
        %v1005 = vadd.f32 %v1003, %v1004
        %v1006 = vsel %vm747, %v913, 0.0
        %v1007 = vadd.f32 %v1005, %v1006
        %v1008 = vsel %vm747, %v914, 0.0
        %v1009 = vadd.f32 %v1007, %v1008
        %v1010 = vsel %vm747, %v915, 0.0
        %v1011 = vadd.f32 %v1009, %v1010
        %v1012 = vsel %vm747, %v916, 0.0
        %v1013 = vadd.f32 %v1011, %v1012
        %v1014 = vsel %vm747, %v917, 0.0
        %v1015 = vadd.f32 %v1013, %v1014
        %v1016 = vsel %vm747, %v918, 0.0
        %v1017 = vadd.f32 %v1015, %v1016
        %v1018 = vsel %vm747, %v919, 0.0
        %v1019 = vadd.f32 %v1017, %v1018
        %v1020 = vsel %vm747, %v920, 0.0
        %v1021 = vadd.f32 %v1019, %v1020
        %v1022 = vsel %vm747, %v921, 0.0
        %v1023 = vadd.f32 %v1021, %v1022
        %v1024 = vsel %vm747, %v922, 0.0
        %v1025 = vadd.f32 %v1023, %v1024
        %v1026 = vsel %vm747, %v923, 0.0
        %v1027 = vadd.f32 %v1025, %v1026
        %v1028 = vsel %vm747, %v924, 0.0
        %v1029 = vadd.f32 %v1027, %v1028
        %v1030 = vsel %vm747, %v925, 0.0
        %v1031 = vadd.f32 %v1029, %v1030
        %v1032 = vsel %vm747, %v926, 0.0
        %v1033 = vadd.f32 %v1031, %v1032
        %v1034 = vsel %vm747, %v927, 0.0
        %v1035 = vadd.f32 %v1033, %v1034
        %v1036 = vsel %vm747, %v928, 0.0
        %v1037 = vadd.f32 %v1035, %v1036
        %v1038 = vsel %vm747, %v929, 0.0
        %v1039 = vadd.f32 %v1037, %v1038
        %v1040 = vsel %vm747, %v930, 0.0
        %v1041 = vadd.f32 %v1039, %v1040
        %v1042 = vsel %vm747, %v931, 0.0
        %v1043 = vadd.f32 %v1041, %v1042
        %v1044 = vsel %vm747, %v932, 0.0
        %v1045 = vadd.f32 %v1043, %v1044
        %v1046 = vsel %vm747, %v933, 0.0
        %v1047 = vadd.f32 %v1045, %v1046
        %v1048 = vsel %vm747, %v934, 0.0
        %v1049 = vadd.f32 %v1047, %v1048
        %v1050 = vsel %vm747, %v935, 0.0
        %v1051 = vadd.f32 %v1049, %v1050
        %v1052 = vsel %vm747, %v936, 0.0
        %v1053 = vadd.f32 %v1051, %v1052
        %v1054 = vsel %vm747, %v937, 0.0
        %v1055 = vadd.f32 %v1053, %v1054
        %v1056 = vsel %vm747, %v938, 0.0
        %v1057 = vadd.f32 %v1055, %v1056
        %v1058 = vsel %vm747, %v939, 0.0
        %v1059 = vadd.f32 %v1057, %v1058
        %v1060 = vsel %vm747, %v940, 0.0
        %v1061 = vadd.f32 %v1059, %v1060
        %v1062 = vsel %vm747, %v941, 0.0
        %v1063 = vadd.f32 %v1061, %v1062
        %v1064 = vsel %vm747, %v942, 0.0
        %v1065 = vadd.f32 %v1063, %v1064
        %v1066 = vsel %vm747, %v943, 0.0
        %v1067 = vadd.f32 %v1065, %v1066
        %v1068 = vsel %vm747, %v944, 0.0
        %v1069 = vadd.f32 %v1067, %v1068
        %v1070 = vsel %vm747, %v945, 0.0
        %v1071 = vadd.f32 %v1069, %v1070
        %v1072 = vsel %vm747, %v946, 0.0
        %v1073 = vadd.f32 %v1071, %v1072
        %v1074 = vrot.slane %v1073, 4
        %v1075 = vadd.f32 %v1073, %v1074
        %v1076 = vrot.slane %v1075, 2
        %v1077 = vadd.f32 %v1075, %v1076
        %v1078 = vrot.slane %v1077, 1
        %v1079 = vadd.f32 %v1077, %v1078
        %1080 = vst.msk [vmem:[%s238] sm:$0x1] %vm881, %v1079
        %s1081 = smul.u32 64, %s19
        %p1082 = scmp.lt.s32.totalorder %s1081, 127
        %s1083 = scalar_select %p1082, %s1081, 127
        %s1084 = smul.addr %s1083, 4
        %s1085 = scalar_lea.vmem %s2, %s1084
        %p1086 = scmp.lt.s32.totalorder %s19, 1
        %s1087 = scalar_select %p1086, %s19, 1
        %s1088 = scalar_lea.vmem %s3, %s1087
        %p1089 = scmp.lt.s32.totalorder %s19, 1
        %s1090 = scalar_select %p1089, %s19, 1
        %s1091 = scalar_lea.vmem %s4, %s1090
        // Predicated region
        $region33: #{senet_dilated_bottleneck.5} parent=27 // pred_check
          %p1092 = pneg %p84
        $region34: #{senet_dilated_bottleneck.5} parent=27 // pred_check_branch
          %1094 = sbr.rel (%p1092) target = $region36
        $region35: #{senet_dilated_bottleneck.5} parent=27 // pred_region
          %s1095 = smul.u32 64, %s19
        $region36: #{senet_dilated_bottleneck.5} parent=27 // pred_fallthru
          _
        // Predicated region
        $region37: #{senet_dilated_bottleneck.5} parent=27 // pred_check
          %p1096 = pneg %p110
        $region38: #{senet_dilated_bottleneck.5} parent=27 // pred_check_branch
          %1098 = sbr.rel (%p1096) target = $region40
        $region39: #{senet_dilated_bottleneck.5} parent=27 // pred_region
          _
        $region40: #{senet_dilated_bottleneck.5} parent=27 // pred_fallthru
          _
        // Predicated region
        $region41: #{senet_dilated_bottleneck.5} parent=27 // pred_check
          %p1099 = pneg %p136
        $region42: #{senet_dilated_bottleneck.5} parent=27 // pred_check_branch
          %1101 = sbr.rel (%p1099) target = $region44
        $region43: #{senet_dilated_bottleneck.5} parent=27 // pred_region
          _
        $region44: #{senet_dilated_bottleneck.5} parent=27 // pred_fallthru
          _
      $region28: #{senet_dilated_bottleneck.5} parent=5 // pred_fallthru
        _
      %p1102 = scmp.le.s32.totalorder 2, %s14
      // Predicated region
      $region45: #{senet_dilated_bottleneck.5} parent=5 // pred_check
        %p1103 = pneg %p1102
      $region46: #{senet_dilated_bottleneck.5} parent=5 // pred_check_branch
        %1105 = sbr.rel (%p1103) target = $region48
      $region47: #{senet_dilated_bottleneck.5} parent=5 // pred_region
        %s1106 = ssub.s32 %s14, 2
        // Predicated region
        $region49: #{senet_dilated_bottleneck.5} parent=47 // pred_check
          %p1107 = pneg %p90
        $region50: #{senet_dilated_bottleneck.5} parent=47 // pred_check_branch
          %1109 = sbr.rel (%p1107) target = $region52
        $region51: #{senet_dilated_bottleneck.5} parent=47 // pred_region
          %s1110 = smul.u32 64, %s20
          %p1111 = scmp.lt.s32.totalorder %s1110, 127
          %s1112 = scalar_select %p1111, %s1110, 127
          %s1113 = smul.addr %s1112, 4
          %s1114 = scalar_lea.vmem %s2, %s1113
        $region52: #{senet_dilated_bottleneck.5} parent=47 // pred_fallthru
          _
        // Predicated region
        $region53: #{senet_dilated_bottleneck.5} parent=47 // pred_check
          %p1115 = pneg %p116
        $region54: #{senet_dilated_bottleneck.5} parent=47 // pred_check_branch
          %1117 = sbr.rel (%p1115) target = $region56
        $region55: #{senet_dilated_bottleneck.5} parent=47 // pred_region
          %p1118 = scmp.lt.s32.totalorder %s20, 1
          %s1119 = scalar_select %p1118, %s20, 1
          %s1120 = scalar_lea.vmem %s3, %s1119
        $region56: #{senet_dilated_bottleneck.5} parent=47 // pred_fallthru
          _
        // Predicated region
        $region57: #{senet_dilated_bottleneck.5} parent=47 // pred_check
          %p1121 = pneg %p142
        $region58: #{senet_dilated_bottleneck.5} parent=47 // pred_check_branch
          %1123 = sbr.rel (%p1121) target = $region60
        $region59: #{senet_dilated_bottleneck.5} parent=47 // pred_region
          %p1124 = scmp.lt.s32.totalorder %s20, 1
          %s1125 = scalar_select %p1124, %s20, 1
          %s1126 = scalar_lea.vmem %s4, %s1125
        $region60: #{senet_dilated_bottleneck.5} parent=47 // pred_fallthru
          _
      $region48: #{senet_dilated_bottleneck.5} parent=5 // pred_fallthru
        _
    $region6: #{senet_dilated_bottleneck.5} parent=1 // loop_footer
      %s18 = sadd.s32 1, %s14
    $region7: #{senet_dilated_bottleneck.5} parent=1 // loop_footer_branch
      %13 = sbr.rel target = $region3
    $region8: #{senet_dilated_bottleneck.5} parent=1 // loop_exit
      _
    %1127 = vsyncpa [#allocation3], 1
    %s1128 = scalar_lea.sflag [#allocation3], 1
    %1129 = vsyncpa %s1128, 1

// kernel: senet_dilated_bottleneck.7
$region0: #{senet_dilated_bottleneck.7}
  #allocation0 [shape = 'u32[]', space=smem, size = 0x4, offset = 0x4, fixed_abs, tag = 'smem constant byte address 0x4 - core index']
  #allocation1 [shape = 'u32[72,128]{1,0:T(1,128)}', space=vmem, size = 0x9000, scoped, tag = 'internal scratch']
  #allocation2 [shape = 'f32[64,16]{1,0:T(8,128)}', space=vmem, size = 0x8000, scoped, tag = 'scratch operand']
  %s0 = inlined_call_operand.vmem [shape: bf16[2,12,64,144], index: 0, kind: input, shape index: {}]
  %s1 = inlined_call_operand.vmem [shape: bf16[3,144,16], index: 1, kind: input, shape index: {}]
  %s2 = inlined_call_operand.vmem [shape: bf16[2,8,64,16], index: 2, kind: output, shape index: {0}]
  %s3 = inlined_call_operand.vmem [shape: f32[2,8,1,16], index: 3, kind: output, shape index: {1}]
  %s4 = inlined_call_operand.vmem [shape: f32[2,8,1,16], index: 4, kind: output, shape index: {2}]
  %5 = xla_tuple %s2, %s3, %s4
  %s6 = sld [smem:[#allocation0]]
  $region65: #{senet_dilated_bottleneck.7} parent=0
    _
  %s8 = ssub.s32 1, %s6
  %s9 = scalar_select 0, %s8, %s6
  loop: start=0, step=1, limit=50
  $region2: #{senet_dilated_bottleneck.7} parent=0 // loop_pre_header
    _
  $region3: #{senet_dilated_bottleneck.7} parent=0 // loop_header
    %s11 = sphi 0, %s15
    %p12 = scmp.ge.s32.totalorder %s11, 50
    %s18 = sphi 0, %s37
    %s19 = sphi 0, %s33
    %s20 = sphi 0, %s29
    %s21 = sphi 0, %s18
    %s22 = sphi 0, %s19
    %s23 = sphi 0, %s20
    %s24 = sphi 0, %s21
    %s25 = sphi 0, %s22
    %s26 = sphi 0, %s23
    %s46 = sphi 0, %s48
    %s49 = sphi 0, %s46
    %s50 = sphi 0, %s49
    %s66 = sphi 0, %s50
    %s72 = sphi 0, %s74
    %s75 = sphi 0, %s72
    %s76 = sphi 0, %s75
    %s92 = sphi 0, %s76
    %s100 = sphi 0, %s102
    %s103 = sphi 0, %s100
    %s104 = sphi 0, %s103
    %s120 = sphi 0, %s104
    %s128 = sphi 0, %s130
    %s131 = sphi 0, %s128
    %s132 = sphi 0, %s131
    %s148 = sphi 0, %s132
    %s156 = sphi 0, %s158
    %s159 = sphi 0, %s156
    %s160 = sphi 0, %s159
    %s176 = sphi 0, %s160
  $region4: #{senet_dilated_bottleneck.7} parent=0 // loop_header_branch
    %14 = sbr.rel (%p12) target = $region8
  $region5: #{senet_dilated_bottleneck.7} parent=0 // loop_body
    %s16 = ssub.s32 %s11, 1
    %s17 = ssub.s32 %s11, 2
    %s27 = sadd.s32 1, %s20
    %p28 = scmp.ge.s32.totalorder %s27, 3
    %s29 = scalar_select %p28, 0, %s27
    %s30 = sadd.s32 1, %s19
    %s31 = scalar_select %p28, %s30, %s19
    %p32 = scmp.ge.s32.totalorder %s31, 8
    %s33 = scalar_select %p32, 0, %s31
    %s34 = sadd.s32 1, %s18
    %s35 = scalar_select %p32, %s34, %s18
    %p36 = scmp.ge.s32.totalorder %s35, 2
    %s37 = scalar_select %p36, 0, %s35
    %s38 = smul.u32 %s20, 2
    %s39 = sadd.s32 %s19, %s38
    %s40 = smul.u32 %s29, 2
    %s41 = sadd.s32 %s33, %s40
    %s42 = ssub.s32 %s18, %s37
    %s43 = ssub.s32 %s39, %s41
    %s44 = sor.u32 %s42, %s43
    %p45 = scmp.eq.s32.totalorder %s44, 0
    %s47 = sadd.s32 %s46, 1
    %s48 = scalar_select %p45, %s46, %s47
    %p51 = pneg %p45
    %p52 = scmp.eq.s32.totalorder %s11, 47
    %p53 = por %p51, %p52
    %p54 = scmp.ne.s32.totalorder %s46, %s49
    %p55 = scmp.eq.s32.totalorder %s11, 0
    %p56 = por %p54, %p55
    %p57 = scmp.ne.s32.totalorder %s46, %s49
    %p58 = scmp.eq.s32.totalorder %s16, 47
    %p59 = por %p57, %p58
    %p60 = scmp.ne.s32.totalorder %s49, %s50
    %p61 = scmp.eq.s32.totalorder %s16, 0
    %p62 = por %p60, %p61
    %p63 = scmp.ne.s32.totalorder %s49, %s50
    %p64 = scmp.eq.s32.totalorder %s17, 47
    %p65 = por %p63, %p64
    %p67 = scmp.ne.s32.totalorder %s50, %s66
    %p68 = scmp.eq.s32.totalorder %s17, 0
    %p69 = por %p67, %p68
    %s70 = ssub.s32 %s20, %s29
    %p71 = scmp.eq.s32.totalorder %s70, 0
    %s73 = sadd.s32 %s72, 1
    %s74 = scalar_select %p71, %s72, %s73
    %p77 = pneg %p71
    %p78 = scmp.eq.s32.totalorder %s11, 47
    %p79 = por %p77, %p78
    %p80 = scmp.ne.s32.totalorder %s72, %s75
    %p81 = scmp.eq.s32.totalorder %s11, 0
    %p82 = por %p80, %p81
    %p83 = scmp.ne.s32.totalorder %s72, %s75
    %p84 = scmp.eq.s32.totalorder %s16, 47
    %p85 = por %p83, %p84
    %p86 = scmp.ne.s32.totalorder %s75, %s76
    %p87 = scmp.eq.s32.totalorder %s16, 0
    %p88 = por %p86, %p87
    %p89 = scmp.ne.s32.totalorder %s75, %s76
    %p90 = scmp.eq.s32.totalorder %s17, 47
    %p91 = por %p89, %p90
    %p93 = scmp.ne.s32.totalorder %s76, %s92
    %p94 = scmp.eq.s32.totalorder %s17, 0
    %p95 = por %p93, %p94
    %s96 = ssub.s32 %s18, %s37
    %s97 = ssub.s32 %s19, %s33
    %s98 = sor.u32 %s96, %s97
    %p99 = scmp.eq.s32.totalorder %s98, 0
    %s101 = sadd.s32 %s100, 1
    %s102 = scalar_select %p99, %s100, %s101
    %p105 = pneg %p99
    %p106 = scmp.eq.s32.totalorder %s11, 47
    %p107 = por %p105, %p106
    %p108 = scmp.ne.s32.totalorder %s100, %s103
    %p109 = scmp.eq.s32.totalorder %s11, 0
    %p110 = por %p108, %p109
    %p111 = scmp.ne.s32.totalorder %s100, %s103
    %p112 = scmp.eq.s32.totalorder %s16, 47
    %p113 = por %p111, %p112
    %p114 = scmp.ne.s32.totalorder %s103, %s104
    %p115 = scmp.eq.s32.totalorder %s16, 0
    %p116 = por %p114, %p115
    %p117 = scmp.ne.s32.totalorder %s103, %s104
    %p118 = scmp.eq.s32.totalorder %s17, 47
    %p119 = por %p117, %p118
    %p121 = scmp.ne.s32.totalorder %s104, %s120
    %p122 = scmp.eq.s32.totalorder %s17, 0
    %p123 = por %p121, %p122
    %s124 = ssub.s32 %s18, %s37
    %s125 = ssub.s32 %s19, %s33
    %s126 = sor.u32 %s124, %s125
    %p127 = scmp.eq.s32.totalorder %s126, 0
    %s129 = sadd.s32 %s128, 1
    %s130 = scalar_select %p127, %s128, %s129
    %p133 = pneg %p127
    %p134 = scmp.eq.s32.totalorder %s11, 47
    %p135 = por %p133, %p134
    %p136 = scmp.ne.s32.totalorder %s128, %s131
    %p137 = scmp.eq.s32.totalorder %s11, 0
    %p138 = por %p136, %p137
    %p139 = scmp.ne.s32.totalorder %s128, %s131
    %p140 = scmp.eq.s32.totalorder %s16, 47
    %p141 = por %p139, %p140
    %p142 = scmp.ne.s32.totalorder %s131, %s132
    %p143 = scmp.eq.s32.totalorder %s16, 0
    %p144 = por %p142, %p143
    %p145 = scmp.ne.s32.totalorder %s131, %s132
    %p146 = scmp.eq.s32.totalorder %s17, 47
    %p147 = por %p145, %p146
    %p149 = scmp.ne.s32.totalorder %s132, %s148
    %p150 = scmp.eq.s32.totalorder %s17, 0
    %p151 = por %p149, %p150
    %s152 = ssub.s32 %s18, %s37
    %s153 = ssub.s32 %s19, %s33
    %s154 = sor.u32 %s152, %s153
    %p155 = scmp.eq.s32.totalorder %s154, 0
    %s157 = sadd.s32 %s156, 1
    %s158 = scalar_select %p155, %s156, %s157
    %p161 = pneg %p155
    %p162 = scmp.eq.s32.totalorder %s11, 47
    %p163 = por %p161, %p162
    %p164 = scmp.ne.s32.totalorder %s156, %s159
    %p165 = scmp.eq.s32.totalorder %s11, 0
    %p166 = por %p164, %p165
    %p167 = scmp.ne.s32.totalorder %s156, %s159
    %p168 = scmp.eq.s32.totalorder %s16, 47
    %p169 = por %p167, %p168
    %p170 = scmp.ne.s32.totalorder %s159, %s160
    %p171 = scmp.eq.s32.totalorder %s16, 0
    %p172 = por %p170, %p171
    %p173 = scmp.ne.s32.totalorder %s159, %s160
    %p174 = scmp.eq.s32.totalorder %s17, 47
    %p175 = por %p173, %p174
    %p177 = scmp.ne.s32.totalorder %s160, %s176
    %p178 = scmp.eq.s32.totalorder %s17, 0
    %p179 = por %p177, %p178
    %p180 = scmp.le.s32.totalorder 1, %s11
    %p181 = scmp.lt.s32.totalorder %s11, 49
    %p182 = pnand %p180, %p181
    %p183 = pneg %p182
    // Predicated region
    $region9: #{senet_dilated_bottleneck.7} parent=5 // pred_check
      _
    $region10: #{senet_dilated_bottleneck.7} parent=5 // pred_check_branch
      %185 = sbr.rel (%p182) target = $region12
    $region11: #{senet_dilated_bottleneck.7} parent=5 // pred_region
      %s186 = ssub.s32 %s11, 1
    $region12: #{senet_dilated_bottleneck.7} parent=5 // pred_fallthru
      _
    %p187 = scmp.lt.s32.totalorder %s11, 48
    // Predicated region
    $region13: #{senet_dilated_bottleneck.7} parent=5 // pred_check
      %p188 = pneg %p187
    $region14: #{senet_dilated_bottleneck.7} parent=5 // pred_check_branch
      %190 = sbr.rel (%p188) target = $region16
    $region15: #{senet_dilated_bottleneck.7} parent=5 // pred_region
      // Predicated region
      $region17: #{senet_dilated_bottleneck.7} parent=15 // pred_check
        %p191 = pneg %p56
      $region18: #{senet_dilated_bottleneck.7} parent=15 // pred_check_branch
        %193 = sbr.rel (%p191) target = $region20
      $region19: #{senet_dilated_bottleneck.7} parent=15 // pred_region
        %s194 = smul.u32 %s20, 2
        %s195 = sadd.s32 %s19, %s194
        %p196 = scmp.lt.s32.totalorder %s18, 1
        %s197 = scalar_select %p196, %s18, 1
        %p198 = scmp.lt.s32.totalorder %s195, 11
        %s199 = scalar_select %p198, %s195, 11
        %s200 = smul.addr %s199, 16
        %s201 = smul.addr %s197, 192
        %s202 = sadd.s32 %s200, %s201
        %s203 = smul.addr %s202, 4
        %s204 = scalar_lea.vmem %s0, %s203
        %s205 = smul.u32 %s20, 2
        %s206 = sadd.s32 %s19, %s205
      $region20: #{senet_dilated_bottleneck.7} parent=15 // pred_fallthru
        _
      // Predicated region
      $region21: #{senet_dilated_bottleneck.7} parent=15 // pred_check
        %p207 = pneg %p82
      $region22: #{senet_dilated_bottleneck.7} parent=15 // pred_check_branch
        %209 = sbr.rel (%p207) target = $region24
      $region23: #{senet_dilated_bottleneck.7} parent=15 // pred_region
        %p210 = scmp.lt.s32.totalorder %s20, 2
        %s211 = scalar_select %p210, %s20, 2
        %s212 = smul.addr %s211, 18
        %s213 = smul.addr %s212, 4
        %s214 = scalar_lea.vmem %s1, %s213
      $region24: #{senet_dilated_bottleneck.7} parent=15 // pred_fallthru
        _
    $region16: #{senet_dilated_bottleneck.7} parent=5 // pred_fallthru
      _
    %p215 = scmp.le.s32.totalorder 1, %s11
    %p216 = scmp.lt.s32.totalorder %s11, 49
    %p217 = pnand %p215, %p216
    %p218 = pneg %p217
    // Predicated region
    $region25: #{senet_dilated_bottleneck.7} parent=5 // pred_check
      _
    $region26: #{senet_dilated_bottleneck.7} parent=5 // pred_check_branch
      %220 = sbr.rel (%p217) target = $region28
    $region27: #{senet_dilated_bottleneck.7} parent=5 // pred_region
      %s221 = ssub.s32 %s11, 1
      %s222 = smul.u32 %s23, 2
      %s223 = sadd.s32 %s22, %s222
      %p224 = scmp.lt.s32.totalorder %s21, 1
      %s225 = scalar_select %p224, %s21, 1
      %p226 = scmp.lt.s32.totalorder %s223, 11
      %s227 = scalar_select %p226, %s223, 11
      %s228 = smul.addr %s227, 16
      %s229 = smul.addr %s225, 192
      %s230 = sadd.s32 %s228, %s229
      %s231 = smul.addr %s230, 4
      %s232 = scalar_lea.vmem %s0, %s231
      %p233 = pneg %p62
      %p234 = pneg %p59
      %p235 = scmp.lt.s32.totalorder %s23, 2
      %s236 = scalar_select %p235, %s23, 2
      %s237 = smul.addr %s236, 18
      %s238 = smul.addr %s237, 4
      %s239 = scalar_lea.vmem %s1, %s238
      %p240 = pneg %p88
      %p241 = pneg %p85
      %p242 = pneg %p116
      %p243 = pneg %p113
      %p244 = scmp.lt.s32.totalorder %s21, 1
      %s245 = scalar_select %p244, %s21, 1
      %p246 = scmp.lt.s32.totalorder %s22, 7
      %s247 = scalar_select %p246, %s22, 7
      %s248 = smul.addr %s247, 8
      %s249 = smul.addr %s245, 64
      %s250 = sadd.s32 %s248, %s249
      %s251 = smul.addr %s250, 4
      %s252 = scalar_lea.vmem %s2, %s251
      %p253 = pneg %p144
      %p254 = pneg %p141
      %p255 = scmp.lt.s32.totalorder %s21, 1
      %s256 = scalar_select %p255, %s21, 1
      %p257 = scmp.lt.s32.totalorder %s22, 7
      %s258 = scalar_select %p257, %s22, 7
      %s259 = smul.addr %s256, 8
      %s260 = sadd.s32 %s258, %s259
      %s261 = scalar_lea.vmem %s3, %s260
      %p262 = pneg %p172
      %p263 = pneg %p169
      %p264 = scmp.lt.s32.totalorder %s21, 1
      %s265 = scalar_select %p264, %s21, 1
      %p266 = scmp.lt.s32.totalorder %s22, 7
      %s267 = scalar_select %p266, %s22, 7
      %s268 = smul.addr %s265, 8
      %s269 = sadd.s32 %s267, %s268
      %s270 = scalar_lea.vmem %s4, %s269
      %s271 = smul.u32 %s23, 2
      %s272 = sadd.s32 %s22, %s271
      %p273 = scmp.lt.s32.totalorder %s21, 1
      %s274 = scalar_select %p273, %s21, 1
      %p275 = scmp.lt.s32.totalorder %s272, 11
      %s276 = scalar_select %p275, %s272, 11
      %s277 = smul.addr %s276, 16
      %s278 = smul.addr %s274, 192
      %s279 = sadd.s32 %s277, %s278
      %s280 = smul.addr %s279, 4
      %s281 = scalar_lea.vmem %s0, %s280
      %s282 = smul.u32 %s23, 2
      %s283 = sadd.s32 %s22, %s282
      %p284 = scmp.lt.s32.totalorder %s23, 2
      %s285 = scalar_select %p284, %s23, 2
      %s286 = smul.addr %s285, 18
      %s287 = smul.addr %s286, 4
      %s288 = scalar_lea.vmem %s1, %s287
      %p289 = scmp.lt.s32.totalorder %s21, 1
      %s290 = scalar_select %p289, %s21, 1
      %p291 = scmp.lt.s32.totalorder %s22, 7
      %s292 = scalar_select %p291, %s22, 7
      %s293 = smul.addr %s292, 8
      %s294 = smul.addr %s290, 64
      %s295 = sadd.s32 %s293, %s294
      %s296 = smul.addr %s295, 4
      %s297 = scalar_lea.vmem %s2, %s296
      %p298 = scmp.lt.s32.totalorder %s21, 1
      %s299 = scalar_select %p298, %s21, 1
      %p300 = scmp.lt.s32.totalorder %s22, 7
      %s301 = scalar_select %p300, %s22, 7
      %s302 = smul.addr %s299, 8
      %s303 = sadd.s32 %s301, %s302
      %s304 = scalar_lea.vmem %s3, %s303
      %p305 = scmp.lt.s32.totalorder %s21, 1
      %s306 = scalar_select %p305, %s21, 1
      %p307 = scmp.lt.s32.totalorder %s22, 7
      %s308 = scalar_select %p307, %s22, 7
      %s309 = smul.addr %s306, 8
      %s310 = sadd.s32 %s308, %s309
      %s311 = scalar_lea.vmem %s4, %s310
      %p313 = scmp.eq.s32.totalorder %s23, 0
      // Predicated region
      $region29: #{senet_dilated_bottleneck.7} parent=27 // pred_check
        %p314 = pneg %p313
      $region30: #{senet_dilated_bottleneck.7} parent=27 // pred_check_branch
        %316 = sbr.rel (%p314) target = $region32
      $region31: #{senet_dilated_bottleneck.7} parent=27 // pred_region
        %vm317 = vcmask 130048
        %318 = vst.msk [vmem:[#allocation2] sm:$0xff] %vm317, 0.0
        %319 = vst.msk [vmem:[#allocation2 + $0x8] sm:$0xff] %vm317, 0.0
        %320 = vst.msk [vmem:[#allocation2 + $0x10] sm:$0xff] %vm317, 0.0
        %321 = vst.msk [vmem:[#allocation2 + $0x18] sm:$0xff] %vm317, 0.0
        %322 = vst.msk [vmem:[#allocation2 + $0x20] sm:$0xff] %vm317, 0.0
        %323 = vst.msk [vmem:[#allocation2 + $0x28] sm:$0xff] %vm317, 0.0
        %324 = vst.msk [vmem:[#allocation2 + $0x30] sm:$0xff] %vm317, 0.0
        %325 = vst.msk [vmem:[#allocation2 + $0x38] sm:$0xff] %vm317, 0.0
      $region32: #{senet_dilated_bottleneck.7} parent=27 // pred_fallthru
        _
      %v326 = vld [vmem:[#allocation2] sm:$0xff]
      %v327 = vld [vmem:[#allocation2 + $0x8] sm:$0xff]
      %v328 = vld [vmem:[#allocation2 + $0x10] sm:$0xff]
      %v329 = vld [vmem:[#allocation2 + $0x18] sm:$0xff]
      %v330 = vld [vmem:[#allocation2 + $0x20] sm:$0xff]
      %v331 = vld [vmem:[#allocation2 + $0x28] sm:$0xff]
      %v332 = vld [vmem:[#allocation2 + $0x30] sm:$0xff]
      %v333 = vld [vmem:[#allocation2 + $0x38] sm:$0xff]
      %v334 = vld [vmem:[%s281] sm:$0xff]
      %v335 = vld [vmem:[%s281 + $0x8] sm:$0xff]
      %v336 = vld [vmem:[%s281 + $0x10] sm:$0xff]
      %v337 = vld [vmem:[%s281 + $0x18] sm:$0xff]
      %v338 = vld [vmem:[%s281 + $0x20] sm:$0xff]
      %v339 = vld [vmem:[%s281 + $0x28] sm:$0xff]
      %v340 = vld [vmem:[%s281 + $0x30] sm:$0xff]
      %v341 = vld [vmem:[%s281 + $0x38] sm:$0xff]
      %v342 = vld [vmem:[%s288] sm:$0xf]
      %v343 = vld [vmem:[%s288 + $0x4] sm:$0xf]
      %v344 = vld [vmem:[%s288 + $0x8] sm:$0xf]
      %v345 = vld [vmem:[%s288 + $0xc] sm:$0xf]
      %v346 = vld [vmem:[%s288 + $0x10] sm:$0xf]
      %v347 = vld [vmem:[%s288 + $0x14] sm:$0xf]
      %v348 = vld [vmem:[%s288 + $0x18] sm:$0xf]
      %v349 = vld [vmem:[%s288 + $0x1c] sm:$0xf]
      %v350 = vld [vmem:[%s288 + $0x20] sm:$0xf]
      %v351 = vld [vmem:[%s288 + $0x24] sm:$0xf]
      %v352 = vld [vmem:[%s288 + $0x28] sm:$0xf]
      %v353 = vld [vmem:[%s288 + $0x2c] sm:$0xf]
      %v354 = vld [vmem:[%s288 + $0x30] sm:$0xf]
      %v355 = vld [vmem:[%s288 + $0x34] sm:$0xf]
      %v356 = vld [vmem:[%s288 + $0x38] sm:$0xf]
      %v357 = vld [vmem:[%s288 + $0x3c] sm:$0xf]
      %v358 = vld [vmem:[%s288 + $0x40] sm:$0xf]
      %v359 = vld [vmem:[%s288 + $0x44] sm:$0xf]
      %v368 = vunpack.c.l.b16 %v334
      %v369 = vunpack.c.h.b16 %v334
      %v370 = vunpack.c.l.b16 %v335
      %v371 = vunpack.c.h.b16 %v335
      %v372 = vunpack.c.l.b16 %v336
      %v373 = vunpack.c.h.b16 %v336
      %v374 = vunpack.c.l.b16 %v337
      %v375 = vunpack.c.h.b16 %v337
      %v376 = vunpack.c.l.b16 %v338
      %v377 = vunpack.c.h.b16 %v338
      %v378 = vunpack.c.l.b16 %v339
      %v379 = vunpack.c.h.b16 %v339
      %v380 = vunpack.c.l.b16 %v340
      %v381 = vunpack.c.h.b16 %v340
      %v382 = vunpack.c.l.b16 %v341
      %v383 = vunpack.c.h.b16 %v341
      %v384 = vpack.c.b16 %v370, %v368
      %v385 = vpack.c.b16 %v371, %v369
      %v386 = vpack.c.b16 %v374, %v372
      %v387 = vpack.c.b16 %v375, %v373
      %v388 = vpack.c.b16 %v378, %v376
      %v389 = vpack.c.b16 %v379, %v377
      %v390 = vpack.c.b16 %v382, %v380
      %v391 = vpack.c.b16 %v383, %v381
      %v414 = vunpack.c.l.b16 %v342
      %v415 = vunpack.c.l.b16 %v343
      %v416 = vunpack.c.l.b16 %v344
      %v417 = vunpack.c.l.b16 %v345
      %v418 = vunpack.c.l.b16 %v346
      %v419 = vunpack.c.l.b16 %v347
      %v420 = vunpack.c.l.b16 %v348
      %v421 = vunpack.c.l.b16 %v349
      %v422 = vunpack.c.l.b16 %v350
      %v423 = vunpack.c.l.b16 %v351
      %v424 = vunpack.c.l.b16 %v352
      %v425 = vunpack.c.l.b16 %v353
      %v426 = vunpack.c.l.b16 %v354
      %v427 = vunpack.c.l.b16 %v355
      %v428 = vunpack.c.l.b16 %v356
      %v429 = vunpack.c.l.b16 %v357
      %v430 = vunpack.c.l.b16 %v358
      %v431 = vunpack.c.l.b16 %v359
      %v432 = vpack.c.b16 %v415, %v414
      %v433 = vpack.c.b16 %v417, %v416
      %v434 = vpack.c.b16 %v419, %v418
      %v435 = vpack.c.b16 %v421, %v420
      %v436 = vpack.c.b16 %v423, %v422
      %v437 = vpack.c.b16 %v425, %v424
      %v438 = vpack.c.b16 %v427, %v426
      %v439 = vpack.c.b16 %v429, %v428
      %v440 = vpack.c.b16 %v431, %v430
      %vm450 = vcmask 130048
      %v452 = vsel %vm450, %v385, 0
      %v455 = vsel %vm450, %v387, 0
      %v458 = vsel %vm450, %v389, 0
      %v461 = vsel %vm450, %v391, 0
      %463 = vmatpush.bf16.msra.mxu0 %v439
      %464 = vmatpush.bf16.msra.mxu0 %v438
      %465 = vmatpush.bf16.msra.mxu0 %v437
      %466 = vmatpush.bf16.msra.mxu0 %v436
      %467 = vmatpush.bf16.msra.mxu0 %v435
      %468 = vmatpush.bf16.msra.mxu0 %v434
      %469 = vmatpush.bf16.msra.mxu0 %v433
      %470 = vmatpush.bf16.msra.mxu0 %v432
      %471 = vmatmul.bf16.gmra.mxu0 %v384
      %v472 = vpop.f32.mrf.mxu0
      %v473 = vadd.f32 0.0, %v472
      %v474 = vpop.f32.mrf.mxu0
      %v475 = vadd.f32 0.0, %v474
      %476 = vmatmul.bf16.gmra.mxu0 %v386
      %v477 = vpop.f32.mrf.mxu0
      %v478 = vadd.f32 0.0, %v477
      %v479 = vpop.f32.mrf.mxu0
      %v480 = vadd.f32 0.0, %v479
      %481 = vmatmul.bf16.gmra.mxu0 %v388
      %v482 = vpop.f32.mrf.mxu0
      %v483 = vadd.f32 0.0, %v482
      %v484 = vpop.f32.mrf.mxu0
      %v485 = vadd.f32 0.0, %v484
      %486 = vmatmul.bf16.gmra.mxu0 %v390
      %v487 = vpop.f32.mrf.mxu0
      %v488 = vadd.f32 0.0, %v487
      %v489 = vpop.f32.mrf.mxu0
      %v490 = vadd.f32 0.0, %v489
      %491 = vdwg.mxu0
      %492 = vmatpush.bf16.msra.mxu0 0
      %493 = vmatpush.bf16.msra.mxu0 0
      %494 = vmatpush.bf16.msra.mxu0 0
      %495 = vmatpush.bf16.msra.mxu0 0
      %496 = vmatpush.bf16.msra.mxu0 0
      %497 = vmatpush.bf16.msra.mxu0 0
      %498 = vmatpush.bf16.msra.mxu0 0
      %499 = vmatpush.bf16.msra.mxu0 %v440
      %500 = vmatmul.bf16.gmra.mxu0 %v452
      %v501 = vpop.f32.mrf.mxu0
      %v502 = vadd.f32 %v473, %v501
      %v503 = vpop.f32.mrf.mxu0
      %v504 = vadd.f32 %v475, %v503
      %505 = vmatmul.bf16.gmra.mxu0 %v455
      %v506 = vpop.f32.mrf.mxu0
      %v507 = vadd.f32 %v478, %v506
      %v508 = vpop.f32.mrf.mxu0
      %v509 = vadd.f32 %v480, %v508
      %510 = vmatmul.bf16.gmra.mxu0 %v458
      %v511 = vpop.f32.mrf.mxu0
      %v512 = vadd.f32 %v483, %v511
      %v513 = vpop.f32.mrf.mxu0
      %v514 = vadd.f32 %v485, %v513
      %515 = vmatmul.bf16.gmra.mxu0 %v461
      %v516 = vpop.f32.mrf.mxu0
      %v517 = vadd.f32 %v488, %v516
      %v518 = vpop.f32.mrf.mxu0
      %v519 = vadd.f32 %v490, %v518
      %520 = vdwg.mxu0
      %v521 = vadd.f32 %v326, %v502
      %v522 = vadd.f32 %v327, %v504
      %v523 = vadd.f32 %v328, %v507
      %v524 = vadd.f32 %v329, %v509
      %v525 = vadd.f32 %v330, %v512
      %v526 = vadd.f32 %v331, %v514
      %v527 = vadd.f32 %v332, %v517
      %v528 = vadd.f32 %v333, %v519
      %529 = vst.msk [vmem:[#allocation2] sm:$0xff] %vm450, %v521
      %530 = vst.msk [vmem:[#allocation2 + $0x8] sm:$0xff] %vm450, %v522
      %531 = vst.msk [vmem:[#allocation2 + $0x10] sm:$0xff] %vm450, %v523
      %532 = vst.msk [vmem:[#allocation2 + $0x18] sm:$0xff] %vm450, %v524
      %533 = vst.msk [vmem:[#allocation2 + $0x20] sm:$0xff] %vm450, %v525
      %534 = vst.msk [vmem:[#allocation2 + $0x28] sm:$0xff] %vm450, %v526
      %535 = vst.msk [vmem:[#allocation2 + $0x30] sm:$0xff] %vm450, %v527
      %536 = vst.msk [vmem:[#allocation2 + $0x38] sm:$0xff] %vm450, %v528
      %p537 = scmp.eq.s32.totalorder %s23, 2
      // Predicated region
      $region33: #{senet_dilated_bottleneck.7} parent=27 // pred_check
        %p538 = pneg %p537
      $region34: #{senet_dilated_bottleneck.7} parent=27 // pred_check_branch
        %540 = sbr.rel (%p538) target = $region36
      $region35: #{senet_dilated_bottleneck.7} parent=27 // pred_region
        %v541 = vld [vmem:[#allocation2] sm:$0xff]
        %v542 = vld [vmem:[#allocation2 + $0x8] sm:$0xff]
        %v543 = vld [vmem:[#allocation2 + $0x10] sm:$0xff]
        %v544 = vld [vmem:[#allocation2 + $0x18] sm:$0xff]
        %v545 = vld [vmem:[#allocation2 + $0x20] sm:$0xff]
        %v546 = vld [vmem:[#allocation2 + $0x28] sm:$0xff]
        %v547 = vld [vmem:[#allocation2 + $0x30] sm:$0xff]
        %v548 = vld [vmem:[#allocation2 + $0x38] sm:$0xff]
        %v549 = vpack.c.bf16 %v541, %v541
        %v550 = vpack.c.bf16 %v542, %v542
        %v551 = vpack.c.bf16 %v543, %v543
        %v552 = vpack.c.bf16 %v544, %v544
        %v553 = vpack.c.bf16 %v545, %v545
        %v554 = vpack.c.bf16 %v546, %v546
        %v555 = vpack.c.bf16 %v547, %v547
        %v556 = vpack.c.bf16 %v548, %v548
        %vm557 = vcmask 125952
        %558 = vst.msk [vmem:[%s297] sm:$0xf] %vm557, %v549
        %559 = vst.msk [vmem:[%s297 + $0x4] sm:$0xf] %vm557, %v550
        %560 = vst.msk [vmem:[%s297 + $0x8] sm:$0xf] %vm557, %v551
        %561 = vst.msk [vmem:[%s297 + $0xc] sm:$0xf] %vm557, %v552
        %562 = vst.msk [vmem:[%s297 + $0x10] sm:$0xf] %vm557, %v553
        %563 = vst.msk [vmem:[%s297 + $0x14] sm:$0xf] %vm557, %v554
        %564 = vst.msk [vmem:[%s297 + $0x18] sm:$0xf] %vm557, %v555
        %565 = vst.msk [vmem:[%s297 + $0x1c] sm:$0xf] %vm557, %v556
        %v566 = vsel %vm450, %v541, 0.0
        %v567 = vsel %vm450, %v542, 0.0
        %v568 = vadd.f32 %v566, %v567
        %v569 = vsel %vm450, %v543, 0.0
        %v570 = vadd.f32 %v568, %v569
        %v571 = vsel %vm450, %v544, 0.0
        %v572 = vadd.f32 %v570, %v571
        %v573 = vsel %vm450, %v545, 0.0
        %v574 = vadd.f32 %v572, %v573
        %v575 = vsel %vm450, %v546, 0.0
        %v576 = vadd.f32 %v574, %v575
        %v577 = vsel %vm450, %v547, 0.0
        %v578 = vadd.f32 %v576, %v577
        %v579 = vsel %vm450, %v548, 0.0
        %v580 = vadd.f32 %v578, %v579
        %v581 = vrot.slane %v580, 4
        %v582 = vadd.f32 %v580, %v581
        %v583 = vrot.slane %v582, 2
        %v584 = vadd.f32 %v582, %v583
        %v585 = vrot.slane %v584, 1
        %v586 = vadd.f32 %v584, %v585
        %vm587 = vcmask 122880
        %588 = vst.msk [vmem:[%s304] sm:$0x1] %vm587, %v586
        %v589 = vmul.f32 %v541, %v541
        %v590 = vmul.f32 %v542, %v542
        %v591 = vmul.f32 %v543, %v543
        %v592 = vmul.f32 %v544, %v544
        %v593 = vmul.f32 %v545, %v545
        %v594 = vmul.f32 %v546, %v546
        %v595 = vmul.f32 %v547, %v547
        %v596 = vmul.f32 %v548, %v548
        %v597 = vsel %vm450, %v589, 0.0
        %v598 = vsel %vm450, %v590, 0.0
        %v599 = vadd.f32 %v597, %v598
        %v600 = vsel %vm450, %v591, 0.0
        %v601 = vadd.f32 %v599, %v600
        %v602 = vsel %vm450, %v592, 0.0
        %v603 = vadd.f32 %v601, %v602
        %v604 = vsel %vm450, %v593, 0.0
        %v605 = vadd.f32 %v603, %v604
        %v606 = vsel %vm450, %v594, 0.0
        %v607 = vadd.f32 %v605, %v606
        %v608 = vsel %vm450, %v595, 0.0
        %v609 = vadd.f32 %v607, %v608
        %v610 = vsel %vm450, %v596, 0.0
        %v611 = vadd.f32 %v609, %v610
        %v612 = vrot.slane %v611, 4
        %v613 = vadd.f32 %v611, %v612
        %v614 = vrot.slane %v613, 2
        %v615 = vadd.f32 %v613, %v614
        %v616 = vrot.slane %v615, 1
        %v617 = vadd.f32 %v615, %v616
        %618 = vst.msk [vmem:[%s311] sm:$0x1] %vm587, %v617
      $region36: #{senet_dilated_bottleneck.7} parent=27 // pred_fallthru
        _
      %p619 = scmp.lt.s32.totalorder %s21, 1
      %s620 = scalar_select %p619, %s21, 1
      %p621 = scmp.lt.s32.totalorder %s22, 7
      %s622 = scalar_select %p621, %s22, 7
      %s623 = smul.addr %s622, 8
      %s624 = smul.addr %s620, 64
      %s625 = sadd.s32 %s623, %s624
      %s626 = smul.addr %s625, 4
      %s627 = scalar_lea.vmem %s2, %s626
      %p628 = scmp.lt.s32.totalorder %s21, 1
      %s629 = scalar_select %p628, %s21, 1
      %p630 = scmp.lt.s32.totalorder %s22, 7
      %s631 = scalar_select %p630, %s22, 7
      %s632 = smul.addr %s629, 8
      %s633 = sadd.s32 %s631, %s632
      %s634 = scalar_lea.vmem %s3, %s633
      %p635 = scmp.lt.s32.totalorder %s21, 1
      %s636 = scalar_select %p635, %s21, 1
      %p637 = scmp.lt.s32.totalorder %s22, 7
      %s638 = scalar_select %p637, %s22, 7
      %s639 = smul.addr %s636, 8
      %s640 = sadd.s32 %s638, %s639
      %s641 = scalar_lea.vmem %s4, %s640
      // Predicated region
      $region37: #{senet_dilated_bottleneck.7} parent=27 // pred_check
        %p642 = pneg %p113
      $region38: #{senet_dilated_bottleneck.7} parent=27 // pred_check_branch
        %644 = sbr.rel (%p642) target = $region40
      $region39: #{senet_dilated_bottleneck.7} parent=27 // pred_region
        _
      $region40: #{senet_dilated_bottleneck.7} parent=27 // pred_fallthru
        _
      // Predicated region
      $region41: #{senet_dilated_bottleneck.7} parent=27 // pred_check
        %p645 = pneg %p141
      $region42: #{senet_dilated_bottleneck.7} parent=27 // pred_check_branch
        %647 = sbr.rel (%p645) target = $region44
      $region43: #{senet_dilated_bottleneck.7} parent=27 // pred_region
        _
      $region44: #{senet_dilated_bottleneck.7} parent=27 // pred_fallthru
        _
      // Predicated region
      $region45: #{senet_dilated_bottleneck.7} parent=27 // pred_check
        %p648 = pneg %p169
      $region46: #{senet_dilated_bottleneck.7} parent=27 // pred_check_branch
        %650 = sbr.rel (%p648) target = $region48
      $region47: #{senet_dilated_bottleneck.7} parent=27 // pred_region
        _
      $region48: #{senet_dilated_bottleneck.7} parent=27 // pred_fallthru
        _
    $region28: #{senet_dilated_bottleneck.7} parent=5 // pred_fallthru
      _
    %p651 = scmp.le.s32.totalorder 2, %s11
    // Predicated region
    $region49: #{senet_dilated_bottleneck.7} parent=5 // pred_check
      %p652 = pneg %p651
    $region50: #{senet_dilated_bottleneck.7} parent=5 // pred_check_branch
      %654 = sbr.rel (%p652) target = $region52
    $region51: #{senet_dilated_bottleneck.7} parent=5 // pred_region
      %s655 = ssub.s32 %s11, 2
      // Predicated region
      $region53: #{senet_dilated_bottleneck.7} parent=51 // pred_check
        %p656 = pneg %p119
      $region54: #{senet_dilated_bottleneck.7} parent=51 // pred_check_branch
        %658 = sbr.rel (%p656) target = $region56
      $region55: #{senet_dilated_bottleneck.7} parent=51 // pred_region
        %p659 = scmp.lt.s32.totalorder %s24, 1
        %s660 = scalar_select %p659, %s24, 1
        %p661 = scmp.lt.s32.totalorder %s25, 7
        %s662 = scalar_select %p661, %s25, 7
        %s663 = smul.addr %s662, 8
        %s664 = smul.addr %s660, 64
        %s665 = sadd.s32 %s663, %s664
        %s666 = smul.addr %s665, 4
        %s667 = scalar_lea.vmem %s2, %s666
      $region56: #{senet_dilated_bottleneck.7} parent=51 // pred_fallthru
        _
      // Predicated region
      $region57: #{senet_dilated_bottleneck.7} parent=51 // pred_check
        %p668 = pneg %p147
      $region58: #{senet_dilated_bottleneck.7} parent=51 // pred_check_branch
        %670 = sbr.rel (%p668) target = $region60
      $region59: #{senet_dilated_bottleneck.7} parent=51 // pred_region
        %p671 = scmp.lt.s32.totalorder %s24, 1
        %s672 = scalar_select %p671, %s24, 1
        %p673 = scmp.lt.s32.totalorder %s25, 7
        %s674 = scalar_select %p673, %s25, 7
        %s675 = smul.addr %s672, 8
        %s676 = sadd.s32 %s674, %s675
        %s677 = scalar_lea.vmem %s3, %s676
      $region60: #{senet_dilated_bottleneck.7} parent=51 // pred_fallthru
        _
      // Predicated region
      $region61: #{senet_dilated_bottleneck.7} parent=51 // pred_check
        %p678 = pneg %p175
      $region62: #{senet_dilated_bottleneck.7} parent=51 // pred_check_branch
        %680 = sbr.rel (%p678) target = $region64
      $region63: #{senet_dilated_bottleneck.7} parent=51 // pred_region
        %p681 = scmp.lt.s32.totalorder %s24, 1
        %s682 = scalar_select %p681, %s24, 1
        %p683 = scmp.lt.s32.totalorder %s25, 7
        %s684 = scalar_select %p683, %s25, 7
        %s685 = smul.addr %s682, 8
        %s686 = sadd.s32 %s684, %s685
        %s687 = scalar_lea.vmem %s4, %s686
      $region64: #{senet_dilated_bottleneck.7} parent=51 // pred_fallthru
        _
    $region52: #{senet_dilated_bottleneck.7} parent=5 // pred_fallthru
      _
  $region6: #{senet_dilated_bottleneck.7} parent=0 // loop_footer
    %s15 = sadd.s32 1, %s11
  $region7: #{senet_dilated_bottleneck.7} parent=0 // loop_footer_branch
    %10 = sbr.rel target = $region3
  $region8: #{senet_dilated_bottleneck.7} parent=0 // loop_exit
    _

// kernel: tile.38
$region0: #{tile.38}
  #allocation0 [shape = 's32[1]{0}', space=sflag, size = 0x4, scoped, tag = 'scoped memory for tile.38']
  %s0 = inlined_call_operand.vmem [shape: f32[32], index: 0, kind: input, shape index: {}]
  %s1 = inlined_call_operand.vmem [shape: f32[4,32], index: 1, kind: output, shape index: {}]
  // Predicated region
  $region2: #{tile.38} parent=0 // pred_check
    _
  $region3: #{tile.38} parent=0 // pred_check_branch
    %3 = sbr.rel (0) target = $region5
  $region4: #{tile.38} parent=0 // pred_region
    _
  $region5: #{tile.38} parent=0 // pred_fallthru
    _
  %v4 = vld [vmem:[%s0] ss:$0 sm:$0xff]
  %5 = vst [vmem:[%s1] sm:$0xf] %v4

// kernel: tile.39
$region0: #{tile.39}
  %s0 = inlined_call_operand.vmem [shape: f32[4,32], index: 0, kind: input, shape index: {}]
  %s1 = inlined_call_operand.vmem [shape: f32[1,128], index: 1, kind: output, shape index: {}]
  $region1: #{tile.39} parent=0
    #allocation0 [shape = 'u8[4096]{0}', space=vmem, size = 0x1000, scoped, tag = 'scoped mem for output reshape']
    #allocation1 [shape = 'u8[4096]{0}', space=vmem, size = 0x1000, scoped, tag = 'scoped mem for input reshape']
    %s3 = ssub.s32 16, 1
    %v4 = vld [vmem:[%s0] sm:%s3]
    %5 = vst [vmem:[#allocation1] sm:%s3] %v4
    %v6 = vld [vmem:[#allocation1] sm:$0x1]
    %vm7 = vcmask 261120
    %8 = vst.msk [vmem:[#allocation0] sm:$0x1] %vm7, %v6
    %s9 = scalar_lea.vmem [#allocation1], 3
    %v10 = vld [vmem:[%s9] sm:$0x1]
    %11 = vrot.lane.b32.xlu0 %v10, 96
    %v12 = vpop.permute.xlu0 %11
    %vm13 = vcmask 1048320
    %14 = vst.msk [vmem:[#allocation0] sm:$0x1] %vm13, %v12
    %s15 = scalar_lea.vmem [#allocation1], 2
    %v16 = vld [vmem:[%s15] sm:$0x1]
    %17 = vrot.lane.b32.xlu0 %v16, 64
    %v18 = vpop.permute.xlu0 %17
    %vm19 = vcmask 785920
    %20 = vst.msk [vmem:[#allocation0] sm:$0x1] %vm19, %v18
    %s21 = scalar_lea.vmem [#allocation1], 1
    %v22 = vld [vmem:[%s21] sm:$0x1]
    %23 = vrot.lane.b32.xlu0 %v22, 32
    %v24 = vpop.permute.xlu0 %23
    %vm25 = vcmask 523520
    %26 = vst.msk [vmem:[#allocation0] sm:$0x1] %vm25, %v24
    %s28 = ssub.s32 2, 1
    %v29 = vld [vmem:[#allocation0] sm:%s28]
    %s31 = ssub.s32 2, 1
    %32 = vst [vmem:[%s1] sm:%s31] %v29

// kernel: senet_dilated_bottleneck.8
$region0: #{senet_dilated_bottleneck.8}
  #allocation0 [shape = 'u32[]', space=smem, size = 0x4, offset = 0x4, fixed_abs, tag = 'smem constant byte address 0x4 - core index']
  #allocation1 [shape = 'u32[72,128]{1,0:T(1,128)}', space=vmem, size = 0x9000, scoped, tag = 'internal scratch']
  #allocation2 [shape = 'f32[1,1]{1,0:T(1,128)S(6)}', space=smem, size = 0x200, scoped, tag = 'scoped memory for senet_dilated_bottleneck.8']
  %s0 = inlined_call_operand.vmem [shape: bf16[2,512,16], index: 0, kind: input, shape index: {}]
  %s1 = inlined_call_operand.vmem [shape: f32[1,16], index: 1, kind: input, shape index: {}]
  %s2 = inlined_call_operand.vmem [shape: f32[1,16], index: 2, kind: input, shape index: {}]
  %s3 = inlined_call_operand.vmem [shape: bf16[16,32], index: 3, kind: input, shape index: {}]
  %s4 = inlined_call_operand.<no memory space> [shape: f32[1,1], index: 4, kind: input, shape index: {}]
  %s5 = inlined_call_operand.vmem [shape: f32[2,512,32], index: 5, kind: output, shape index: {0}]
  %s6 = inlined_call_operand.vmem [shape: f32[2,2,1,32], index: 6, kind: output, shape index: {1}]
  %s7 = inlined_call_operand.vmem [shape: f32[2,2,1,32], index: 7, kind: output, shape index: {2}]
  %8 = xla_tuple %s5, %s6, %s7
  %s9 = sld [smem:[#allocation0]]
  $region69: #{senet_dilated_bottleneck.8} parent=0
    _
  %s11 = ssub.s32 1, %s9
  %s12 = scalar_select 0, %s11, %s9
  %13 = sst [smem:[#allocation2]] %s4
  loop: start=0, step=1, limit=6
  $region2: #{senet_dilated_bottleneck.8} parent=0 // loop_pre_header
    _
  $region3: #{senet_dilated_bottleneck.8} parent=0 // loop_header
    %s15 = sphi 0, %s19
    %p16 = scmp.ge.s32.totalorder %s15, 6
    %s22 = sphi 0, %s34
    %s23 = sphi 0, %s30
    %s24 = sphi 0, %s22
    %s25 = sphi 0, %s23
    %s26 = sphi 0, %s24
    %s27 = sphi 0, %s25
    %s39 = sphi 0, %s41
    %s42 = sphi 0, %s39
    %s43 = sphi 0, %s42
    %s59 = sphi 0, %s43
    %s63 = sphi 0, %s63
    %s65 = sphi 0, %s63
    %s66 = sphi 0, %s65
    %s80 = sphi 0, %s66
    %s84 = sphi 0, %s84
    %s86 = sphi 0, %s84
    %s87 = sphi 0, %s86
    %s101 = sphi 0, %s87
    %s105 = sphi 0, %s105
    %s107 = sphi 0, %s105
    %s108 = sphi 0, %s107
    %s122 = sphi 0, %s108
    %s126 = sphi 0, %s126
    %s128 = sphi 0, %s126
    %s129 = sphi 0, %s128
    %s143 = sphi 0, %s129
    %s151 = sphi 0, %s153
    %s154 = sphi 0, %s151
    %s155 = sphi 0, %s154
    %s171 = sphi 0, %s155
    %s179 = sphi 0, %s181
    %s182 = sphi 0, %s179
    %s183 = sphi 0, %s182
    %s199 = sphi 0, %s183
    %s207 = sphi 0, %s209
    %s210 = sphi 0, %s207
    %s211 = sphi 0, %s210
    %s227 = sphi 0, %s211
  $region4: #{senet_dilated_bottleneck.8} parent=0 // loop_header_branch
    %18 = sbr.rel (%p16) target = $region8
  $region5: #{senet_dilated_bottleneck.8} parent=0 // loop_body
    %s20 = ssub.s32 %s15, 1
    %s21 = ssub.s32 %s15, 2
    %s28 = sadd.s32 1, %s23
    %p29 = scmp.ge.s32.totalorder %s28, 2
    %s30 = scalar_select %p29, 0, %s28
    %s31 = sadd.s32 1, %s22
    %s32 = scalar_select %p29, %s31, %s22
    %p33 = scmp.ge.s32.totalorder %s32, 2
    %s34 = scalar_select %p33, 0, %s32
    %s35 = ssub.s32 %s22, %s34
    %s36 = ssub.s32 %s23, %s30
    %s37 = sor.u32 %s35, %s36
    %p38 = scmp.eq.s32.totalorder %s37, 0
    %s40 = sadd.s32 %s39, 1
    %s41 = scalar_select %p38, %s39, %s40
    %p44 = pneg %p38
    %p45 = scmp.eq.s32.totalorder %s15, 3
    %p46 = por %p44, %p45
    %p47 = scmp.ne.s32.totalorder %s39, %s42
    %p48 = scmp.eq.s32.totalorder %s15, 0
    %p49 = por %p47, %p48
    %p50 = scmp.ne.s32.totalorder %s39, %s42
    %p51 = scmp.eq.s32.totalorder %s20, 3
    %p52 = por %p50, %p51
    %p53 = scmp.ne.s32.totalorder %s42, %s43
    %p54 = scmp.eq.s32.totalorder %s20, 0
    %p55 = por %p53, %p54
    %p56 = scmp.ne.s32.totalorder %s42, %s43
    %p57 = scmp.eq.s32.totalorder %s21, 3
    %p58 = por %p56, %p57
    %p60 = scmp.ne.s32.totalorder %s43, %s59
    %p61 = scmp.eq.s32.totalorder %s21, 0
    %p62 = por %p60, %p61
    %s64 = sadd.s32 %s63, 1
    %p67 = scmp.eq.s32.totalorder %s15, 3
    %p68 = scmp.ne.s32.totalorder %s63, %s65
    %p69 = scmp.eq.s32.totalorder %s15, 0
    %p70 = por %p68, %p69
    %p71 = scmp.ne.s32.totalorder %s63, %s65
    %p72 = scmp.eq.s32.totalorder %s20, 3
    %p73 = por %p71, %p72
    %p74 = scmp.ne.s32.totalorder %s65, %s66
    %p75 = scmp.eq.s32.totalorder %s20, 0
    %p76 = por %p74, %p75
    %p77 = scmp.ne.s32.totalorder %s65, %s66
    %p78 = scmp.eq.s32.totalorder %s21, 3
    %p79 = por %p77, %p78
    %p81 = scmp.ne.s32.totalorder %s66, %s80
    %p82 = scmp.eq.s32.totalorder %s21, 0
    %p83 = por %p81, %p82
    %s85 = sadd.s32 %s84, 1
    %p88 = scmp.eq.s32.totalorder %s15, 3
    %p89 = scmp.ne.s32.totalorder %s84, %s86
    %p90 = scmp.eq.s32.totalorder %s15, 0
    %p91 = por %p89, %p90
    %p92 = scmp.ne.s32.totalorder %s84, %s86
    %p93 = scmp.eq.s32.totalorder %s20, 3
    %p94 = por %p92, %p93
    %p95 = scmp.ne.s32.totalorder %s86, %s87
    %p96 = scmp.eq.s32.totalorder %s20, 0
    %p97 = por %p95, %p96
    %p98 = scmp.ne.s32.totalorder %s86, %s87
    %p99 = scmp.eq.s32.totalorder %s21, 3
    %p100 = por %p98, %p99
    %p102 = scmp.ne.s32.totalorder %s87, %s101
    %p103 = scmp.eq.s32.totalorder %s21, 0
    %p104 = por %p102, %p103
    %s106 = sadd.s32 %s105, 1
    %p109 = scmp.eq.s32.totalorder %s15, 3
    %p110 = scmp.ne.s32.totalorder %s105, %s107
    %p111 = scmp.eq.s32.totalorder %s15, 0
    %p112 = por %p110, %p111
    %p113 = scmp.ne.s32.totalorder %s105, %s107
    %p114 = scmp.eq.s32.totalorder %s20, 3
    %p115 = por %p113, %p114
    %p116 = scmp.ne.s32.totalorder %s107, %s108
    %p117 = scmp.eq.s32.totalorder %s20, 0
    %p118 = por %p116, %p117
    %p119 = scmp.ne.s32.totalorder %s107, %s108
    %p120 = scmp.eq.s32.totalorder %s21, 3
    %p121 = por %p119, %p120
    %p123 = scmp.ne.s32.totalorder %s108, %s122
    %p124 = scmp.eq.s32.totalorder %s21, 0
    %p125 = por %p123, %p124
    %s127 = sadd.s32 %s126, 1
    %p130 = scmp.eq.s32.totalorder %s15, 3
    %p131 = scmp.ne.s32.totalorder %s126, %s128
    %p132 = scmp.eq.s32.totalorder %s15, 0
    %p133 = por %p131, %p132
    %p134 = scmp.ne.s32.totalorder %s126, %s128
    %p135 = scmp.eq.s32.totalorder %s20, 3
    %p136 = por %p134, %p135
    %p137 = scmp.ne.s32.totalorder %s128, %s129
    %p138 = scmp.eq.s32.totalorder %s20, 0
    %p139 = por %p137, %p138
    %p140 = scmp.ne.s32.totalorder %s128, %s129
    %p141 = scmp.eq.s32.totalorder %s21, 3
    %p142 = por %p140, %p141
    %p144 = scmp.ne.s32.totalorder %s129, %s143
    %p145 = scmp.eq.s32.totalorder %s21, 0
    %p146 = por %p144, %p145
    %s147 = ssub.s32 %s22, %s34
    %s148 = ssub.s32 %s23, %s30
    %s149 = sor.u32 %s147, %s148
    %p150 = scmp.eq.s32.totalorder %s149, 0
    %s152 = sadd.s32 %s151, 1
    %s153 = scalar_select %p150, %s151, %s152
    %p156 = pneg %p150
    %p157 = scmp.eq.s32.totalorder %s15, 3
    %p158 = por %p156, %p157
    %p159 = scmp.ne.s32.totalorder %s151, %s154
    %p160 = scmp.eq.s32.totalorder %s15, 0
    %p161 = por %p159, %p160
    %p162 = scmp.ne.s32.totalorder %s151, %s154
    %p163 = scmp.eq.s32.totalorder %s20, 3
    %p164 = por %p162, %p163
    %p165 = scmp.ne.s32.totalorder %s154, %s155
    %p166 = scmp.eq.s32.totalorder %s20, 0
    %p167 = por %p165, %p166
    %p168 = scmp.ne.s32.totalorder %s154, %s155
    %p169 = scmp.eq.s32.totalorder %s21, 3
    %p170 = por %p168, %p169
    %p172 = scmp.ne.s32.totalorder %s155, %s171
    %p173 = scmp.eq.s32.totalorder %s21, 0
    %p174 = por %p172, %p173
    %s175 = ssub.s32 %s22, %s34
    %s176 = ssub.s32 %s23, %s30
    %s177 = sor.u32 %s175, %s176
    %p178 = scmp.eq.s32.totalorder %s177, 0
    %s180 = sadd.s32 %s179, 1
    %s181 = scalar_select %p178, %s179, %s180
    %p184 = pneg %p178
    %p185 = scmp.eq.s32.totalorder %s15, 3
    %p186 = por %p184, %p185
    %p187 = scmp.ne.s32.totalorder %s179, %s182
    %p188 = scmp.eq.s32.totalorder %s15, 0
    %p189 = por %p187, %p188
    %p190 = scmp.ne.s32.totalorder %s179, %s182
    %p191 = scmp.eq.s32.totalorder %s20, 3
    %p192 = por %p190, %p191
    %p193 = scmp.ne.s32.totalorder %s182, %s183
    %p194 = scmp.eq.s32.totalorder %s20, 0
    %p195 = por %p193, %p194
    %p196 = scmp.ne.s32.totalorder %s182, %s183
    %p197 = scmp.eq.s32.totalorder %s21, 3
    %p198 = por %p196, %p197
    %p200 = scmp.ne.s32.totalorder %s183, %s199
    %p201 = scmp.eq.s32.totalorder %s21, 0
    %p202 = por %p200, %p201
    %s203 = ssub.s32 %s22, %s34
    %s204 = ssub.s32 %s23, %s30
    %s205 = sor.u32 %s203, %s204
    %p206 = scmp.eq.s32.totalorder %s205, 0
    %s208 = sadd.s32 %s207, 1
    %s209 = scalar_select %p206, %s207, %s208
    %p212 = pneg %p206
    %p213 = scmp.eq.s32.totalorder %s15, 3
    %p214 = por %p212, %p213
    %p215 = scmp.ne.s32.totalorder %s207, %s210
    %p216 = scmp.eq.s32.totalorder %s15, 0
    %p217 = por %p215, %p216
    %p218 = scmp.ne.s32.totalorder %s207, %s210
    %p219 = scmp.eq.s32.totalorder %s20, 3
    %p220 = por %p218, %p219
    %p221 = scmp.ne.s32.totalorder %s210, %s211
    %p222 = scmp.eq.s32.totalorder %s20, 0
    %p223 = por %p221, %p222
    %p224 = scmp.ne.s32.totalorder %s210, %s211
    %p225 = scmp.eq.s32.totalorder %s21, 3
    %p226 = por %p224, %p225
    %p228 = scmp.ne.s32.totalorder %s211, %s227
    %p229 = scmp.eq.s32.totalorder %s21, 0
    %p230 = por %p228, %p229
    %p231 = scmp.le.s32.totalorder 1, %s15
    %p232 = scmp.lt.s32.totalorder %s15, 5
    %p233 = pnand %p231, %p232
    %p234 = pneg %p233
    // Predicated region
    $region9: #{senet_dilated_bottleneck.8} parent=5 // pred_check
      _
    $region10: #{senet_dilated_bottleneck.8} parent=5 // pred_check_branch
      %236 = sbr.rel (%p233) target = $region12
    $region11: #{senet_dilated_bottleneck.8} parent=5 // pred_region
      %s237 = ssub.s32 %s15, 1
      // Predicated region
      $region13: #{senet_dilated_bottleneck.8} parent=11 // pred_check
        %p238 = pneg %p76
      $region14: #{senet_dilated_bottleneck.8} parent=11 // pred_check_branch
        %240 = sbr.rel (%p238) target = $region16
      $region15: #{senet_dilated_bottleneck.8} parent=11 // pred_region
        _
      $region16: #{senet_dilated_bottleneck.8} parent=11 // pred_fallthru
        _
      // Predicated region
      $region17: #{senet_dilated_bottleneck.8} parent=11 // pred_check
        %p241 = pneg %p97
      $region18: #{senet_dilated_bottleneck.8} parent=11 // pred_check_branch
        %243 = sbr.rel (%p241) target = $region20
      $region19: #{senet_dilated_bottleneck.8} parent=11 // pred_region
        _
      $region20: #{senet_dilated_bottleneck.8} parent=11 // pred_fallthru
        _
      // Predicated region
      $region21: #{senet_dilated_bottleneck.8} parent=11 // pred_check
        %p244 = pneg %p118
      $region22: #{senet_dilated_bottleneck.8} parent=11 // pred_check_branch
        %246 = sbr.rel (%p244) target = $region24
      $region23: #{senet_dilated_bottleneck.8} parent=11 // pred_region
        _
      $region24: #{senet_dilated_bottleneck.8} parent=11 // pred_fallthru
        _
      // Predicated region
      $region25: #{senet_dilated_bottleneck.8} parent=11 // pred_check
        %p247 = pneg %p139
      $region26: #{senet_dilated_bottleneck.8} parent=11 // pred_check_branch
        %249 = sbr.rel (%p247) target = $region28
      $region27: #{senet_dilated_bottleneck.8} parent=11 // pred_region
        _
      $region28: #{senet_dilated_bottleneck.8} parent=11 // pred_fallthru
        _
    $region12: #{senet_dilated_bottleneck.8} parent=5 // pred_fallthru
      _
    %p250 = scmp.lt.s32.totalorder %s15, 4
    // Predicated region
    $region29: #{senet_dilated_bottleneck.8} parent=5 // pred_check
      %p251 = pneg %p250
    $region30: #{senet_dilated_bottleneck.8} parent=5 // pred_check_branch
      %253 = sbr.rel (%p251) target = $region32
    $region31: #{senet_dilated_bottleneck.8} parent=5 // pred_region
      // Predicated region
      $region33: #{senet_dilated_bottleneck.8} parent=31 // pred_check
        %p254 = pneg %p49
      $region34: #{senet_dilated_bottleneck.8} parent=31 // pred_check_branch
        %256 = sbr.rel (%p254) target = $region36
      $region35: #{senet_dilated_bottleneck.8} parent=31 // pred_region
        %s257 = smul.u32 32, %s23
        %p258 = scmp.lt.s32.totalorder %s22, 1
        %s259 = scalar_select %p258, %s22, 1
        %p260 = scmp.lt.s32.totalorder %s257, 63
        %s261 = scalar_select %p260, %s257, 63
        %s262 = smul.addr %s259, 64
        %s263 = sadd.s32 %s261, %s262
        %s264 = smul.addr %s263, 4
        %s265 = scalar_lea.vmem %s0, %s264
        %s266 = smul.u32 32, %s23
      $region36: #{senet_dilated_bottleneck.8} parent=31 // pred_fallthru
        _
    $region32: #{senet_dilated_bottleneck.8} parent=5 // pred_fallthru
      _
    %p267 = scmp.le.s32.totalorder 1, %s15
    %p268 = scmp.lt.s32.totalorder %s15, 5
    %p269 = pnand %p267, %p268
    %p270 = pneg %p269
    // Predicated region
    $region37: #{senet_dilated_bottleneck.8} parent=5 // pred_check
      _
    $region38: #{senet_dilated_bottleneck.8} parent=5 // pred_check_branch
      %272 = sbr.rel (%p269) target = $region40
    $region39: #{senet_dilated_bottleneck.8} parent=5 // pred_region
      %s273 = ssub.s32 %s15, 1
      %s274 = smul.u32 32, %s25
      %p275 = scmp.lt.s32.totalorder %s24, 1
      %s276 = scalar_select %p275, %s24, 1
      %p277 = scmp.lt.s32.totalorder %s274, 63
      %s278 = scalar_select %p277, %s274, 63
      %s279 = smul.addr %s276, 64
      %s280 = sadd.s32 %s278, %s279
      %s281 = smul.addr %s280, 4
      %s282 = scalar_lea.vmem %s0, %s281
      %p283 = pneg %p55
      %p284 = pneg %p52
      %p285 = pneg %p76
      %p286 = pneg %p73
      %p287 = pneg %p97
      %p288 = pneg %p94
      %p289 = pneg %p118
      %p290 = pneg %p115
      %p291 = pneg %p139
      %p292 = pneg %p136
      %p293 = pneg %p167
      %p294 = pneg %p164
      %s295 = smul.u32 32, %s25
      %p296 = scmp.lt.s32.totalorder %s24, 1
      %s297 = scalar_select %p296, %s24, 1
      %p298 = scmp.lt.s32.totalorder %s295, 63
      %s299 = scalar_select %p298, %s295, 63
      %s300 = smul.addr %s297, 64
      %s301 = sadd.s32 %s299, %s300
      %s302 = smul.addr %s301, 8
      %s303 = scalar_lea.vmem %s5, %s302
      %p304 = pneg %p195
      %p305 = pneg %p192
      %p306 = scmp.lt.s32.totalorder %s24, 1
      %s307 = scalar_select %p306, %s24, 1
      %p308 = scmp.lt.s32.totalorder %s25, 1
      %s309 = scalar_select %p308, %s25, 1
      %s310 = smul.addr %s307, 2
      %s311 = sadd.s32 %s309, %s310
      %s312 = scalar_lea.vmem %s6, %s311
      %p313 = pneg %p223
      %p314 = pneg %p220
      %p315 = scmp.lt.s32.totalorder %s24, 1
      %s316 = scalar_select %p315, %s24, 1
      %p317 = scmp.lt.s32.totalorder %s25, 1
      %s318 = scalar_select %p317, %s25, 1
      %s319 = smul.addr %s316, 2
      %s320 = sadd.s32 %s318, %s319
      %s321 = scalar_lea.vmem %s7, %s320
      %s322 = smul.u32 32, %s25
      %p323 = scmp.lt.s32.totalorder %s24, 1
      %s324 = scalar_select %p323, %s24, 1
      %p325 = scmp.lt.s32.totalorder %s322, 63
      %s326 = scalar_select %p325, %s322, 63
      %s327 = smul.addr %s324, 64
      %s328 = sadd.s32 %s326, %s327
      %s329 = smul.addr %s328, 4
      %s330 = scalar_lea.vmem %s0, %s329
      %s331 = smul.u32 32, %s25
      %s332 = smul.u32 32, %s25
      %p333 = scmp.lt.s32.totalorder %s24, 1
      %s334 = scalar_select %p333, %s24, 1
      %p335 = scmp.lt.s32.totalorder %s332, 63
      %s336 = scalar_select %p335, %s332, 63
      %s337 = smul.addr %s334, 64
      %s338 = sadd.s32 %s336, %s337
      %s339 = smul.addr %s338, 8
      %s340 = scalar_lea.vmem %s5, %s339
      %s341 = smul.u32 32, %s25
      %p342 = scmp.lt.s32.totalorder %s24, 1
      %s343 = scalar_select %p342, %s24, 1
      %p344 = scmp.lt.s32.totalorder %s25, 1
      %s345 = scalar_select %p344, %s25, 1
      %s346 = smul.addr %s343, 2
      %s347 = sadd.s32 %s345, %s346
      %s348 = scalar_lea.vmem %s6, %s347
      %p349 = scmp.lt.s32.totalorder %s24, 1
      %s350 = scalar_select %p349, %s24, 1
      %p351 = scmp.lt.s32.totalorder %s25, 1
      %s352 = scalar_select %p351, %s25, 1
      %s353 = smul.addr %s350, 2
      %s354 = sadd.s32 %s352, %s353
      %s355 = scalar_lea.vmem %s7, %s354
      %s357 = sld [smem:[#allocation2]]
      %v358 = vld [vmem:[%s330] sm:$0xf]
      %v359 = vld [vmem:[%s330 + $0x4] sm:$0xf]
      %v360 = vld [vmem:[%s330 + $0x8] sm:$0xf]
      %v361 = vld [vmem:[%s330 + $0xc] sm:$0xf]
      %v362 = vld [vmem:[%s330 + $0x10] sm:$0xf]
      %v363 = vld [vmem:[%s330 + $0x14] sm:$0xf]
      %v364 = vld [vmem:[%s330 + $0x18] sm:$0xf]
      %v365 = vld [vmem:[%s330 + $0x1c] sm:$0xf]
      %v366 = vld [vmem:[%s330 + $0x20] sm:$0xf]
      %v367 = vld [vmem:[%s330 + $0x24] sm:$0xf]
      %v368 = vld [vmem:[%s330 + $0x28] sm:$0xf]
      %v369 = vld [vmem:[%s330 + $0x2c] sm:$0xf]
      %v370 = vld [vmem:[%s330 + $0x30] sm:$0xf]
      %v371 = vld [vmem:[%s330 + $0x34] sm:$0xf]
      %v372 = vld [vmem:[%s330 + $0x38] sm:$0xf]
      %v373 = vld [vmem:[%s330 + $0x3c] sm:$0xf]
      %v374 = vld [vmem:[%s330 + $0x40] sm:$0xf]
      %v375 = vld [vmem:[%s330 + $0x44] sm:$0xf]
      %v376 = vld [vmem:[%s330 + $0x48] sm:$0xf]
      %v377 = vld [vmem:[%s330 + $0x4c] sm:$0xf]
      %v378 = vld [vmem:[%s330 + $0x50] sm:$0xf]
      %v379 = vld [vmem:[%s330 + $0x54] sm:$0xf]
      %v380 = vld [vmem:[%s330 + $0x58] sm:$0xf]
      %v381 = vld [vmem:[%s330 + $0x5c] sm:$0xf]
      %v382 = vld [vmem:[%s330 + $0x60] sm:$0xf]
      %v383 = vld [vmem:[%s330 + $0x64] sm:$0xf]
      %v384 = vld [vmem:[%s330 + $0x68] sm:$0xf]
      %v385 = vld [vmem:[%s330 + $0x6c] sm:$0xf]
      %v386 = vld [vmem:[%s330 + $0x70] sm:$0xf]
      %v387 = vld [vmem:[%s330 + $0x74] sm:$0xf]
      %v388 = vld [vmem:[%s330 + $0x78] sm:$0xf]
      %v389 = vld [vmem:[%s330 + $0x7c] sm:$0xf]
      %v390 = vunpack.c.l.bf16 %v358
      %v391 = vunpack.c.l.bf16 %v359
      %v392 = vunpack.c.l.bf16 %v360
      %v393 = vunpack.c.l.bf16 %v361
      %v394 = vunpack.c.l.bf16 %v362
      %v395 = vunpack.c.l.bf16 %v363
      %v396 = vunpack.c.l.bf16 %v364
      %v397 = vunpack.c.l.bf16 %v365
      %v398 = vunpack.c.l.bf16 %v366
      %v399 = vunpack.c.l.bf16 %v367
      %v400 = vunpack.c.l.bf16 %v368
      %v401 = vunpack.c.l.bf16 %v369
      %v402 = vunpack.c.l.bf16 %v370
      %v403 = vunpack.c.l.bf16 %v371
      %v404 = vunpack.c.l.bf16 %v372
      %v405 = vunpack.c.l.bf16 %v373
      %v406 = vunpack.c.l.bf16 %v374
      %v407 = vunpack.c.l.bf16 %v375
      %v408 = vunpack.c.l.bf16 %v376
      %v409 = vunpack.c.l.bf16 %v377
      %v410 = vunpack.c.l.bf16 %v378
      %v411 = vunpack.c.l.bf16 %v379
      %v412 = vunpack.c.l.bf16 %v380
      %v413 = vunpack.c.l.bf16 %v381
      %v414 = vunpack.c.l.bf16 %v382
      %v415 = vunpack.c.l.bf16 %v383
      %v416 = vunpack.c.l.bf16 %v384
      %v417 = vunpack.c.l.bf16 %v385
      %v418 = vunpack.c.l.bf16 %v386
      %v419 = vunpack.c.l.bf16 %v387
      %v420 = vunpack.c.l.bf16 %v388
      %v421 = vunpack.c.l.bf16 %v389
      %v422 = vld [vmem:[%s1] sm:$0x1]
      %v424 = vperm.slane %v422, 0
      %v426 = vmul.f32 %v390, %v424
      %v427 = vmul.f32 %v391, %v424
      %v428 = vmul.f32 %v392, %v424
      %v429 = vmul.f32 %v393, %v424
      %v430 = vmul.f32 %v394, %v424
      %v431 = vmul.f32 %v395, %v424
      %v432 = vmul.f32 %v396, %v424
      %v433 = vmul.f32 %v397, %v424
      %v434 = vmul.f32 %v398, %v424
      %v435 = vmul.f32 %v399, %v424
      %v436 = vmul.f32 %v400, %v424
      %v437 = vmul.f32 %v401, %v424
      %v438 = vmul.f32 %v402, %v424
      %v439 = vmul.f32 %v403, %v424
      %v440 = vmul.f32 %v404, %v424
      %v441 = vmul.f32 %v405, %v424
      %v442 = vmul.f32 %v406, %v424
      %v443 = vmul.f32 %v407, %v424
      %v444 = vmul.f32 %v408, %v424
      %v445 = vmul.f32 %v409, %v424
      %v446 = vmul.f32 %v410, %v424
      %v447 = vmul.f32 %v411, %v424
      %v448 = vmul.f32 %v412, %v424
      %v449 = vmul.f32 %v413, %v424
      %v450 = vmul.f32 %v414, %v424
      %v451 = vmul.f32 %v415, %v424
      %v452 = vmul.f32 %v416, %v424
      %v453 = vmul.f32 %v417, %v424
      %v454 = vmul.f32 %v418, %v424
      %v455 = vmul.f32 %v419, %v424
      %v456 = vmul.f32 %v420, %v424
      %v457 = vmul.f32 %v421, %v424
      %v458 = vld [vmem:[%s2] sm:$0x1]
      %v460 = vperm.slane %v458, 0
      %v462 = vadd.f32 %v426, %v460
      %v463 = vadd.f32 %v427, %v460
      %v464 = vadd.f32 %v428, %v460
      %v465 = vadd.f32 %v429, %v460
      %v466 = vadd.f32 %v430, %v460
      %v467 = vadd.f32 %v431, %v460
      %v468 = vadd.f32 %v432, %v460
      %v469 = vadd.f32 %v433, %v460
      %v470 = vadd.f32 %v434, %v460
      %v471 = vadd.f32 %v435, %v460
      %v472 = vadd.f32 %v436, %v460
      %v473 = vadd.f32 %v437, %v460
      %v474 = vadd.f32 %v438, %v460
      %v475 = vadd.f32 %v439, %v460
      %v476 = vadd.f32 %v440, %v460
      %v477 = vadd.f32 %v441, %v460
      %v478 = vadd.f32 %v442, %v460
      %v479 = vadd.f32 %v443, %v460
      %v480 = vadd.f32 %v444, %v460
      %v481 = vadd.f32 %v445, %v460
      %v482 = vadd.f32 %v446, %v460
      %v483 = vadd.f32 %v447, %v460
      %v484 = vadd.f32 %v448, %v460
      %v485 = vadd.f32 %v449, %v460
      %v486 = vadd.f32 %v450, %v460
      %v487 = vadd.f32 %v451, %v460
      %v488 = vadd.f32 %v452, %v460
      %v489 = vadd.f32 %v453, %v460
      %v490 = vadd.f32 %v454, %v460
      %v491 = vadd.f32 %v455, %v460
      %v492 = vadd.f32 %v456, %v460
      %v493 = vadd.f32 %v457, %v460
      %vm494 = vcmp.ge.f32.partialorder %v462, 0.0
      %vm495 = vcmp.ge.f32.partialorder %v463, 0.0
      %vm496 = vcmp.ge.f32.partialorder %v464, 0.0
      %vm497 = vcmp.ge.f32.partialorder %v465, 0.0
      %vm498 = vcmp.ge.f32.partialorder %v466, 0.0
      %vm499 = vcmp.ge.f32.partialorder %v467, 0.0
      %vm500 = vcmp.ge.f32.partialorder %v468, 0.0
      %vm501 = vcmp.ge.f32.partialorder %v469, 0.0
      %vm502 = vcmp.ge.f32.partialorder %v470, 0.0
      %vm503 = vcmp.ge.f32.partialorder %v471, 0.0
      %vm504 = vcmp.ge.f32.partialorder %v472, 0.0
      %vm505 = vcmp.ge.f32.partialorder %v473, 0.0
      %vm506 = vcmp.ge.f32.partialorder %v474, 0.0
      %vm507 = vcmp.ge.f32.partialorder %v475, 0.0
      %vm508 = vcmp.ge.f32.partialorder %v476, 0.0
      %vm509 = vcmp.ge.f32.partialorder %v477, 0.0
      %vm510 = vcmp.ge.f32.partialorder %v478, 0.0
      %vm511 = vcmp.ge.f32.partialorder %v479, 0.0
      %vm512 = vcmp.ge.f32.partialorder %v480, 0.0
      %vm513 = vcmp.ge.f32.partialorder %v481, 0.0
      %vm514 = vcmp.ge.f32.partialorder %v482, 0.0
      %vm515 = vcmp.ge.f32.partialorder %v483, 0.0
      %vm516 = vcmp.ge.f32.partialorder %v484, 0.0
      %vm517 = vcmp.ge.f32.partialorder %v485, 0.0
      %vm518 = vcmp.ge.f32.partialorder %v486, 0.0
      %vm519 = vcmp.ge.f32.partialorder %v487, 0.0
      %vm520 = vcmp.ge.f32.partialorder %v488, 0.0
      %vm521 = vcmp.ge.f32.partialorder %v489, 0.0
      %vm522 = vcmp.ge.f32.partialorder %v490, 0.0
      %vm523 = vcmp.ge.f32.partialorder %v491, 0.0
      %vm524 = vcmp.ge.f32.partialorder %v492, 0.0
      %vm525 = vcmp.ge.f32.partialorder %v493, 0.0
      %v526 = vstv %s357
      %v527 = vmul.f32 %v526, %v462
      %v528 = vmul.f32 %v526, %v463
      %v529 = vmul.f32 %v526, %v464
      %v530 = vmul.f32 %v526, %v465
      %v531 = vmul.f32 %v526, %v466
      %v532 = vmul.f32 %v526, %v467
      %v533 = vmul.f32 %v526, %v468
      %v534 = vmul.f32 %v526, %v469
      %v535 = vmul.f32 %v526, %v470
      %v536 = vmul.f32 %v526, %v471
      %v537 = vmul.f32 %v526, %v472
      %v538 = vmul.f32 %v526, %v473
      %v539 = vmul.f32 %v526, %v474
      %v540 = vmul.f32 %v526, %v475
      %v541 = vmul.f32 %v526, %v476
      %v542 = vmul.f32 %v526, %v477
      %v543 = vmul.f32 %v526, %v478
      %v544 = vmul.f32 %v526, %v479
      %v545 = vmul.f32 %v526, %v480
      %v546 = vmul.f32 %v526, %v481
      %v547 = vmul.f32 %v526, %v482
      %v548 = vmul.f32 %v526, %v483
      %v549 = vmul.f32 %v526, %v484
      %v550 = vmul.f32 %v526, %v485
      %v551 = vmul.f32 %v526, %v486
      %v552 = vmul.f32 %v526, %v487
      %v553 = vmul.f32 %v526, %v488
      %v554 = vmul.f32 %v526, %v489
      %v555 = vmul.f32 %v526, %v490
      %v556 = vmul.f32 %v526, %v491
      %v557 = vmul.f32 %v526, %v492
      %v558 = vmul.f32 %v526, %v493
      %v559 = vsel %vm494, %v462, %v527
      %v560 = vsel %vm495, %v463, %v528
      %v561 = vsel %vm496, %v464, %v529
      %v562 = vsel %vm497, %v465, %v530
      %v563 = vsel %vm498, %v466, %v531
      %v564 = vsel %vm499, %v467, %v532
      %v565 = vsel %vm500, %v468, %v533
      %v566 = vsel %vm501, %v469, %v534
      %v567 = vsel %vm502, %v470, %v535
      %v568 = vsel %vm503, %v471, %v536
      %v569 = vsel %vm504, %v472, %v537
      %v570 = vsel %vm505, %v473, %v538
      %v571 = vsel %vm506, %v474, %v539
      %v572 = vsel %vm507, %v475, %v540
      %v573 = vsel %vm508, %v476, %v541
      %v574 = vsel %vm509, %v477, %v542
      %v575 = vsel %vm510, %v478, %v543
      %v576 = vsel %vm511, %v479, %v544
      %v577 = vsel %vm512, %v480, %v545
      %v578 = vsel %vm513, %v481, %v546
      %v579 = vsel %vm514, %v482, %v547
      %v580 = vsel %vm515, %v483, %v548
      %v581 = vsel %vm516, %v484, %v549
      %v582 = vsel %vm517, %v485, %v550
      %v583 = vsel %vm518, %v486, %v551
      %v584 = vsel %vm519, %v487, %v552
      %v585 = vsel %vm520, %v488, %v553
      %v586 = vsel %vm521, %v489, %v554
      %v587 = vsel %vm522, %v490, %v555
      %v588 = vsel %vm523, %v491, %v556
      %v589 = vsel %vm524, %v492, %v557
      %v590 = vsel %vm525, %v493, %v558
      %v591 = vpack.c.bf16 %v560, %v559
      %v592 = vpack.c.bf16 %v562, %v561
      %v593 = vpack.c.bf16 %v564, %v563
      %v594 = vpack.c.bf16 %v566, %v565
      %v595 = vpack.c.bf16 %v568, %v567
      %v596 = vpack.c.bf16 %v570, %v569
      %v597 = vpack.c.bf16 %v572, %v571
      %v598 = vpack.c.bf16 %v574, %v573
      %v599 = vpack.c.bf16 %v576, %v575
      %v600 = vpack.c.bf16 %v578, %v577
      %v601 = vpack.c.bf16 %v580, %v579
      %v602 = vpack.c.bf16 %v582, %v581
      %v603 = vpack.c.bf16 %v584, %v583
      %v604 = vpack.c.bf16 %v586, %v585
      %v605 = vpack.c.bf16 %v588, %v587
      %v606 = vpack.c.bf16 %v590, %v589
      %v607 = vld [vmem:[%s3] sm:$0xf]
      %v608 = vld [vmem:[%s3 + $0x4] sm:$0xf]
      %v611 = vunpack.c.l.b16 %v607
      %v612 = vunpack.c.l.b16 %v608
      %v613 = vpack.c.b16 %v612, %v611
      %vm615 = vcmask 130048
      %v617 = vsel %vm615, %v591, 0
      %v620 = vsel %vm615, %v592, 0
      %v623 = vsel %vm615, %v593, 0
      %v626 = vsel %vm615, %v594, 0
      %v629 = vsel %vm615, %v595, 0
      %v632 = vsel %vm615, %v596, 0
      %v635 = vsel %vm615, %v597, 0
      %v638 = vsel %vm615, %v598, 0
      %v641 = vsel %vm615, %v599, 0
      %v644 = vsel %vm615, %v600, 0
      %v647 = vsel %vm615, %v601, 0
      %v650 = vsel %vm615, %v602, 0
      %v653 = vsel %vm615, %v603, 0
      %v656 = vsel %vm615, %v604, 0
      %v659 = vsel %vm615, %v605, 0
      %v662 = vsel %vm615, %v606, 0
      %664 = vmatpush.bf16.msra.mxu0 0
      %665 = vmatpush.bf16.msra.mxu0 0
      %666 = vmatpush.bf16.msra.mxu0 0
      %667 = vmatpush.bf16.msra.mxu0 0
      %668 = vmatpush.bf16.msra.mxu0 0
      %669 = vmatpush.bf16.msra.mxu0 0
      %670 = vmatpush.bf16.msra.mxu0 0
      %671 = vmatpush.bf16.msra.mxu0 %v613
      %672 = vmatmul.bf16.gmra.mxu0 %v617
      %v673 = vpop.f32.mrf.mxu0
      %v674 = vadd.f32 0.0, %v673
      %v675 = vpop.f32.mrf.mxu0
      %v676 = vadd.f32 0.0, %v675
      %677 = vmatmul.bf16.gmra.mxu0 %v620
      %v678 = vpop.f32.mrf.mxu0
      %v679 = vadd.f32 0.0, %v678
      %v680 = vpop.f32.mrf.mxu0
      %v681 = vadd.f32 0.0, %v680
      %682 = vmatmul.bf16.gmra.mxu0 %v623
      %v683 = vpop.f32.mrf.mxu0
      %v684 = vadd.f32 0.0, %v683
      %v685 = vpop.f32.mrf.mxu0
      %v686 = vadd.f32 0.0, %v685
      %687 = vmatmul.bf16.gmra.mxu0 %v626
      %v688 = vpop.f32.mrf.mxu0
      %v689 = vadd.f32 0.0, %v688
      %v690 = vpop.f32.mrf.mxu0
      %v691 = vadd.f32 0.0, %v690
      %692 = vmatmul.bf16.gmra.mxu0 %v629
      %v693 = vpop.f32.mrf.mxu0
      %v694 = vadd.f32 0.0, %v693
      %v695 = vpop.f32.mrf.mxu0
      %v696 = vadd.f32 0.0, %v695
      %697 = vmatmul.bf16.gmra.mxu0 %v632
      %v698 = vpop.f32.mrf.mxu0
      %v699 = vadd.f32 0.0, %v698
      %v700 = vpop.f32.mrf.mxu0
      %v701 = vadd.f32 0.0, %v700
      %702 = vmatmul.bf16.gmra.mxu0 %v635
      %v703 = vpop.f32.mrf.mxu0
      %v704 = vadd.f32 0.0, %v703
      %v705 = vpop.f32.mrf.mxu0
      %v706 = vadd.f32 0.0, %v705
      %707 = vmatmul.bf16.gmra.mxu0 %v638
      %v708 = vpop.f32.mrf.mxu0
      %v709 = vadd.f32 0.0, %v708
      %v710 = vpop.f32.mrf.mxu0
      %v711 = vadd.f32 0.0, %v710
      %712 = vmatmul.bf16.gmra.mxu0 %v641
      %v713 = vpop.f32.mrf.mxu0
      %v714 = vadd.f32 0.0, %v713
      %v715 = vpop.f32.mrf.mxu0
      %v716 = vadd.f32 0.0, %v715
      %717 = vmatmul.bf16.gmra.mxu0 %v644
      %v718 = vpop.f32.mrf.mxu0
      %v719 = vadd.f32 0.0, %v718
      %v720 = vpop.f32.mrf.mxu0
      %v721 = vadd.f32 0.0, %v720
      %722 = vmatmul.bf16.gmra.mxu0 %v647
      %v723 = vpop.f32.mrf.mxu0
      %v724 = vadd.f32 0.0, %v723
      %v725 = vpop.f32.mrf.mxu0
      %v726 = vadd.f32 0.0, %v725
      %727 = vmatmul.bf16.gmra.mxu0 %v650
      %v728 = vpop.f32.mrf.mxu0
      %v729 = vadd.f32 0.0, %v728
      %v730 = vpop.f32.mrf.mxu0
      %v731 = vadd.f32 0.0, %v730
      %732 = vmatmul.bf16.gmra.mxu0 %v653
      %v733 = vpop.f32.mrf.mxu0
      %v734 = vadd.f32 0.0, %v733
      %v735 = vpop.f32.mrf.mxu0
      %v736 = vadd.f32 0.0, %v735
      %737 = vmatmul.bf16.gmra.mxu0 %v656
      %v738 = vpop.f32.mrf.mxu0
      %v739 = vadd.f32 0.0, %v738
      %v740 = vpop.f32.mrf.mxu0
      %v741 = vadd.f32 0.0, %v740
      %742 = vmatmul.bf16.gmra.mxu0 %v659
      %v743 = vpop.f32.mrf.mxu0
      %v744 = vadd.f32 0.0, %v743
      %v745 = vpop.f32.mrf.mxu0
      %v746 = vadd.f32 0.0, %v745
      %747 = vmatmul.bf16.gmra.mxu0 %v662
      %v748 = vpop.f32.mrf.mxu0
      %v749 = vadd.f32 0.0, %v748
      %v750 = vpop.f32.mrf.mxu0
      %v751 = vadd.f32 0.0, %v750
      %752 = vdwg.mxu0
      %vm753 = vcmask 261120
      %754 = vst.msk [vmem:[%s340] sm:$0xff] %vm753, %v674
      %755 = vst.msk [vmem:[%s340 + $0x8] sm:$0xff] %vm753, %v676
      %756 = vst.msk [vmem:[%s340 + $0x10] sm:$0xff] %vm753, %v679
      %757 = vst.msk [vmem:[%s340 + $0x18] sm:$0xff] %vm753, %v681
      %758 = vst.msk [vmem:[%s340 + $0x20] sm:$0xff] %vm753, %v684
      %759 = vst.msk [vmem:[%s340 + $0x28] sm:$0xff] %vm753, %v686
      %760 = vst.msk [vmem:[%s340 + $0x30] sm:$0xff] %vm753, %v689
      %761 = vst.msk [vmem:[%s340 + $0x38] sm:$0xff] %vm753, %v691
      %762 = vst.msk [vmem:[%s340 + $0x40] sm:$0xff] %vm753, %v694
      %763 = vst.msk [vmem:[%s340 + $0x48] sm:$0xff] %vm753, %v696
      %764 = vst.msk [vmem:[%s340 + $0x50] sm:$0xff] %vm753, %v699
      %765 = vst.msk [vmem:[%s340 + $0x58] sm:$0xff] %vm753, %v701
      %766 = vst.msk [vmem:[%s340 + $0x60] sm:$0xff] %vm753, %v704
      %767 = vst.msk [vmem:[%s340 + $0x68] sm:$0xff] %vm753, %v706
      %768 = vst.msk [vmem:[%s340 + $0x70] sm:$0xff] %vm753, %v709
      %769 = vst.msk [vmem:[%s340 + $0x78] sm:$0xff] %vm753, %v711
      %770 = vst.msk [vmem:[%s340 + $0x80] sm:$0xff] %vm753, %v714
      %771 = vst.msk [vmem:[%s340 + $0x88] sm:$0xff] %vm753, %v716
      %772 = vst.msk [vmem:[%s340 + $0x90] sm:$0xff] %vm753, %v719
      %773 = vst.msk [vmem:[%s340 + $0x98] sm:$0xff] %vm753, %v721
      %774 = vst.msk [vmem:[%s340 + $0xa0] sm:$0xff] %vm753, %v724
      %775 = vst.msk [vmem:[%s340 + $0xa8] sm:$0xff] %vm753, %v726
      %776 = vst.msk [vmem:[%s340 + $0xb0] sm:$0xff] %vm753, %v729
      %777 = vst.msk [vmem:[%s340 + $0xb8] sm:$0xff] %vm753, %v731
      %778 = vst.msk [vmem:[%s340 + $0xc0] sm:$0xff] %vm753, %v734
      %779 = vst.msk [vmem:[%s340 + $0xc8] sm:$0xff] %vm753, %v736
      %780 = vst.msk [vmem:[%s340 + $0xd0] sm:$0xff] %vm753, %v739
      %781 = vst.msk [vmem:[%s340 + $0xd8] sm:$0xff] %vm753, %v741
      %782 = vst.msk [vmem:[%s340 + $0xe0] sm:$0xff] %vm753, %v744
      %783 = vst.msk [vmem:[%s340 + $0xe8] sm:$0xff] %vm753, %v746
      %784 = vst.msk [vmem:[%s340 + $0xf0] sm:$0xff] %vm753, %v749
      %785 = vst.msk [vmem:[%s340 + $0xf8] sm:$0xff] %vm753, %v751
      %v786 = vsel %vm753, %v674, 0.0
      %v787 = vsel %vm753, %v676, 0.0
      %v788 = vadd.f32 %v786, %v787
      %v789 = vsel %vm753, %v679, 0.0
      %v790 = vadd.f32 %v788, %v789
      %v791 = vsel %vm753, %v681, 0.0
      %v792 = vadd.f32 %v790, %v791
      %v793 = vsel %vm753, %v684, 0.0
      %v794 = vadd.f32 %v792, %v793
      %v795 = vsel %vm753, %v686, 0.0
      %v796 = vadd.f32 %v794, %v795
      %v797 = vsel %vm753, %v689, 0.0
      %v798 = vadd.f32 %v796, %v797
      %v799 = vsel %vm753, %v691, 0.0
      %v800 = vadd.f32 %v798, %v799
      %v801 = vsel %vm753, %v694, 0.0
      %v802 = vadd.f32 %v800, %v801
      %v803 = vsel %vm753, %v696, 0.0
      %v804 = vadd.f32 %v802, %v803
      %v805 = vsel %vm753, %v699, 0.0
      %v806 = vadd.f32 %v804, %v805
      %v807 = vsel %vm753, %v701, 0.0
      %v808 = vadd.f32 %v806, %v807
      %v809 = vsel %vm753, %v704, 0.0
      %v810 = vadd.f32 %v808, %v809
      %v811 = vsel %vm753, %v706, 0.0
      %v812 = vadd.f32 %v810, %v811
      %v813 = vsel %vm753, %v709, 0.0
      %v814 = vadd.f32 %v812, %v813
      %v815 = vsel %vm753, %v711, 0.0
      %v816 = vadd.f32 %v814, %v815
      %v817 = vsel %vm753, %v714, 0.0
      %v818 = vadd.f32 %v816, %v817
      %v819 = vsel %vm753, %v716, 0.0
      %v820 = vadd.f32 %v818, %v819
      %v821 = vsel %vm753, %v719, 0.0
      %v822 = vadd.f32 %v820, %v821
      %v823 = vsel %vm753, %v721, 0.0
      %v824 = vadd.f32 %v822, %v823
      %v825 = vsel %vm753, %v724, 0.0
      %v826 = vadd.f32 %v824, %v825
      %v827 = vsel %vm753, %v726, 0.0
      %v828 = vadd.f32 %v826, %v827
      %v829 = vsel %vm753, %v729, 0.0
      %v830 = vadd.f32 %v828, %v829
      %v831 = vsel %vm753, %v731, 0.0
      %v832 = vadd.f32 %v830, %v831
      %v833 = vsel %vm753, %v734, 0.0
      %v834 = vadd.f32 %v832, %v833
      %v835 = vsel %vm753, %v736, 0.0
      %v836 = vadd.f32 %v834, %v835
      %v837 = vsel %vm753, %v739, 0.0
      %v838 = vadd.f32 %v836, %v837
      %v839 = vsel %vm753, %v741, 0.0
      %v840 = vadd.f32 %v838, %v839
      %v841 = vsel %vm753, %v744, 0.0
      %v842 = vadd.f32 %v840, %v841
      %v843 = vsel %vm753, %v746, 0.0
      %v844 = vadd.f32 %v842, %v843
      %v845 = vsel %vm753, %v749, 0.0
      %v846 = vadd.f32 %v844, %v845
      %v847 = vsel %vm753, %v751, 0.0
      %v848 = vadd.f32 %v846, %v847
      %v849 = vrot.slane %v848, 4
      %v850 = vadd.f32 %v848, %v849
      %v851 = vrot.slane %v850, 2
      %v852 = vadd.f32 %v850, %v851
      %v853 = vrot.slane %v852, 1
      %v854 = vadd.f32 %v852, %v853
      %vm855 = vcmask 253952
      %856 = vst.msk [vmem:[%s348] sm:$0x1] %vm855, %v854
      %v857 = vmul.f32 %v674, %v674
      %v858 = vmul.f32 %v676, %v676
      %v859 = vmul.f32 %v679, %v679
      %v860 = vmul.f32 %v681, %v681
      %v861 = vmul.f32 %v684, %v684
      %v862 = vmul.f32 %v686, %v686
      %v863 = vmul.f32 %v689, %v689
      %v864 = vmul.f32 %v691, %v691
      %v865 = vmul.f32 %v694, %v694
      %v866 = vmul.f32 %v696, %v696
      %v867 = vmul.f32 %v699, %v699
      %v868 = vmul.f32 %v701, %v701
      %v869 = vmul.f32 %v704, %v704
      %v870 = vmul.f32 %v706, %v706
      %v871 = vmul.f32 %v709, %v709
      %v872 = vmul.f32 %v711, %v711
      %v873 = vmul.f32 %v714, %v714
      %v874 = vmul.f32 %v716, %v716
      %v875 = vmul.f32 %v719, %v719
      %v876 = vmul.f32 %v721, %v721
      %v877 = vmul.f32 %v724, %v724
      %v878 = vmul.f32 %v726, %v726
      %v879 = vmul.f32 %v729, %v729
      %v880 = vmul.f32 %v731, %v731
      %v881 = vmul.f32 %v734, %v734
      %v882 = vmul.f32 %v736, %v736
      %v883 = vmul.f32 %v739, %v739
      %v884 = vmul.f32 %v741, %v741
      %v885 = vmul.f32 %v744, %v744
      %v886 = vmul.f32 %v746, %v746
      %v887 = vmul.f32 %v749, %v749
      %v888 = vmul.f32 %v751, %v751
      %v889 = vsel %vm753, %v857, 0.0
      %v890 = vsel %vm753, %v858, 0.0
      %v891 = vadd.f32 %v889, %v890
      %v892 = vsel %vm753, %v859, 0.0
      %v893 = vadd.f32 %v891, %v892
      %v894 = vsel %vm753, %v860, 0.0
      %v895 = vadd.f32 %v893, %v894
      %v896 = vsel %vm753, %v861, 0.0
      %v897 = vadd.f32 %v895, %v896
      %v898 = vsel %vm753, %v862, 0.0
      %v899 = vadd.f32 %v897, %v898
      %v900 = vsel %vm753, %v863, 0.0
      %v901 = vadd.f32 %v899, %v900
      %v902 = vsel %vm753, %v864, 0.0
      %v903 = vadd.f32 %v901, %v902
      %v904 = vsel %vm753, %v865, 0.0
      %v905 = vadd.f32 %v903, %v904
      %v906 = vsel %vm753, %v866, 0.0
      %v907 = vadd.f32 %v905, %v906
      %v908 = vsel %vm753, %v867, 0.0
      %v909 = vadd.f32 %v907, %v908
      %v910 = vsel %vm753, %v868, 0.0
      %v911 = vadd.f32 %v909, %v910
      %v912 = vsel %vm753, %v869, 0.0
      %v913 = vadd.f32 %v911, %v912
      %v914 = vsel %vm753, %v870, 0.0
      %v915 = vadd.f32 %v913, %v914
      %v916 = vsel %vm753, %v871, 0.0
      %v917 = vadd.f32 %v915, %v916
      %v918 = vsel %vm753, %v872, 0.0
      %v919 = vadd.f32 %v917, %v918
      %v920 = vsel %vm753, %v873, 0.0
      %v921 = vadd.f32 %v919, %v920
      %v922 = vsel %vm753, %v874, 0.0
      %v923 = vadd.f32 %v921, %v922
      %v924 = vsel %vm753, %v875, 0.0
      %v925 = vadd.f32 %v923, %v924
      %v926 = vsel %vm753, %v876, 0.0
      %v927 = vadd.f32 %v925, %v926
      %v928 = vsel %vm753, %v877, 0.0
      %v929 = vadd.f32 %v927, %v928
      %v930 = vsel %vm753, %v878, 0.0
      %v931 = vadd.f32 %v929, %v930
      %v932 = vsel %vm753, %v879, 0.0
      %v933 = vadd.f32 %v931, %v932
      %v934 = vsel %vm753, %v880, 0.0
      %v935 = vadd.f32 %v933, %v934
      %v936 = vsel %vm753, %v881, 0.0
      %v937 = vadd.f32 %v935, %v936
      %v938 = vsel %vm753, %v882, 0.0
      %v939 = vadd.f32 %v937, %v938
      %v940 = vsel %vm753, %v883, 0.0
      %v941 = vadd.f32 %v939, %v940
      %v942 = vsel %vm753, %v884, 0.0
      %v943 = vadd.f32 %v941, %v942
      %v944 = vsel %vm753, %v885, 0.0
      %v945 = vadd.f32 %v943, %v944
      %v946 = vsel %vm753, %v886, 0.0
      %v947 = vadd.f32 %v945, %v946
      %v948 = vsel %vm753, %v887, 0.0
      %v949 = vadd.f32 %v947, %v948
      %v950 = vsel %vm753, %v888, 0.0
      %v951 = vadd.f32 %v949, %v950
      %v952 = vrot.slane %v951, 4
      %v953 = vadd.f32 %v951, %v952
      %v954 = vrot.slane %v953, 2
      %v955 = vadd.f32 %v953, %v954
      %v956 = vrot.slane %v955, 1
      %v957 = vadd.f32 %v955, %v956
      %958 = vst.msk [vmem:[%s355] sm:$0x1] %vm855, %v957
      %s959 = smul.u32 32, %s25
      %p960 = scmp.lt.s32.totalorder %s24, 1
      %s961 = scalar_select %p960, %s24, 1
      %p962 = scmp.lt.s32.totalorder %s959, 63
      %s963 = scalar_select %p962, %s959, 63
      %s964 = smul.addr %s961, 64
      %s965 = sadd.s32 %s963, %s964
      %s966 = smul.addr %s965, 8
      %s967 = scalar_lea.vmem %s5, %s966
      %p968 = scmp.lt.s32.totalorder %s24, 1
      %s969 = scalar_select %p968, %s24, 1
      %p970 = scmp.lt.s32.totalorder %s25, 1
      %s971 = scalar_select %p970, %s25, 1
      %s972 = smul.addr %s969, 2
      %s973 = sadd.s32 %s971, %s972
      %s974 = scalar_lea.vmem %s6, %s973
      %p975 = scmp.lt.s32.totalorder %s24, 1
      %s976 = scalar_select %p975, %s24, 1
      %p977 = scmp.lt.s32.totalorder %s25, 1
      %s978 = scalar_select %p977, %s25, 1
      %s979 = smul.addr %s976, 2
      %s980 = sadd.s32 %s978, %s979
      %s981 = scalar_lea.vmem %s7, %s980
      // Predicated region
      $region41: #{senet_dilated_bottleneck.8} parent=39 // pred_check
        %p982 = pneg %p164
      $region42: #{senet_dilated_bottleneck.8} parent=39 // pred_check_branch
        %984 = sbr.rel (%p982) target = $region44
      $region43: #{senet_dilated_bottleneck.8} parent=39 // pred_region
        %s985 = smul.u32 32, %s25
      $region44: #{senet_dilated_bottleneck.8} parent=39 // pred_fallthru
        _
      // Predicated region
      $region45: #{senet_dilated_bottleneck.8} parent=39 // pred_check
        %p986 = pneg %p192
      $region46: #{senet_dilated_bottleneck.8} parent=39 // pred_check_branch
        %988 = sbr.rel (%p986) target = $region48
      $region47: #{senet_dilated_bottleneck.8} parent=39 // pred_region
        _
      $region48: #{senet_dilated_bottleneck.8} parent=39 // pred_fallthru
        _
      // Predicated region
      $region49: #{senet_dilated_bottleneck.8} parent=39 // pred_check
        %p989 = pneg %p220
      $region50: #{senet_dilated_bottleneck.8} parent=39 // pred_check_branch
        %991 = sbr.rel (%p989) target = $region52
      $region51: #{senet_dilated_bottleneck.8} parent=39 // pred_region
        _
      $region52: #{senet_dilated_bottleneck.8} parent=39 // pred_fallthru
        _
    $region40: #{senet_dilated_bottleneck.8} parent=5 // pred_fallthru
      _
    %p992 = scmp.le.s32.totalorder 2, %s15
    // Predicated region
    $region53: #{senet_dilated_bottleneck.8} parent=5 // pred_check
      %p993 = pneg %p992
    $region54: #{senet_dilated_bottleneck.8} parent=5 // pred_check_branch
      %995 = sbr.rel (%p993) target = $region56
    $region55: #{senet_dilated_bottleneck.8} parent=5 // pred_region
      %s996 = ssub.s32 %s15, 2
      // Predicated region
      $region57: #{senet_dilated_bottleneck.8} parent=55 // pred_check
        %p997 = pneg %p170
      $region58: #{senet_dilated_bottleneck.8} parent=55 // pred_check_branch
        %999 = sbr.rel (%p997) target = $region60
      $region59: #{senet_dilated_bottleneck.8} parent=55 // pred_region
        %s1000 = smul.u32 32, %s27
        %p1001 = scmp.lt.s32.totalorder %s26, 1
        %s1002 = scalar_select %p1001, %s26, 1
        %p1003 = scmp.lt.s32.totalorder %s1000, 63
        %s1004 = scalar_select %p1003, %s1000, 63
        %s1005 = smul.addr %s1002, 64
        %s1006 = sadd.s32 %s1004, %s1005
        %s1007 = smul.addr %s1006, 8
        %s1008 = scalar_lea.vmem %s5, %s1007
      $region60: #{senet_dilated_bottleneck.8} parent=55 // pred_fallthru
        _
      // Predicated region
      $region61: #{senet_dilated_bottleneck.8} parent=55 // pred_check
        %p1009 = pneg %p198
      $region62: #{senet_dilated_bottleneck.8} parent=55 // pred_check_branch
        %1011 = sbr.rel (%p1009) target = $region64
      $region63: #{senet_dilated_bottleneck.8} parent=55 // pred_region
        %p1012 = scmp.lt.s32.totalorder %s26, 1
        %s1013 = scalar_select %p1012, %s26, 1
        %p1014 = scmp.lt.s32.totalorder %s27, 1
        %s1015 = scalar_select %p1014, %s27, 1
        %s1016 = smul.addr %s1013, 2
        %s1017 = sadd.s32 %s1015, %s1016
        %s1018 = scalar_lea.vmem %s6, %s1017
      $region64: #{senet_dilated_bottleneck.8} parent=55 // pred_fallthru
        _
      // Predicated region
      $region65: #{senet_dilated_bottleneck.8} parent=55 // pred_check
        %p1019 = pneg %p226
      $region66: #{senet_dilated_bottleneck.8} parent=55 // pred_check_branch
        %1021 = sbr.rel (%p1019) target = $region68
      $region67: #{senet_dilated_bottleneck.8} parent=55 // pred_region
        %p1022 = scmp.lt.s32.totalorder %s26, 1
        %s1023 = scalar_select %p1022, %s26, 1
        %p1024 = scmp.lt.s32.totalorder %s27, 1
        %s1025 = scalar_select %p1024, %s27, 1
        %s1026 = smul.addr %s1023, 2
        %s1027 = sadd.s32 %s1025, %s1026
        %s1028 = scalar_lea.vmem %s7, %s1027
      $region68: #{senet_dilated_bottleneck.8} parent=55 // pred_fallthru
        _
    $region56: #{senet_dilated_bottleneck.8} parent=5 // pred_fallthru
      _
  $region6: #{senet_dilated_bottleneck.8} parent=0 // loop_footer
    %s19 = sadd.s32 1, %s15
  $region7: #{senet_dilated_bottleneck.8} parent=0 // loop_footer_branch
    %14 = sbr.rel target = $region3
  $region8: #{senet_dilated_bottleneck.8} parent=0 // loop_exit
    _

// kernel: senet_dilated_bottleneck.9
$region0: #{senet_dilated_bottleneck.9}
  #allocation0 [shape = 'u32[]', space=smem, size = 0x4, offset = 0x4, fixed_abs, tag = 'smem constant byte address 0x4 - core index']
  #allocation1 [shape = 'u32[72,128]{1,0:T(1,128)}', space=vmem, size = 0x9000, scoped, tag = 'internal scratch']
  #allocation2 [shape = 'f32[1,1]{1,0:T(1,128)S(6)}', space=smem, size = 0x200, scoped, tag = 'scoped memory for senet_dilated_bottleneck.9']
  %s0 = inlined_call_operand.vmem [shape: f32[2,128,128], index: 0, kind: input, shape index: {}]
  %s1 = inlined_call_operand.vmem [shape: f32[2,128,128], index: 1, kind: input, shape index: {}]
  %s2 = inlined_call_operand.vmem [shape: f32[1,128], index: 2, kind: input, shape index: {}]
  %s3 = inlined_call_operand.vmem [shape: f32[1,128], index: 3, kind: input, shape index: {}]
  %s4 = inlined_call_operand.vmem [shape: f32[2,1,32], index: 4, kind: input, shape index: {}]
  %s5 = inlined_call_operand.vmem [shape: f32[32,2], index: 5, kind: input, shape index: {}]
  %s6 = inlined_call_operand.vmem [shape: f32[1,2], index: 6, kind: input, shape index: {}]
  %s7 = inlined_call_operand.vmem [shape: f32[2,32], index: 7, kind: input, shape index: {}]
  %s8 = inlined_call_operand.vmem [shape: f32[1,32], index: 8, kind: input, shape index: {}]
  %s9 = inlined_call_operand.<no memory space> [shape: f32[1,1], index: 9, kind: input, shape index: {}]
  %s10 = inlined_call_operand.vmem [shape: f32[2,128,128], index: 10, kind: output, shape index: {}]
  %s11 = sld [smem:[#allocation0]]
  $region73: #{senet_dilated_bottleneck.9} parent=0
    _
  %s13 = ssub.s32 1, %s11
  %s14 = scalar_select 0, %s13, %s11
  %15 = sst [smem:[#allocation2]] %s9
  loop: start=0, step=1, limit=6
  $region2: #{senet_dilated_bottleneck.9} parent=0 // loop_pre_header
    _
  $region3: #{senet_dilated_bottleneck.9} parent=0 // loop_header
    %s17 = sphi 0, %s21
    %p18 = scmp.ge.s32.totalorder %s17, 6
    %s24 = sphi 0, %s36
    %s25 = sphi 0, %s32
    %s26 = sphi 0, %s24
    %s27 = sphi 0, %s25
    %s28 = sphi 0, %s26
    %s29 = sphi 0, %s27
    %s41 = sphi 0, %s43
    %s44 = sphi 0, %s41
    %s45 = sphi 0, %s44
    %s61 = sphi 0, %s45
    %s69 = sphi 0, %s71
    %s72 = sphi 0, %s69
    %s73 = sphi 0, %s72
    %s89 = sphi 0, %s73
    %s93 = sphi 0, %s93
    %s95 = sphi 0, %s93
    %s96 = sphi 0, %s95
    %s110 = sphi 0, %s96
    %s114 = sphi 0, %s114
    %s116 = sphi 0, %s114
    %s117 = sphi 0, %s116
    %s131 = sphi 0, %s117
    %s137 = sphi 0, %s139
    %s140 = sphi 0, %s137
    %s141 = sphi 0, %s140
    %s157 = sphi 0, %s141
    %s161 = sphi 0, %s161
    %s163 = sphi 0, %s161
    %s164 = sphi 0, %s163
    %s178 = sphi 0, %s164
    %s182 = sphi 0, %s182
    %s184 = sphi 0, %s182
    %s185 = sphi 0, %s184
    %s199 = sphi 0, %s185
    %s203 = sphi 0, %s203
    %s205 = sphi 0, %s203
    %s206 = sphi 0, %s205
    %s220 = sphi 0, %s206
    %s224 = sphi 0, %s224
    %s226 = sphi 0, %s224
    %s227 = sphi 0, %s226
    %s241 = sphi 0, %s227
    %s245 = sphi 0, %s245
    %s247 = sphi 0, %s245
    %s248 = sphi 0, %s247
    %s262 = sphi 0, %s248
    %s270 = sphi 0, %s272
    %s273 = sphi 0, %s270
    %s274 = sphi 0, %s273
    %s290 = sphi 0, %s274
  $region4: #{senet_dilated_bottleneck.9} parent=0 // loop_header_branch
    %20 = sbr.rel (%p18) target = $region8
  $region5: #{senet_dilated_bottleneck.9} parent=0 // loop_body
    %s22 = ssub.s32 %s17, 1
    %s23 = ssub.s32 %s17, 2
    %s30 = sadd.s32 1, %s25
    %p31 = scmp.ge.s32.totalorder %s30, 2
    %s32 = scalar_select %p31, 0, %s30
    %s33 = sadd.s32 1, %s24
    %s34 = scalar_select %p31, %s33, %s24
    %p35 = scmp.ge.s32.totalorder %s34, 2
    %s36 = scalar_select %p35, 0, %s34
    %s37 = ssub.s32 %s24, %s36
    %s38 = ssub.s32 %s25, %s32
    %s39 = sor.u32 %s37, %s38
    %p40 = scmp.eq.s32.totalorder %s39, 0
    %s42 = sadd.s32 %s41, 1
    %s43 = scalar_select %p40, %s41, %s42
    %p46 = pneg %p40
    %p47 = scmp.eq.s32.totalorder %s17, 3
    %p48 = por %p46, %p47
    %p49 = scmp.ne.s32.totalorder %s41, %s44
    %p50 = scmp.eq.s32.totalorder %s17, 0
    %p51 = por %p49, %p50
    %p52 = scmp.ne.s32.totalorder %s41, %s44
    %p53 = scmp.eq.s32.totalorder %s22, 3
    %p54 = por %p52, %p53
    %p55 = scmp.ne.s32.totalorder %s44, %s45
    %p56 = scmp.eq.s32.totalorder %s22, 0
    %p57 = por %p55, %p56
    %p58 = scmp.ne.s32.totalorder %s44, %s45
    %p59 = scmp.eq.s32.totalorder %s23, 3
    %p60 = por %p58, %p59
    %p62 = scmp.ne.s32.totalorder %s45, %s61
    %p63 = scmp.eq.s32.totalorder %s23, 0
    %p64 = por %p62, %p63
    %s65 = ssub.s32 %s24, %s36
    %s66 = ssub.s32 %s25, %s32
    %s67 = sor.u32 %s65, %s66
    %p68 = scmp.eq.s32.totalorder %s67, 0
    %s70 = sadd.s32 %s69, 1
    %s71 = scalar_select %p68, %s69, %s70
    %p74 = pneg %p68
    %p75 = scmp.eq.s32.totalorder %s17, 3
    %p76 = por %p74, %p75
    %p77 = scmp.ne.s32.totalorder %s69, %s72
    %p78 = scmp.eq.s32.totalorder %s17, 0
    %p79 = por %p77, %p78
    %p80 = scmp.ne.s32.totalorder %s69, %s72
    %p81 = scmp.eq.s32.totalorder %s22, 3
    %p82 = por %p80, %p81
    %p83 = scmp.ne.s32.totalorder %s72, %s73
    %p84 = scmp.eq.s32.totalorder %s22, 0
    %p85 = por %p83, %p84
    %p86 = scmp.ne.s32.totalorder %s72, %s73
    %p87 = scmp.eq.s32.totalorder %s23, 3
    %p88 = por %p86, %p87
    %p90 = scmp.ne.s32.totalorder %s73, %s89
    %p91 = scmp.eq.s32.totalorder %s23, 0
    %p92 = por %p90, %p91
    %s94 = sadd.s32 %s93, 1
    %p97 = scmp.eq.s32.totalorder %s17, 3
    %p98 = scmp.ne.s32.totalorder %s93, %s95
    %p99 = scmp.eq.s32.totalorder %s17, 0
    %p100 = por %p98, %p99
    %p101 = scmp.ne.s32.totalorder %s93, %s95
    %p102 = scmp.eq.s32.totalorder %s22, 3
    %p103 = por %p101, %p102
    %p104 = scmp.ne.s32.totalorder %s95, %s96
    %p105 = scmp.eq.s32.totalorder %s22, 0
    %p106 = por %p104, %p105
    %p107 = scmp.ne.s32.totalorder %s95, %s96
    %p108 = scmp.eq.s32.totalorder %s23, 3
    %p109 = por %p107, %p108
    %p111 = scmp.ne.s32.totalorder %s96, %s110
    %p112 = scmp.eq.s32.totalorder %s23, 0
    %p113 = por %p111, %p112
    %s115 = sadd.s32 %s114, 1
    %p118 = scmp.eq.s32.totalorder %s17, 3
    %p119 = scmp.ne.s32.totalorder %s114, %s116
    %p120 = scmp.eq.s32.totalorder %s17, 0
    %p121 = por %p119, %p120
    %p122 = scmp.ne.s32.totalorder %s114, %s116
    %p123 = scmp.eq.s32.totalorder %s22, 3
    %p124 = por %p122, %p123
    %p125 = scmp.ne.s32.totalorder %s116, %s117
    %p126 = scmp.eq.s32.totalorder %s22, 0
    %p127 = por %p125, %p126
    %p128 = scmp.ne.s32.totalorder %s116, %s117
    %p129 = scmp.eq.s32.totalorder %s23, 3
    %p130 = por %p128, %p129
    %p132 = scmp.ne.s32.totalorder %s117, %s131
    %p133 = scmp.eq.s32.totalorder %s23, 0
    %p134 = por %p132, %p133
    %s135 = ssub.s32 %s24, %s36
    %p136 = scmp.eq.s32.totalorder %s135, 0
    %s138 = sadd.s32 %s137, 1
    %s139 = scalar_select %p136, %s137, %s138
    %p142 = pneg %p136
    %p143 = scmp.eq.s32.totalorder %s17, 3
    %p144 = por %p142, %p143
    %p145 = scmp.ne.s32.totalorder %s137, %s140
    %p146 = scmp.eq.s32.totalorder %s17, 0
    %p147 = por %p145, %p146
    %p148 = scmp.ne.s32.totalorder %s137, %s140
    %p149 = scmp.eq.s32.totalorder %s22, 3
    %p150 = por %p148, %p149
    %p151 = scmp.ne.s32.totalorder %s140, %s141
    %p152 = scmp.eq.s32.totalorder %s22, 0
    %p153 = por %p151, %p152
    %p154 = scmp.ne.s32.totalorder %s140, %s141
    %p155 = scmp.eq.s32.totalorder %s23, 3
    %p156 = por %p154, %p155
    %p158 = scmp.ne.s32.totalorder %s141, %s157
    %p159 = scmp.eq.s32.totalorder %s23, 0
    %p160 = por %p158, %p159
    %s162 = sadd.s32 %s161, 1
    %p165 = scmp.eq.s32.totalorder %s17, 3
    %p166 = scmp.ne.s32.totalorder %s161, %s163
    %p167 = scmp.eq.s32.totalorder %s17, 0
    %p168 = por %p166, %p167
    %p169 = scmp.ne.s32.totalorder %s161, %s163
    %p170 = scmp.eq.s32.totalorder %s22, 3
    %p171 = por %p169, %p170
    %p172 = scmp.ne.s32.totalorder %s163, %s164
    %p173 = scmp.eq.s32.totalorder %s22, 0
    %p174 = por %p172, %p173
    %p175 = scmp.ne.s32.totalorder %s163, %s164
    %p176 = scmp.eq.s32.totalorder %s23, 3
    %p177 = por %p175, %p176
    %p179 = scmp.ne.s32.totalorder %s164, %s178
    %p180 = scmp.eq.s32.totalorder %s23, 0
    %p181 = por %p179, %p180
    %s183 = sadd.s32 %s182, 1
    %p186 = scmp.eq.s32.totalorder %s17, 3
    %p187 = scmp.ne.s32.totalorder %s182, %s184
    %p188 = scmp.eq.s32.totalorder %s17, 0
    %p189 = por %p187, %p188
    %p190 = scmp.ne.s32.totalorder %s182, %s184
    %p191 = scmp.eq.s32.totalorder %s22, 3
    %p192 = por %p190, %p191
    %p193 = scmp.ne.s32.totalorder %s184, %s185
    %p194 = scmp.eq.s32.totalorder %s22, 0
    %p195 = por %p193, %p194
    %p196 = scmp.ne.s32.totalorder %s184, %s185
    %p197 = scmp.eq.s32.totalorder %s23, 3
    %p198 = por %p196, %p197
    %p200 = scmp.ne.s32.totalorder %s185, %s199
    %p201 = scmp.eq.s32.totalorder %s23, 0
    %p202 = por %p200, %p201
    %s204 = sadd.s32 %s203, 1
    %p207 = scmp.eq.s32.totalorder %s17, 3
    %p208 = scmp.ne.s32.totalorder %s203, %s205
    %p209 = scmp.eq.s32.totalorder %s17, 0
    %p210 = por %p208, %p209
    %p211 = scmp.ne.s32.totalorder %s203, %s205
    %p212 = scmp.eq.s32.totalorder %s22, 3
    %p213 = por %p211, %p212
    %p214 = scmp.ne.s32.totalorder %s205, %s206
    %p215 = scmp.eq.s32.totalorder %s22, 0
    %p216 = por %p214, %p215
    %p217 = scmp.ne.s32.totalorder %s205, %s206
    %p218 = scmp.eq.s32.totalorder %s23, 3
    %p219 = por %p217, %p218
    %p221 = scmp.ne.s32.totalorder %s206, %s220
    %p222 = scmp.eq.s32.totalorder %s23, 0
    %p223 = por %p221, %p222
    %s225 = sadd.s32 %s224, 1
    %p228 = scmp.eq.s32.totalorder %s17, 3
    %p229 = scmp.ne.s32.totalorder %s224, %s226
    %p230 = scmp.eq.s32.totalorder %s17, 0
    %p231 = por %p229, %p230
    %p232 = scmp.ne.s32.totalorder %s224, %s226
    %p233 = scmp.eq.s32.totalorder %s22, 3
    %p234 = por %p232, %p233
    %p235 = scmp.ne.s32.totalorder %s226, %s227
    %p236 = scmp.eq.s32.totalorder %s22, 0
    %p237 = por %p235, %p236
    %p238 = scmp.ne.s32.totalorder %s226, %s227
    %p239 = scmp.eq.s32.totalorder %s23, 3
    %p240 = por %p238, %p239
    %p242 = scmp.ne.s32.totalorder %s227, %s241
    %p243 = scmp.eq.s32.totalorder %s23, 0
    %p244 = por %p242, %p243
    %s246 = sadd.s32 %s245, 1
    %p249 = scmp.eq.s32.totalorder %s17, 3
    %p250 = scmp.ne.s32.totalorder %s245, %s247
    %p251 = scmp.eq.s32.totalorder %s17, 0
    %p252 = por %p250, %p251
    %p253 = scmp.ne.s32.totalorder %s245, %s247
    %p254 = scmp.eq.s32.totalorder %s22, 3
    %p255 = por %p253, %p254
    %p256 = scmp.ne.s32.totalorder %s247, %s248
    %p257 = scmp.eq.s32.totalorder %s22, 0
    %p258 = por %p256, %p257
    %p259 = scmp.ne.s32.totalorder %s247, %s248
    %p260 = scmp.eq.s32.totalorder %s23, 3
    %p261 = por %p259, %p260
    %p263 = scmp.ne.s32.totalorder %s248, %s262
    %p264 = scmp.eq.s32.totalorder %s23, 0
    %p265 = por %p263, %p264
    %s266 = ssub.s32 %s24, %s36
    %s267 = ssub.s32 %s25, %s32
    %s268 = sor.u32 %s266, %s267
    %p269 = scmp.eq.s32.totalorder %s268, 0
    %s271 = sadd.s32 %s270, 1
    %s272 = scalar_select %p269, %s270, %s271
    %p275 = pneg %p269
    %p276 = scmp.eq.s32.totalorder %s17, 3
    %p277 = por %p275, %p276
    %p278 = scmp.ne.s32.totalorder %s270, %s273
    %p279 = scmp.eq.s32.totalorder %s17, 0
    %p280 = por %p278, %p279
    %p281 = scmp.ne.s32.totalorder %s270, %s273
    %p282 = scmp.eq.s32.totalorder %s22, 3
    %p283 = por %p281, %p282
    %p284 = scmp.ne.s32.totalorder %s273, %s274
    %p285 = scmp.eq.s32.totalorder %s22, 0
    %p286 = por %p284, %p285
    %p287 = scmp.ne.s32.totalorder %s273, %s274
    %p288 = scmp.eq.s32.totalorder %s23, 3
    %p289 = por %p287, %p288
    %p291 = scmp.ne.s32.totalorder %s274, %s290
    %p292 = scmp.eq.s32.totalorder %s23, 0
    %p293 = por %p291, %p292
    %p294 = scmp.le.s32.totalorder 1, %s17
    %p295 = scmp.lt.s32.totalorder %s17, 5
    %p296 = pnand %p294, %p295
    %p297 = pneg %p296
    // Predicated region
    $region9: #{senet_dilated_bottleneck.9} parent=5 // pred_check
      _
    $region10: #{senet_dilated_bottleneck.9} parent=5 // pred_check_branch
      %299 = sbr.rel (%p296) target = $region12
    $region11: #{senet_dilated_bottleneck.9} parent=5 // pred_region
      %s300 = ssub.s32 %s17, 1
      // Predicated region
      $region13: #{senet_dilated_bottleneck.9} parent=11 // pred_check
        %p301 = pneg %p106
      $region14: #{senet_dilated_bottleneck.9} parent=11 // pred_check_branch
        %303 = sbr.rel (%p301) target = $region16
      $region15: #{senet_dilated_bottleneck.9} parent=11 // pred_region
        _
      $region16: #{senet_dilated_bottleneck.9} parent=11 // pred_fallthru
        _
      // Predicated region
      $region17: #{senet_dilated_bottleneck.9} parent=11 // pred_check
        %p304 = pneg %p127
      $region18: #{senet_dilated_bottleneck.9} parent=11 // pred_check_branch
        %306 = sbr.rel (%p304) target = $region20
      $region19: #{senet_dilated_bottleneck.9} parent=11 // pred_region
        _
      $region20: #{senet_dilated_bottleneck.9} parent=11 // pred_fallthru
        _
      // Predicated region
      $region21: #{senet_dilated_bottleneck.9} parent=11 // pred_check
        %p307 = pneg %p174
      $region22: #{senet_dilated_bottleneck.9} parent=11 // pred_check_branch
        %309 = sbr.rel (%p307) target = $region24
      $region23: #{senet_dilated_bottleneck.9} parent=11 // pred_region
        _
      $region24: #{senet_dilated_bottleneck.9} parent=11 // pred_fallthru
        _
      // Predicated region
      $region25: #{senet_dilated_bottleneck.9} parent=11 // pred_check
        %p310 = pneg %p195
      $region26: #{senet_dilated_bottleneck.9} parent=11 // pred_check_branch
        %312 = sbr.rel (%p310) target = $region28
      $region27: #{senet_dilated_bottleneck.9} parent=11 // pred_region
        _
      $region28: #{senet_dilated_bottleneck.9} parent=11 // pred_fallthru
        _
      // Predicated region
      $region29: #{senet_dilated_bottleneck.9} parent=11 // pred_check
        %p313 = pneg %p216
      $region30: #{senet_dilated_bottleneck.9} parent=11 // pred_check_branch
        %315 = sbr.rel (%p313) target = $region32
      $region31: #{senet_dilated_bottleneck.9} parent=11 // pred_region
        _
      $region32: #{senet_dilated_bottleneck.9} parent=11 // pred_fallthru
        _
      // Predicated region
      $region33: #{senet_dilated_bottleneck.9} parent=11 // pred_check
        %p316 = pneg %p237
      $region34: #{senet_dilated_bottleneck.9} parent=11 // pred_check_branch
        %318 = sbr.rel (%p316) target = $region36
      $region35: #{senet_dilated_bottleneck.9} parent=11 // pred_region
        _
      $region36: #{senet_dilated_bottleneck.9} parent=11 // pred_fallthru
        _
      // Predicated region
      $region37: #{senet_dilated_bottleneck.9} parent=11 // pred_check
        %p319 = pneg %p258
      $region38: #{senet_dilated_bottleneck.9} parent=11 // pred_check_branch
        %321 = sbr.rel (%p319) target = $region40
      $region39: #{senet_dilated_bottleneck.9} parent=11 // pred_region
        _
      $region40: #{senet_dilated_bottleneck.9} parent=11 // pred_fallthru
        _
    $region12: #{senet_dilated_bottleneck.9} parent=5 // pred_fallthru
      _
    %p322 = scmp.lt.s32.totalorder %s17, 4
    // Predicated region
    $region41: #{senet_dilated_bottleneck.9} parent=5 // pred_check
      %p323 = pneg %p322
    $region42: #{senet_dilated_bottleneck.9} parent=5 // pred_check_branch
      %325 = sbr.rel (%p323) target = $region44
    $region43: #{senet_dilated_bottleneck.9} parent=5 // pred_region
      // Predicated region
      $region45: #{senet_dilated_bottleneck.9} parent=43 // pred_check
        %p326 = pneg %p51
      $region46: #{senet_dilated_bottleneck.9} parent=43 // pred_check_branch
        %328 = sbr.rel (%p326) target = $region48
      $region47: #{senet_dilated_bottleneck.9} parent=43 // pred_region
        %s329 = smul.u32 8, %s25
        %p330 = scmp.lt.s32.totalorder %s24, 1
        %s331 = scalar_select %p330, %s24, 1
        %p332 = scmp.lt.s32.totalorder %s329, 15
        %s333 = scalar_select %p332, %s329, 15
        %s334 = smul.addr %s331, 16
        %s335 = sadd.s32 %s333, %s334
        %s336 = smul.addr %s335, 8
        %s337 = scalar_lea.vmem %s0, %s336
        %s338 = smul.u32 8, %s25
      $region48: #{senet_dilated_bottleneck.9} parent=43 // pred_fallthru
        _
      // Predicated region
      $region49: #{senet_dilated_bottleneck.9} parent=43 // pred_check
        %p339 = pneg %p79
      $region50: #{senet_dilated_bottleneck.9} parent=43 // pred_check_branch
        %341 = sbr.rel (%p339) target = $region52
      $region51: #{senet_dilated_bottleneck.9} parent=43 // pred_region
        %s342 = smul.u32 8, %s25
        %p343 = scmp.lt.s32.totalorder %s24, 1
        %s344 = scalar_select %p343, %s24, 1
        %p345 = scmp.lt.s32.totalorder %s342, 15
        %s346 = scalar_select %p345, %s342, 15
        %s347 = smul.addr %s344, 16
        %s348 = sadd.s32 %s346, %s347
        %s349 = smul.addr %s348, 8
        %s350 = scalar_lea.vmem %s1, %s349
        %s351 = smul.u32 8, %s25
      $region52: #{senet_dilated_bottleneck.9} parent=43 // pred_fallthru
        _
      // Predicated region
      $region53: #{senet_dilated_bottleneck.9} parent=43 // pred_check
        %p352 = pneg %p147
      $region54: #{senet_dilated_bottleneck.9} parent=43 // pred_check_branch
        %354 = sbr.rel (%p352) target = $region56
      $region55: #{senet_dilated_bottleneck.9} parent=43 // pred_region
        %p355 = scmp.lt.s32.totalorder %s24, 1
        %s356 = scalar_select %p355, %s24, 1
        %s357 = scalar_lea.vmem %s4, %s356
      $region56: #{senet_dilated_bottleneck.9} parent=43 // pred_fallthru
        _
    $region44: #{senet_dilated_bottleneck.9} parent=5 // pred_fallthru
      _
    %p358 = scmp.le.s32.totalorder 1, %s17
    %p359 = scmp.lt.s32.totalorder %s17, 5
    %p360 = pnand %p358, %p359
    %p361 = pneg %p360
    // Predicated region
    $region57: #{senet_dilated_bottleneck.9} parent=5 // pred_check
      _
    $region58: #{senet_dilated_bottleneck.9} parent=5 // pred_check_branch
      %363 = sbr.rel (%p360) target = $region60
    $region59: #{senet_dilated_bottleneck.9} parent=5 // pred_region
      %s364 = ssub.s32 %s17, 1
      %s365 = smul.u32 8, %s27
      %p366 = scmp.lt.s32.totalorder %s26, 1
      %s367 = scalar_select %p366, %s26, 1
      %p368 = scmp.lt.s32.totalorder %s365, 15
      %s369 = scalar_select %p368, %s365, 15
      %s370 = smul.addr %s367, 16
      %s371 = sadd.s32 %s369, %s370
      %s372 = smul.addr %s371, 8
      %s373 = scalar_lea.vmem %s0, %s372
      %p374 = pneg %p57
      %p375 = pneg %p54
      %s376 = smul.u32 8, %s27
      %p377 = scmp.lt.s32.totalorder %s26, 1
      %s378 = scalar_select %p377, %s26, 1
      %p379 = scmp.lt.s32.totalorder %s376, 15
      %s380 = scalar_select %p379, %s376, 15
      %s381 = smul.addr %s378, 16
      %s382 = sadd.s32 %s380, %s381
      %s383 = smul.addr %s382, 8
      %s384 = scalar_lea.vmem %s1, %s383
      %p385 = pneg %p85
      %p386 = pneg %p82
      %p387 = pneg %p106
      %p388 = pneg %p103
      %p389 = pneg %p127
      %p390 = pneg %p124
      %p391 = scmp.lt.s32.totalorder %s26, 1
      %s392 = scalar_select %p391, %s26, 1
      %s393 = scalar_lea.vmem %s4, %s392
      %p394 = pneg %p153
      %p395 = pneg %p150
      %p396 = pneg %p174
      %p397 = pneg %p171
      %p398 = pneg %p195
      %p399 = pneg %p192
      %p400 = pneg %p216
      %p401 = pneg %p213
      %p402 = pneg %p237
      %p403 = pneg %p234
      %p404 = pneg %p258
      %p405 = pneg %p255
      %p406 = pneg %p286
      %p407 = pneg %p283
      %s408 = smul.u32 8, %s27
      %p409 = scmp.lt.s32.totalorder %s26, 1
      %s410 = scalar_select %p409, %s26, 1
      %p411 = scmp.lt.s32.totalorder %s408, 15
      %s412 = scalar_select %p411, %s408, 15
      %s413 = smul.addr %s410, 16
      %s414 = sadd.s32 %s412, %s413
      %s415 = smul.addr %s414, 8
      %s416 = scalar_lea.vmem %s10, %s415
      %s417 = smul.u32 8, %s27
      %p418 = scmp.lt.s32.totalorder %s26, 1
      %s419 = scalar_select %p418, %s26, 1
      %p420 = scmp.lt.s32.totalorder %s417, 15
      %s421 = scalar_select %p420, %s417, 15
      %s422 = smul.addr %s419, 16
      %s423 = sadd.s32 %s421, %s422
      %s424 = smul.addr %s423, 8
      %s425 = scalar_lea.vmem %s0, %s424
      %s426 = smul.u32 8, %s27
      %s427 = smul.u32 8, %s27
      %p428 = scmp.lt.s32.totalorder %s26, 1
      %s429 = scalar_select %p428, %s26, 1
      %p430 = scmp.lt.s32.totalorder %s427, 15
      %s431 = scalar_select %p430, %s427, 15
      %s432 = smul.addr %s429, 16
      %s433 = sadd.s32 %s431, %s432
      %s434 = smul.addr %s433, 8
      %s435 = scalar_lea.vmem %s1, %s434
      %s436 = smul.u32 8, %s27
      %p437 = scmp.lt.s32.totalorder %s26, 1
      %s438 = scalar_select %p437, %s26, 1
      %s439 = scalar_lea.vmem %s4, %s438
      %s440 = smul.u32 8, %s27
      %p441 = scmp.lt.s32.totalorder %s26, 1
      %s442 = scalar_select %p441, %s26, 1
      %p443 = scmp.lt.s32.totalorder %s440, 15
      %s444 = scalar_select %p443, %s440, 15
      %s445 = smul.addr %s442, 16
      %s446 = sadd.s32 %s444, %s445
      %s447 = smul.addr %s446, 8
      %s448 = scalar_lea.vmem %s10, %s447
      %s449 = smul.u32 8, %s27
      %s450 = sld [smem:[#allocation2]]
      %v451 = vld [vmem:[%s439] sm:$0x1]
      %v452 = vld [vmem:[%s5] sm:$0xff]
      %v453 = vld [vmem:[%s5 + $0x8] sm:$0xff]
      %v454 = vld [vmem:[%s5 + $0x10] sm:$0xff]
      %v455 = vld [vmem:[%s5 + $0x18] sm:$0xff]
      %v456 = vld [vmem:[%s6] sm:$0x1]
      %vm457 = vcmask 261120
      %v459 = vsel %vm457, %v451, 0
      %461 = vmatpush.msra.mxu0 0.0
      %462 = vmatpush.msra.mxu0 0.0
      %463 = vmatpush.msra.mxu0 0.0
      %464 = vmatpush.msra.mxu0 0.0
      %465 = vmatpush.msra.mxu0 0.0
      %466 = vmatpush.msra.mxu0 0.0
      %467 = vmatpush.msra.mxu0 0.0
      %468 = vmatpush.msra.mxu0 0.0
      %469 = vmatpush.msra.mxu0 0.0
      %470 = vmatpush.msra.mxu0 0.0
      %471 = vmatpush.msra.mxu0 0.0
      %472 = vmatpush.msra.mxu0 0.0
      %473 = vmatpush.msra.mxu0 %v455
      %474 = vmatpush.msra.mxu0 %v454
      %475 = vmatpush.msra.mxu0 %v453
      %476 = vmatpush.msra.mxu0 %v452
      %477 = vmatmul.f32.gmra.mxu0 %v459
      %v478 = vpop.f32.mrf.mxu0
      %v479 = vadd.f32 %v456, %v478
      %480 = vdwg.mxu0
      %v481 = vmax.f32 %v479, 0.0
      %v482 = vld [vmem:[%s7] sm:$0x3]
      %v483 = vld [vmem:[%s8] sm:$0x1]
      %vm484 = vcmask 15360
      %v486 = vsel %vm484, %v481, 0
      %vm488 = vcmask 1041408
      %v490 = vsel %vm488, %v482, 0
      %492 = vmatpush.msra.mxu0 0.0
      %493 = vmatpush.msra.mxu0 0.0
      %494 = vmatpush.msra.mxu0 0.0
      %495 = vmatpush.msra.mxu0 0.0
      %496 = vmatpush.msra.mxu0 0.0
      %497 = vmatpush.msra.mxu0 0.0
      %498 = vmatpush.msra.mxu0 0.0
      %499 = vmatpush.msra.mxu0 0.0
      %500 = vmatpush.msra.mxu0 0.0
      %501 = vmatpush.msra.mxu0 0.0
      %502 = vmatpush.msra.mxu0 0.0
      %503 = vmatpush.msra.mxu0 0.0
      %504 = vmatpush.msra.mxu0 0.0
      %505 = vmatpush.msra.mxu0 0.0
      %506 = vmatpush.msra.mxu0 0.0
      %507 = vmatpush.msra.mxu0 %v490
      %508 = vmatmul.f32.gmra.mxu0 %v486
      %v509 = vpop.f32.mrf.mxu0
      %v510 = vadd.f32 %v483, %v509
      %511 = vdwg.mxu0
      %v512 = vxor.u32 %v510, 2147483648
      %v513 = vmul.f32 %v512, 1.442695
      %v514 = vpow.pop %v513
      %v515 = vadd.f32 %v514, 1.0
      %v516 = vrcp.pop %v515
      %v517 = vmul.f32 %v515, %v516
      %v518 = vsub.f32 1.0, %v517
      %v519 = vmul.f32 %v516, %v518
      %v520 = vadd.f32 %v516, %v519
      %vm521 = vweird.f32 %v515
      %vm522 = vweird.f32 %v516
      %vm523 = vmor %vm521, %vm522
      %v524 = vsel %vm523, %v516, %v520
      %v525 = vand.u32 2147483647, %v515
      %vm526 = vcmp.eq.f32.partialorder %v525, 8.507059e+37
      %v527 = vand.u32 %v515, 2147483648
      %v528 = vor.u32 1.1754944e-38, %v527
      %v529 = vsel %vm526, %v528, %v524
      %v530 = vmul.f32 1.0, %v529
      %532 = vrot.lane.b32.xlu0 %v530, 32
      %v533 = vpop.permute.xlu0 %532
      %535 = vrot.lane.b32.xlu0 %v530, 64
      %v536 = vpop.permute.xlu0 %535
      %538 = vrot.lane.b32.xlu0 %v530, 96
      %v539 = vpop.permute.xlu0 %538
      %v541 = vsel %vm457, %v530, %v533
      %vm542 = vcmask 523264
      %v543 = vsel %vm542, %v541, %v536
      %vm544 = vcmask 785408
      %v545 = vsel %vm544, %v543, %v539
      %v546 = vld [vmem:[%s425] sm:$0xff]
      %v547 = vld [vmem:[%s425 + $0x8] sm:$0xff]
      %v548 = vld [vmem:[%s425 + $0x10] sm:$0xff]
      %v549 = vld [vmem:[%s425 + $0x18] sm:$0xff]
      %v550 = vld [vmem:[%s425 + $0x20] sm:$0xff]
      %v551 = vld [vmem:[%s425 + $0x28] sm:$0xff]
      %v552 = vld [vmem:[%s425 + $0x30] sm:$0xff]
      %v553 = vld [vmem:[%s425 + $0x38] sm:$0xff]
      %v554 = vld [vmem:[%s2] sm:$0x1]
      %v556 = vperm.slane %v554, 0
      %v558 = vmul.f32 %v546, %v556
      %v559 = vmul.f32 %v547, %v556
      %v560 = vmul.f32 %v548, %v556
      %v561 = vmul.f32 %v549, %v556
      %v562 = vmul.f32 %v550, %v556
      %v563 = vmul.f32 %v551, %v556
      %v564 = vmul.f32 %v552, %v556
      %v565 = vmul.f32 %v553, %v556
      %v566 = vld [vmem:[%s3] sm:$0x1]
      %v568 = vperm.slane %v566, 0
      %v570 = vadd.f32 %v558, %v568
      %v571 = vadd.f32 %v559, %v568
      %v572 = vadd.f32 %v560, %v568
      %v573 = vadd.f32 %v561, %v568
      %v574 = vadd.f32 %v562, %v568
      %v575 = vadd.f32 %v563, %v568
      %v576 = vadd.f32 %v564, %v568
      %v577 = vadd.f32 %v565, %v568
      %v578 = vperm.slane %v545, 0
      %v579 = vmul.f32 %v570, %v578
      %v580 = vmul.f32 %v571, %v578
      %v581 = vmul.f32 %v572, %v578
      %v582 = vmul.f32 %v573, %v578
      %v583 = vmul.f32 %v574, %v578
      %v584 = vmul.f32 %v575, %v578
      %v585 = vmul.f32 %v576, %v578
      %v586 = vmul.f32 %v577, %v578
      %v587 = vld [vmem:[%s435] sm:$0xff]
      %v588 = vld [vmem:[%s435 + $0x8] sm:$0xff]
      %v589 = vld [vmem:[%s435 + $0x10] sm:$0xff]
      %v590 = vld [vmem:[%s435 + $0x18] sm:$0xff]
      %v591 = vld [vmem:[%s435 + $0x20] sm:$0xff]
      %v592 = vld [vmem:[%s435 + $0x28] sm:$0xff]
      %v593 = vld [vmem:[%s435 + $0x30] sm:$0xff]
      %v594 = vld [vmem:[%s435 + $0x38] sm:$0xff]
      %v595 = vadd.f32 %v579, %v587
      %v596 = vadd.f32 %v580, %v588
      %v597 = vadd.f32 %v581, %v589
      %v598 = vadd.f32 %v582, %v590
      %v599 = vadd.f32 %v583, %v591
      %v600 = vadd.f32 %v584, %v592
      %v601 = vadd.f32 %v585, %v593
      %v602 = vadd.f32 %v586, %v594
      %vm603 = vcmp.ge.f32.partialorder %v595, 0.0
      %vm604 = vcmp.ge.f32.partialorder %v596, 0.0
      %vm605 = vcmp.ge.f32.partialorder %v597, 0.0
      %vm606 = vcmp.ge.f32.partialorder %v598, 0.0
      %vm607 = vcmp.ge.f32.partialorder %v599, 0.0
      %vm608 = vcmp.ge.f32.partialorder %v600, 0.0
      %vm609 = vcmp.ge.f32.partialorder %v601, 0.0
      %vm610 = vcmp.ge.f32.partialorder %v602, 0.0
      %v611 = vstv %s450
      %v612 = vmul.f32 %v611, %v595
      %v613 = vmul.f32 %v611, %v596
      %v614 = vmul.f32 %v611, %v597
      %v615 = vmul.f32 %v611, %v598
      %v616 = vmul.f32 %v611, %v599
      %v617 = vmul.f32 %v611, %v600
      %v618 = vmul.f32 %v611, %v601
      %v619 = vmul.f32 %v611, %v602
      %v620 = vsel %vm603, %v595, %v612
      %v621 = vsel %vm604, %v596, %v613
      %v622 = vsel %vm605, %v597, %v614
      %v623 = vsel %vm606, %v598, %v615
      %v624 = vsel %vm607, %v599, %v616
      %v625 = vsel %vm608, %v600, %v617
      %v626 = vsel %vm609, %v601, %v618
      %v627 = vsel %vm610, %v602, %v619
      %628 = vst [vmem:[%s448] sm:$0xff] %v620
      %629 = vst [vmem:[%s448 + $0x8] sm:$0xff] %v621
      %630 = vst [vmem:[%s448 + $0x10] sm:$0xff] %v622
      %631 = vst [vmem:[%s448 + $0x18] sm:$0xff] %v623
      %632 = vst [vmem:[%s448 + $0x20] sm:$0xff] %v624
      %633 = vst [vmem:[%s448 + $0x28] sm:$0xff] %v625
      %634 = vst [vmem:[%s448 + $0x30] sm:$0xff] %v626
      %635 = vst [vmem:[%s448 + $0x38] sm:$0xff] %v627
      %s636 = smul.u32 8, %s27
      %p637 = scmp.lt.s32.totalorder %s26, 1
      %s638 = scalar_select %p637, %s26, 1
      %p639 = scmp.lt.s32.totalorder %s636, 15
      %s640 = scalar_select %p639, %s636, 15
      %s641 = smul.addr %s638, 16
      %s642 = sadd.s32 %s640, %s641
      %s643 = smul.addr %s642, 8
      %s644 = scalar_lea.vmem %s10, %s643
      // Predicated region
      $region61: #{senet_dilated_bottleneck.9} parent=59 // pred_check
        %p645 = pneg %p283
      $region62: #{senet_dilated_bottleneck.9} parent=59 // pred_check_branch
        %647 = sbr.rel (%p645) target = $region64
      $region63: #{senet_dilated_bottleneck.9} parent=59 // pred_region
        %s648 = smul.u32 8, %s27
      $region64: #{senet_dilated_bottleneck.9} parent=59 // pred_fallthru
        _
    $region60: #{senet_dilated_bottleneck.9} parent=5 // pred_fallthru
      _
    %p649 = scmp.le.s32.totalorder 2, %s17
    // Predicated region
    $region65: #{senet_dilated_bottleneck.9} parent=5 // pred_check
      %p650 = pneg %p649
    $region66: #{senet_dilated_bottleneck.9} parent=5 // pred_check_branch
      %652 = sbr.rel (%p650) target = $region68
    $region67: #{senet_dilated_bottleneck.9} parent=5 // pred_region
      %s653 = ssub.s32 %s17, 2
      // Predicated region
      $region69: #{senet_dilated_bottleneck.9} parent=67 // pred_check
        %p654 = pneg %p289
      $region70: #{senet_dilated_bottleneck.9} parent=67 // pred_check_branch
        %656 = sbr.rel (%p654) target = $region72
      $region71: #{senet_dilated_bottleneck.9} parent=67 // pred_region
        %s657 = smul.u32 8, %s29
        %p658 = scmp.lt.s32.totalorder %s28, 1
        %s659 = scalar_select %p658, %s28, 1
        %p660 = scmp.lt.s32.totalorder %s657, 15
        %s661 = scalar_select %p660, %s657, 15
        %s662 = smul.addr %s659, 16
        %s663 = sadd.s32 %s661, %s662
        %s664 = smul.addr %s663, 8
        %s665 = scalar_lea.vmem %s10, %s664
      $region72: #{senet_dilated_bottleneck.9} parent=67 // pred_fallthru
        _
    $region68: #{senet_dilated_bottleneck.9} parent=5 // pred_fallthru
      _
  $region6: #{senet_dilated_bottleneck.9} parent=0 // loop_footer
    %s21 = sadd.s32 1, %s17
  $region7: #{senet_dilated_bottleneck.9} parent=0 // loop_footer_branch
    %16 = sbr.rel target = $region3
  $region8: #{senet_dilated_bottleneck.9} parent=0 // loop_exit
    _

</llo_original>
